<compile_context>
chip_gen: v7x
topology: tpu7x:2x2x1
jax: 0.10.0
libtpu: 0.0.40
codegen_flags: <defaults>
</compile_context>

<pallas_src>
import functools

import jax
import jax.numpy as jnp
from jax import lax
from jax.experimental import pallas as pl
from jax.experimental.pallas import tpu as pltpu

LANE = 128
DEFAULT_TN = 1024                # row tile (big tiles amortize grid overhead)
VMEM_BUDGET = 24 * 1024 * 1024   # double-buffered working-set target (v7x-safe)


# ----------------------------------------------------------------------------
# small helpers
# ----------------------------------------------------------------------------
def _pair(v):
    return v if isinstance(v, tuple) else (v, v)


def _out_size(h, k, s, p, d):
    return (h + 2 * p - d * (k - 1) - 1) // s + 1


def _pad_lane(m):
    """Zero-pad the last axis up to a multiple of 128 (lane-dense stores)."""
    pad = (-m.shape[-1]) % LANE
    if pad == 0:
        return m
    widths = [(0, 0)] * (m.ndim - 1) + [(0, pad)]
    return jnp.pad(m, widths)


def _choose_tn(n, row_bytes, cap=DEFAULT_TN, budget=VMEM_BUDGET):
    """Largest row tile whose double-buffered row streams fit the VMEM budget."""
    tn = cap
    while tn > 64 and 2 * tn * row_bytes > budget:
        tn //= 2
    if n < tn:
        tn = max(8, (n // 8) * 8)
    return tn


def _expand_matrix(rows, rep):
    """E[i, j] = 1 iff j // rep == i : expands [N, rows] -> [N, rows*rep]."""
    i = jnp.arange(rows)[:, None]
    j = jnp.arange(rows * rep)[None, :]
    return ((j // rep) == i).astype(jnp.float32)


def _tap_expand_matrix(kk, c):
    """E2[t, j] = 1 iff (j // c) % kk == t : expands [N, K] -> [N, 4*K*C]."""
    t = jnp.arange(kk)[:, None]
    j = jnp.arange(4 * kk * c)[None, :]
    return (((j // c) % kk) == t).astype(jnp.float32)


# ----------------------------------------------------------------------------
# Pallas kernels
# ----------------------------------------------------------------------------
def _matmul_bias_kernel(a_ref, w_ref, b_ref, o_ref):
    # a: [TN, Kc] bf16, w: [Kc, CoP] bf16 (pre-transposed, lane-padded),
    # b: [1, CoP] f32  ->  o: [TN, CoP] f32
    o_ref[...] = (
        jnp.dot(a_ref[...], w_ref[...], preferred_element_type=jnp.float32)
        + b_ref[...]
    )


def _pallas_matmul_bias(a, w_t, b_row):
    n, kc = a.shape
    cop = w_t.shape[1]
    tn = _choose_tn(n, kc * a.dtype.itemsize + 4 * cop)
    return pl.pallas_call(
        _matmul_bias_kernel,
        out_shape=jax.ShapeDtypeStruct((n, cop), jnp.float32),
        grid=(pl.cdiv(n, tn),),
        in_specs=[
            pl.BlockSpec((tn, kc), lambda i: (i, 0)),
            pl.BlockSpec((kc, cop), lambda i: (0, 0)),   # resident weight
            pl.BlockSpec((1, cop), lambda i: (0, 0)),    # resident bias
        ],
        out_specs=pl.BlockSpec((tn, cop), lambda i: (i, 0)),
        compiler_params=pltpu.CompilerParams(
            dimension_semantics=("parallel",),
            vmem_limit_bytes=32 * 1024 * 1024,
        ),
    )(a, w_t, b_row)


def _deform_matmul_kernel(c_ref, fw_ref, mk_ref, e_ref, e2_ref, wd_ref, b_ref,
                          o_ref):
    # c : [TN, 4*K*C] bf16   packed bilinear-corner values
    # fw: [TN, 4*K]   f32    bilinear weights (OOB validity folded in)
    # mk: [TN, K]     f32    raw mask-conv output (pre-sigmoid)
    # e : [4*K, 4*K*C] f32   constant 0/1 expansion matrix (repeat-by-C)
    # e2: [K,   4*K*C] f32   constant 0/1 expansion matrix (tap -> 4 corners*C)
    # wd: [4*K*C, CoP] bf16  deform-conv weight, vertically tiled 4x
    # b : [1, CoP]     f32
    sig = 1.0 / (1.0 + jnp.exp(-mk_ref[...]))                    # EUP, f32
    w_exp = (
        jnp.dot(fw_ref[...], e_ref[...], preferred_element_type=jnp.float32)
        * jnp.dot(sig, e2_ref[...], preferred_element_type=jnp.float32)
    )                                                            # [TN, 4*K*C]
    val = c_ref[...].astype(jnp.float32) * w_exp                 # f32 combine
    o_ref[...] = (
        jnp.dot(val.astype(jnp.bfloat16), wd_ref[...],
                preferred_element_type=jnp.float32)
        + b_ref[...]
    )


def _pallas_deform_matmul(corners, fw, msk, e, e2, wd_stack, b_row):
    n, n4kc = corners.shape
    n4k = fw.shape[1]
    kk = msk.shape[1]
    cop = wd_stack.shape[1]
    tn = _choose_tn(n, 2 * n4kc + 4 * n4k + 4 * kk + 4 * cop)
    return pl.pallas_call(
        _deform_matmul_kernel,
        out_shape=jax.ShapeDtypeStruct((n, cop), jnp.float32),
        grid=(pl.cdiv(n, tn),),
        in_specs=[
            pl.BlockSpec((tn, n4kc), lambda i: (i, 0)),
            pl.BlockSpec((tn, n4k), lambda i: (i, 0)),
            pl.BlockSpec((tn, kk), lambda i: (i, 0)),
            pl.BlockSpec((n4k, n4kc), lambda i: (0, 0)),   # resident
            pl.BlockSpec((kk, n4kc), lambda i: (0, 0)),    # resident
            pl.BlockSpec((n4kc, cop), lambda i: (0, 0)),   # resident
            pl.BlockSpec((1, cop), lambda i: (0, 0)),      # resident
        ],
        out_specs=pl.BlockSpec((tn, cop), lambda i: (i, 0)),
        compiler_params=pltpu.CompilerParams(
            dimension_semantics=("parallel",),
            vmem_limit_bytes=32 * 1024 * 1024,
        ),
    )(corners, fw, msk, e, e2, wd_stack, b_row)


# ----------------------------------------------------------------------------
# JAX glue (im2col, bilinear corner gather, layout plumbing)
# ----------------------------------------------------------------------------
def _im2col(x_nhwc, kh, kw, s, p, d):
    bsz, h, w, c = x_nhwc.shape
    ho = _out_size(h, kh, s[0], p[0], d[0])
    wo = _out_size(w, kw, s[1], p[1], d[1])
    xp = jnp.pad(x_nhwc, ((0, 0), (p[0], p[0]), (p[1], p[1]), (0, 0)))
    cols = []
    for ih in range(kh):
        for iw in range(kw):
            sl = xp[:,
                    ih * d[0]: ih * d[0] + (ho - 1) * s[0] + 1: s[0],
                    iw * d[1]: iw * d[1] + (wo - 1) * s[1] + 1: s[1], :]
            cols.append(sl)
    patches = jnp.stack(cols, axis=3)                 # [B, Ho, Wo, K, C]
    return patches.reshape(bsz * ho * wo, kh * kw * c), ho, wo


def _corner_rows(x_nhwc, off_rows, kh, kw, s, p, d, ho, wo):
    """Bilinear sampling data in packed row form.

    Returns
      corners: [N, 4*K*C]  the 4 corner pixel values per kernel tap
               (packed corner-major, then tap, then channel), dtype of x_nhwc
      fw     : [N, 4*K]    matching bilinear weights with the out-of-bounds
               validity folded in (f32)
    """
    bsz, h, w, c = x_nhwc.shape
    kk = kh * kw
    n = bsz * ho * wo

    off = off_rows.reshape(bsz, ho, wo, kk, 2)         # (dy, dx) interleaved
    dy, dx = off[..., 0], off[..., 1]                  # [B, Ho, Wo, K]
    ky = jnp.repeat(jnp.arange(kh), kw)                # [K]
    kx = jnp.tile(jnp.arange(kw), kh)
    base_y = (jnp.arange(ho)[:, None, None] * s[0] - p[0]
              + ky[None, None, :] * d[0]).astype(jnp.float32)    # [Ho, 1, K]
    base_x = (jnp.arange(wo)[None, :, None] * s[1] - p[1]
              + kx[None, None, :] * d[1]).astype(jnp.float32)    # [1, Wo, K]
    py = base_y[None] + dy                             # [B, Ho, Wo, K]
    px = base_x[None] + dx
    y0 = jnp.floor(py)
    x0 = jnp.floor(px)
    fy, fx = py - y0, px - x0
    y0i, x0i = y0.astype(jnp.int32), x0.astype(jnp.int32)

    def corner(yi, xi):
        valid = ((yi >= 0) & (yi < h) & (xi >= 0) & (xi < w)).astype(jnp.float32)
        idx = jnp.clip(yi, 0, h - 1) * w + jnp.clip(xi, 0, w - 1)
        return idx, valid

    i00, v00 = corner(y0i, x0i)
    i01, v01 = corner(y0i, x0i + 1)
    i10, v10 = corner(y0i + 1, x0i)
    i11, v11 = corner(y0i + 1, x0i + 1)

    idx = jnp.stack([i00, i01, i10, i11], axis=3)      # [B, Ho, Wo, 4, K]
    fw = jnp.stack([v00 * (1 - fy) * (1 - fx),
                    v01 * (1 - fy) * fx,
                    v10 * fy * (1 - fx),
                    v11 * fy * fx], axis=3)            # [B, Ho, Wo, 4, K]

    x_flat = x_nhwc.reshape(bsz, h * w, c)
    g = jnp.take_along_axis(
        x_flat, idx.reshape(bsz, ho * wo * 4 * kk)[:, :, None], axis=1)
    return g.reshape(n, 4 * kk * c), fw.reshape(n, 4 * kk)


# ----------------------------------------------------------------------------
# DeformConvV2 forward
# ----------------------------------------------------------------------------
def deform_conv_v2_forward(x, params, k, s=1, p=0, d=1):
    kh, kw = _pair(k)
    s, p, d = _pair(s), _pair(p), _pair(d)
    kk = kh * kw
    bsz, c1 = x.shape[0], x.shape[1]

    # single NCHW -> NHWC boundary transpose (in bf16: half the bytes);
    # everything downstream is lane-dense row form.  Both matmul operand
    # streams end up bf16 anyway, so this loses no precision vs. casting at
    # the kernel boundary.
    x_nhwc = jnp.transpose(x.astype(jnp.bfloat16), (0, 2, 3, 1))
    cols, ho, wo = _im2col(x_nhwc, kh, kw, s, p, d)            # [N, K*C] bf16
    n = bsz * ho * wo

    # ---- fused offset + mask convolution: ONE Pallas matmul ---------------
    off_c = params["w_off"].shape[0]
    msk_c = params["w_msk"].shape[0]
    w_cat = jnp.concatenate([params["w_off"], params["w_msk"]], axis=0)
    w_cat_t = jnp.transpose(w_cat, (2, 3, 1, 0)).reshape(kk * c1, off_c + msk_c)
    w_cat_t = _pad_lane(w_cat_t).astype(jnp.bfloat16)          # [K*C, 128]
    b_cat = _pad_lane(
        jnp.concatenate([params["b_off"], params["b_msk"]])[None, :])
    om = _pallas_matmul_bias(cols, w_cat_t, b_cat)             # [N, 128] f32
    off_rows = om[:, :off_c]                                   # [N, 2*K] f32
    msk_rows = om[:, off_c:off_c + msk_c]                      # [N, K]   f32

    # ---- bilinear corner gather + compact bilinear weights ----------------
    corners, fw = _corner_rows(x_nhwc, off_rows, kh, kw, s, p, d, ho, wo)

    # ---- deformable-conv matmul (sigmoid + modulation fused in-kernel) ----
    c2 = params["w_def"].shape[0]
    wd_t = jnp.transpose(params["w_def"], (2, 3, 1, 0)).reshape(kk * c1, c2)
    wd_stack = _pad_lane(jnp.tile(wd_t, (4, 1))).astype(jnp.bfloat16)
    b_def = _pad_lane(params["b_def"][None, :])
    e = _expand_matrix(4 * kk, c1)                             # [4K,  4K*C]
    e2 = _tap_expand_matrix(kk, c1)                            # [K,   4K*C]
    out = _pallas_deform_matmul(
        corners, fw, msk_rows, e, e2, wd_stack, b_def)         # [N, 128]
    out = out[:, :c2].reshape(bsz, ho, wo, c2)
    return jnp.transpose(out, (0, 3, 1, 2))                    # NCHW out


# ----------------------------------------------------------------------------
# Pure-JAX f32 reference (independent layout: [B, K, Ho, Wo, C] einsum)
# ----------------------------------------------------------------------------
def _conv_ref(x, w, b, s, p, d):
    out = lax.conv_general_dilated(
        x, w, window_strides=s, padding=[(p[0], p[0]), (p[1], p[1])],
        rhs_dilation=d, dimension_numbers=("NCHW", "OIHW", "NCHW"))
    return out + b[None, :, None, None]


def _ref_forward(x, params, k, s=1, p=0, d=1):
    kh, kw = _pair(k)
    s, p, d = _pair(s), _pair(p), _pair(d)
    kk = kh * kw
    bsz, c1, h, w = x.shape
    offset = _conv_ref(x, params["w_off"], params["b_off"], s, p, d)
    mask = jax.nn.sigmoid(_conv_ref(x, params["w_msk"], params["b_msk"], s, p, d))
    ho, wo = offset.shape[2], offset.shape[3]

    off = offset.reshape(bsz, kk, 2, ho, wo)
    dy, dx = off[:, :, 0], off[:, :, 1]                        # [B, K, Ho, Wo]
    ky = jnp.repeat(jnp.arange(kh), kw)
    kx = jnp.tile(jnp.arange(kw), kh)
    base_y = (jnp.arange(ho)[None, :, None] * s[0] - p[0]
              + ky[:, None, None] * d[0]).astype(jnp.float32)
    base_x = (jnp.arange(wo)[None, None, :] * s[1] - p[1]
              + kx[:, None, None] * d[1]).astype(jnp.float32)
    py = base_y[None] + dy
    px = base_x[None] + dx
    y0, x0 = jnp.floor(py), jnp.floor(px)
    fy, fx = py - y0, px - x0
    y0i, x0i = y0.astype(jnp.int32), x0.astype(jnp.int32)
    x_flat = jnp.transpose(x, (0, 2, 3, 1)).reshape(bsz, h * w, c1)

    def gather(yi, xi):
        valid = ((yi >= 0) & (yi < h) & (xi >= 0) & (xi < w)).astype(jnp.float32)
        idx = jnp.clip(yi, 0, h - 1) * w + jnp.clip(xi, 0, w - 1)
        g = jnp.take_along_axis(
            x_flat, idx.reshape(bsz, kk * ho * wo)[:, :, None], axis=1)
        return g.reshape(bsz, kk, ho, wo, c1) * valid[..., None]

    val = (gather(y0i, x0i) * ((1 - fy) * (1 - fx))[..., None]
           + gather(y0i, x0i + 1) * ((1 - fy) * fx)[..., None]
           + gather(y0i + 1, x0i) * (fy * (1 - fx))[..., None]
           + gather(y0i + 1, x0i + 1) * (fy * fx)[..., None])
    val = val * mask[..., None]                                # [B,K,Ho,Wo,C]
    c2 = params["w_def"].shape[0]
    wdef = jnp.transpose(params["w_def"], (0, 2, 3, 1)).reshape(c2, kk, c1)
    out = jnp.einsum("bkhwc,okc->bohw", val, wdef)
    return out + params["b_def"][None, :, None, None]


# ----------------------------------------------------------------------------
if __name__ == "__main__":
    c1, c2 = 4, 8
    k, s, p, d = 3, 1, 1, 1
    kh, kw = _pair(k)
    off_c = 2 * kh * kw      # offset_g = 1
    msk_c = kh * kw

    key = jax.random.PRNGKey(0)
    ks = jax.random.split(key, 8)
    params = {
        # offset_conv.weight is zero-initialized in the module's __init_weights
        "w_off": jnp.zeros((off_c, c1, kh, kw), jnp.float32),
        "b_off": 0.5 * jax.random.normal(ks[1], (off_c,), jnp.float32),
        "w_msk": 0.1 * jax.random.normal(ks[2], (msk_c, c1, kh, kw), jnp.float32),
        "b_msk": 0.1 * jax.random.normal(ks[3], (msk_c,), jnp.float32),
        "w_def": 0.1 * jax.random.normal(ks[4], (c2, c1, kh, kw), jnp.float32),
        "b_def": 0.1 * jax.random.normal(ks[5], (c2,), jnp.float32),
    }
    x = jax.random.normal(ks[6], (2, c1, 16, 16), jnp.float32)

    fwd = jax.jit(functools.partial(deform_conv_v2_forward, k=k, s=s, p=p, d=d))
    out = fwd(x, params)
    jax.block_until_ready(out)

    ref = _ref_forward(x, params, k, s, p, d)
    assert out.shape == (2, c2, 16, 16), out.shape
    err = float(jnp.max(jnp.abs(out - ref)))
    assert jnp.allclose(out, ref, atol=2e-2, rtol=2e-2), err
    print("KERNEL_OK")
</pallas_src>

<mosaic_0001>
module attributes {stable_mosaic.version = 11 : i64} {
  func.func @_matmul_bias_kernel(%arg0: i32, %arg1: memref<512x36xbf16, #tpu.memory_space<vmem>>, %arg2: memref<36x128xbf16, #tpu.memory_space<vmem>>, %arg3: memref<1x128xf32, #tpu.memory_space<vmem>>, %arg4: memref<512x128xf32, #tpu.memory_space<vmem>>) attributes {dimension_semantics = [#tpu.dimension_semantics<parallel>], iteration_bounds = array<i64: 1>, scalar_prefetch = 0 : i64, scratch_operands = 0 : i64, tpu.core_type = #tpu.core_type<tc>, window_params = [{transform_indices = @transform_0, window_bounds = array<i64: 512, 36>}, {pipeline_mode = #tpu.pipeline_mode<synchronous>, transform_indices = @transform_1, window_bounds = array<i64: 36, 128>}, {pipeline_mode = #tpu.pipeline_mode<synchronous>, transform_indices = @transform_2, window_bounds = array<i64: 1, 128>}, {transform_indices = @transform_3, window_bounds = array<i64: 512, 128>}]} {
    %c0 = arith.constant 0 : index
    %c0_0 = arith.constant 0 : index
    %0 = vector.load %arg1[%c0, %c0_0] : memref<512x36xbf16, #tpu.memory_space<vmem>>, vector<512x36xbf16>
    %c0_1 = arith.constant 0 : index
    %c0_2 = arith.constant 0 : index
    %1 = vector.load %arg2[%c0_1, %c0_2] : memref<36x128xbf16, #tpu.memory_space<vmem>>, vector<36x128xbf16>
    %cst = arith.constant dense<0.000000e+00> : vector<512x128xf32>
    %2 = tpu.matmul %0, %1, %cst {dimension_numbers = #tpu.dot_dimension_numbers<[1], [0], [0], [1], [0, 0, 1, 1], [], []>} : vector<512x36xbf16>, vector<36x128xbf16>, vector<512x128xf32> -> vector<512x128xf32>
    %c0_3 = arith.constant 0 : index
    %c0_4 = arith.constant 0 : index
    %3 = vector.load %arg3[%c0_3, %c0_4] : memref<1x128xf32, #tpu.memory_space<vmem>>, vector<1x128xf32>
    %4 = vector.broadcast %3 : vector<1x128xf32> to vector<512x128xf32>
    %5 = arith.addf %2, %4 : vector<512x128xf32>
    %c0_5 = arith.constant 0 : index
    %c0_6 = arith.constant 0 : index
    %6 = vector.load %arg4[%c0_5, %c0_6] : memref<512x128xf32, #tpu.memory_space<vmem>>, vector<512x128xf32>
    tpu.vector_store %arg4[%c0_5, %c0_6], %5 {strides = array<i32>} : memref<512x128xf32, #tpu.memory_space<vmem>>, vector<512x128xf32>,
    return
  }
  func.func @transform_0(%arg0: i32) -> (i32, i32) {
    %c0_i32 = arith.constant 0 : i32
    %c0_i32_0 = arith.constant 0 : i32
    return %arg0, %c0_i32 : i32, i32
  }
  func.func @transform_1(%arg0: i32) -> (i32, i32) {
    %c0_i32 = arith.constant 0 : i32
    %c0_i32_0 = arith.constant 0 : i32
    %c0_i32_1 = arith.constant 0 : i32
    return %c0_i32, %c0_i32_0 : i32, i32
  }
  func.func @transform_2(%arg0: i32) -> (i32, i32) {
    %c0_i32 = arith.constant 0 : i32
    %c0_i32_0 = arith.constant 0 : i32
    %c0_i32_1 = arith.constant 0 : i32
    return %c0_i32, %c0_i32_0 : i32, i32
  }
  func.func @transform_3(%arg0: i32) -> (i32, i32) {
    %c0_i32 = arith.constant 0 : i32
    %c0_i32_0 = arith.constant 0 : i32
    return %arg0, %c0_i32 : i32, i32
  }
}

module attributes {stable_mosaic.version = 11 : i64} {
  func.func @_deform_matmul_kernel(%arg0: i32, %arg1: memref<512x144xbf16, #tpu.memory_space<vmem>>, %arg2: memref<512x36xf32, #tpu.memory_space<vmem>>, %arg3: memref<512x9xf32, #tpu.memory_space<vmem>>, %arg4: memref<36x144xf32, #tpu.memory_space<vmem>>, %arg5: memref<9x144xf32, #tpu.memory_space<vmem>>, %arg6: memref<144x128xbf16, #tpu.memory_space<vmem>>, %arg7: memref<1x128xf32, #tpu.memory_space<vmem>>, %arg8: memref<512x128xf32, #tpu.memory_space<vmem>>) attributes {dimension_semantics = [#tpu.dimension_semantics<parallel>], iteration_bounds = array<i64: 1>, scalar_prefetch = 0 : i64, scratch_operands = 0 : i64, tpu.core_type = #tpu.core_type<tc>, window_params = [{transform_indices = @transform_0, window_bounds = array<i64: 512, 144>}, {transform_indices = @transform_1, window_bounds = array<i64: 512, 36>}, {transform_indices = @transform_2, window_bounds = array<i64: 512, 9>}, {pipeline_mode = #tpu.pipeline_mode<synchronous>, transform_indices = @transform_3, window_bounds = array<i64: 36, 144>}, {pipeline_mode = #tpu.pipeline_mode<synchronous>, transform_indices = @transform_4, window_bounds = array<i64: 9, 144>}, {pipeline_mode = #tpu.pipeline_mode<synchronous>, transform_indices = @transform_5, window_bounds = array<i64: 144, 128>}, {pipeline_mode = #tpu.pipeline_mode<synchronous>, transform_indices = @transform_6, window_bounds = array<i64: 1, 128>}, {transform_indices = @transform_7, window_bounds = array<i64: 512, 128>}]} {
    %c0 = arith.constant 0 : index
    %c0_0 = arith.constant 0 : index
    %0 = vector.load %arg3[%c0, %c0_0] : memref<512x9xf32, #tpu.memory_space<vmem>>, vector<512x9xf32>
    %cst = arith.constant 0.000000e+00 : f32
    %1 = vector.broadcast %cst : f32 to vector<512x9xf32>
    %2 = arith.subf %1, %0 : vector<512x9xf32>
    %3 = math.exp %2 : vector<512x9xf32>
    %cst_1 = arith.constant 1.000000e+00 : f32
    %4 = vector.broadcast %cst_1 : f32 to vector<512x9xf32>
    %5 = arith.addf %4, %3 : vector<512x9xf32>
    %cst_2 = arith.constant 1.000000e+00 : f32
    %6 = vector.broadcast %cst_2 : f32 to vector<512x9xf32>
    %7 = arith.divf %6, %5 : vector<512x9xf32>
    %c0_3 = arith.constant 0 : index
    %c0_4 = arith.constant 0 : index
    %8 = vector.load %arg2[%c0_3, %c0_4] : memref<512x36xf32, #tpu.memory_space<vmem>>, vector<512x36xf32>
    %c0_5 = arith.constant 0 : index
    %c0_6 = arith.constant 0 : index
    %9 = vector.load %arg4[%c0_5, %c0_6] : memref<36x144xf32, #tpu.memory_space<vmem>>, vector<36x144xf32>
    %cst_7 = arith.constant dense<0.000000e+00> : vector<512x144xf32>
    %10 = tpu.matmul %8, %9, %cst_7 {dimension_numbers = #tpu.dot_dimension_numbers<[1], [0], [0], [1], [0, 0, 1, 1], [], []>} : vector<512x36xf32>, vector<36x144xf32>, vector<512x144xf32> -> vector<512x144xf32>
    %c0_8 = arith.constant 0 : index
    %c0_9 = arith.constant 0 : index
    %11 = vector.load %arg5[%c0_8, %c0_9] : memref<9x144xf32, #tpu.memory_space<vmem>>, vector<9x144xf32>
    %cst_10 = arith.constant dense<0.000000e+00> : vector<512x144xf32>
    %12 = tpu.matmul %7, %11, %cst_10 {dimension_numbers = #tpu.dot_dimension_numbers<[1], [0], [0], [1], [0, 0, 1, 1], [], []>} : vector<512x9xf32>, vector<9x144xf32>, vector<512x144xf32> -> vector<512x144xf32>
    %13 = arith.mulf %10, %12 : vector<512x144xf32>
    %c0_11 = arith.constant 0 : index
    %c0_12 = arith.constant 0 : index
    %14 = vector.load %arg1[%c0_11, %c0_12] : memref<512x144xbf16, #tpu.memory_space<vmem>>, vector<512x144xbf16>
    %15 = arith.extf %14 : vector<512x144xbf16> to vector<512x144xf32>
    %16 = arith.mulf %15, %13 : vector<512x144xf32>
    %17 = arith.truncf %16 : vector<512x144xf32> to vector<512x144xbf16>
    %c0_13 = arith.constant 0 : index
    %c0_14 = arith.constant 0 : index
    %18 = vector.load %arg6[%c0_13, %c0_14] : memref<144x128xbf16, #tpu.memory_space<vmem>>, vector<144x128xbf16>
    %cst_15 = arith.constant dense<0.000000e+00> : vector<512x128xf32>
    %19 = tpu.matmul %17, %18, %cst_15 {dimension_numbers = #tpu.dot_dimension_numbers<[1], [0], [0], [1], [0, 0, 1, 1], [], []>} : vector<512x144xbf16>, vector<144x128xbf16>, vector<512x128xf32> -> vector<512x128xf32>
    %c0_16 = arith.constant 0 : index
    %c0_17 = arith.constant 0 : index
    %20 = vector.load %arg7[%c0_16, %c0_17] : memref<1x128xf32, #tpu.memory_space<vmem>>, vector<1x128xf32>
    %21 = vector.broadcast %20 : vector<1x128xf32> to vector<512x128xf32>
    %22 = arith.addf %19, %21 : vector<512x128xf32>
    %c0_18 = arith.constant 0 : index
    %c0_19 = arith.constant 0 : index
    %23 = vector.load %arg8[%c0_18, %c0_19] : memref<512x128xf32, #tpu.memory_space<vmem>>, vector<512x128xf32>
    tpu.vector_store %arg8[%c0_18, %c0_19], %22 {strides = array<i32>} : memref<512x128xf32, #tpu.memory_space<vmem>>, vector<512x128xf32>,
    return
  }
  func.func @transform_0(%arg0: i32) -> (i32, i32) {
    %c0_i32 = arith.constant 0 : i32
    %c0_i32_0 = arith.constant 0 : i32
    return %arg0, %c0_i32 : i32, i32
  }
  func.func @transform_1(%arg0: i32) -> (i32, i32) {
    %c0_i32 = arith.constant 0 : i32
    %c0_i32_0 = arith.constant 0 : i32
    return %arg0, %c0_i32 : i32, i32
  }
  func.func @transform_2(%arg0: i32) -> (i32, i32) {
    %c0_i32 = arith.constant 0 : i32
    %c0_i32_0 = arith.constant 0 : i32
    return %arg0, %c0_i32 : i32, i32
  }
  func.func @transform_3(%arg0: i32) -> (i32, i32) {
    %c0_i32 = arith.constant 0 : i32
    %c0_i32_0 = arith.constant 0 : i32
    %c0_i32_1 = arith.constant 0 : i32
    return %c0_i32, %c0_i32_0 : i32, i32
  }
  func.func @transform_4(%arg0: i32) -> (i32, i32) {
    %c0_i32 = arith.constant 0 : i32
    %c0_i32_0 = arith.constant 0 : i32
    %c0_i32_1 = arith.constant 0 : i32
    return %c0_i32, %c0_i32_0 : i32, i32
  }
  func.func @transform_5(%arg0: i32) -> (i32, i32) {
    %c0_i32 = arith.constant 0 : i32
    %c0_i32_0 = arith.constant 0 : i32
    %c0_i32_1 = arith.constant 0 : i32
    return %c0_i32, %c0_i32_0 : i32, i32
  }
  func.func @transform_6(%arg0: i32) -> (i32, i32) {
    %c0_i32 = arith.constant 0 : i32
    %c0_i32_0 = arith.constant 0 : i32
    %c0_i32_1 = arith.constant 0 : i32
    return %c0_i32, %c0_i32_0 : i32, i32
  }
  func.func @transform_7(%arg0: i32) -> (i32, i32) {
    %c0_i32 = arith.constant 0 : i32
    %c0_i32_0 = arith.constant 0 : i32
    return %arg0, %c0_i32 : i32, i32
  }
}

</mosaic_0001>

<llo_original>
// kernel: deform_conv_v2_forward.2
$region0: #{deform_conv_v2_forward.2}
  #allocation0 [shape = 'u32[]', space=smem, size = 0x4, offset = 0x4, fixed_abs, tag = 'smem constant byte address 0x4 - core index']
  #allocation1 [shape = 'u32[144,128]{1,0:T(1,128)}', space=vmem, size = 0x12000, scoped, tag = 'internal scratch']
  %s0 = inlined_call_operand.vmem [shape: bf16[512,36], index: 0, kind: input, shape index: {}]
  %s1 = inlined_call_operand.vmem [shape: bf16[36,128], index: 1, kind: input, shape index: {}]
  %s2 = inlined_call_operand.vmem [shape: f32[1,128], index: 2, kind: input, shape index: {}]
  %s3 = inlined_call_operand.vmem [shape: f32[512,128], index: 3, kind: output, shape index: {}]
  %s4 = sld [smem:[#allocation0]]
  $region22: #{deform_conv_v2_forward.2} parent=0
    _
  %s6 = ssub.s32 1, %s4
  %s7 = scalar_select 0, %s6, %s4
  // Predicated region
  $region2: #{deform_conv_v2_forward.2} parent=0 // pred_check
    _
  $region3: #{deform_conv_v2_forward.2} parent=0 // pred_check_branch
    %9 = sbr.rel (0) target = $region5
  $region4: #{deform_conv_v2_forward.2} parent=0 // pred_region
    _
  $region5: #{deform_conv_v2_forward.2} parent=0 // pred_fallthru
    _
  // Predicated region
  $region6: #{deform_conv_v2_forward.2} parent=0 // pred_check
    _
  $region7: #{deform_conv_v2_forward.2} parent=0 // pred_check_branch
    %11 = sbr.rel (0) target = $region9
  $region8: #{deform_conv_v2_forward.2} parent=0 // pred_region
    _
  $region9: #{deform_conv_v2_forward.2} parent=0 // pred_fallthru
    _
  // Predicated region
  $region10: #{deform_conv_v2_forward.2} parent=0 // pred_check
    _
  $region11: #{deform_conv_v2_forward.2} parent=0 // pred_check_branch
    %13 = sbr.rel (0) target = $region13
  $region12: #{deform_conv_v2_forward.2} parent=0 // pred_region
    _
  $region13: #{deform_conv_v2_forward.2} parent=0 // pred_fallthru
    _
  %v15 = vld [vmem:[%s0] sm:$0xf]
  %v16 = vld [vmem:[%s0 + $0x4] sm:$0xf]
  %v17 = vld [vmem:[%s0 + $0x8] sm:$0xf]
  %v18 = vld [vmem:[%s0 + $0xc] sm:$0xf]
  %v19 = vld [vmem:[%s0 + $0x10] sm:$0xf]
  %v20 = vld [vmem:[%s0 + $0x14] sm:$0xf]
  %v21 = vld [vmem:[%s0 + $0x18] sm:$0xf]
  %v22 = vld [vmem:[%s0 + $0x1c] sm:$0xf]
  %v23 = vld [vmem:[%s0 + $0x20] sm:$0xf]
  %v24 = vld [vmem:[%s0 + $0x24] sm:$0xf]
  %v25 = vld [vmem:[%s0 + $0x28] sm:$0xf]
  %v26 = vld [vmem:[%s0 + $0x2c] sm:$0xf]
  %v27 = vld [vmem:[%s0 + $0x30] sm:$0xf]
  %v28 = vld [vmem:[%s0 + $0x34] sm:$0xf]
  %v29 = vld [vmem:[%s0 + $0x38] sm:$0xf]
  %v30 = vld [vmem:[%s0 + $0x3c] sm:$0xf]
  %v31 = vld [vmem:[%s0 + $0x40] sm:$0xf]
  %v32 = vld [vmem:[%s0 + $0x44] sm:$0xf]
  %v33 = vld [vmem:[%s0 + $0x48] sm:$0xf]
  %v34 = vld [vmem:[%s0 + $0x4c] sm:$0xf]
  %v35 = vld [vmem:[%s0 + $0x50] sm:$0xf]
  %v36 = vld [vmem:[%s0 + $0x54] sm:$0xf]
  %v37 = vld [vmem:[%s0 + $0x58] sm:$0xf]
  %v38 = vld [vmem:[%s0 + $0x5c] sm:$0xf]
  %v39 = vld [vmem:[%s0 + $0x60] sm:$0xf]
  %v40 = vld [vmem:[%s0 + $0x64] sm:$0xf]
  %v41 = vld [vmem:[%s0 + $0x68] sm:$0xf]
  %v42 = vld [vmem:[%s0 + $0x6c] sm:$0xf]
  %v43 = vld [vmem:[%s0 + $0x70] sm:$0xf]
  %v44 = vld [vmem:[%s0 + $0x74] sm:$0xf]
  %v45 = vld [vmem:[%s0 + $0x78] sm:$0xf]
  %v46 = vld [vmem:[%s0 + $0x7c] sm:$0xf]
  %v47 = vld [vmem:[%s0 + $0x80] sm:$0xf]
  %v48 = vld [vmem:[%s0 + $0x84] sm:$0xf]
  %v49 = vld [vmem:[%s0 + $0x88] sm:$0xf]
  %v50 = vld [vmem:[%s0 + $0x8c] sm:$0xf]
  %v51 = vld [vmem:[%s0 + $0x90] sm:$0xf]
  %v52 = vld [vmem:[%s0 + $0x94] sm:$0xf]
  %v53 = vld [vmem:[%s0 + $0x98] sm:$0xf]
  %v54 = vld [vmem:[%s0 + $0x9c] sm:$0xf]
  %v55 = vld [vmem:[%s0 + $0xa0] sm:$0xf]
  %v56 = vld [vmem:[%s0 + $0xa4] sm:$0xf]
  %v57 = vld [vmem:[%s0 + $0xa8] sm:$0xf]
  %v58 = vld [vmem:[%s0 + $0xac] sm:$0xf]
  %v59 = vld [vmem:[%s0 + $0xb0] sm:$0xf]
  %v60 = vld [vmem:[%s0 + $0xb4] sm:$0xf]
  %v61 = vld [vmem:[%s0 + $0xb8] sm:$0xf]
  %v62 = vld [vmem:[%s0 + $0xbc] sm:$0xf]
  %v63 = vld [vmem:[%s0 + $0xc0] sm:$0xf]
  %v64 = vld [vmem:[%s0 + $0xc4] sm:$0xf]
  %v65 = vld [vmem:[%s0 + $0xc8] sm:$0xf]
  %v66 = vld [vmem:[%s0 + $0xcc] sm:$0xf]
  %v67 = vld [vmem:[%s0 + $0xd0] sm:$0xf]
  %v68 = vld [vmem:[%s0 + $0xd4] sm:$0xf]
  %v69 = vld [vmem:[%s0 + $0xd8] sm:$0xf]
  %v70 = vld [vmem:[%s0 + $0xdc] sm:$0xf]
  %v71 = vld [vmem:[%s0 + $0xe0] sm:$0xf]
  %v72 = vld [vmem:[%s0 + $0xe4] sm:$0xf]
  %v73 = vld [vmem:[%s0 + $0xe8] sm:$0xf]
  %v74 = vld [vmem:[%s0 + $0xec] sm:$0xf]
  %v75 = vld [vmem:[%s0 + $0xf0] sm:$0xf]
  %v76 = vld [vmem:[%s0 + $0xf4] sm:$0xf]
  %v77 = vld [vmem:[%s0 + $0xf8] sm:$0xf]
  %v78 = vld [vmem:[%s0 + $0xfc] sm:$0xf]
  %v79 = vld [vmem:[%s1] sm:$0xf]
  %v80 = vld [vmem:[%s1 + $0x4] sm:$0xf]
  %v81 = vld [vmem:[%s1 + $0x8] sm:$0xf]
  %v82 = vld [vmem:[%s1 + $0xc] sm:$0xf]
  %v83 = vld [vmem:[%s1 + $0x10] sm:$0x3]
  %v84 = vld [vmem:[%s2] sm:$0x1]
  %v86 = vlaneseq
  %v87 = vshrl.u32 %v86, 7
  %v88 = vsub.s32 0, %v87
  %v89 = vrot.slane %v84, %v88
  %v155 = vunpack.c.l.b16 %v15
  %v156 = vunpack.c.l.b16 %v16
  %v157 = vunpack.c.l.b16 %v17
  %v158 = vunpack.c.l.b16 %v18
  %v159 = vunpack.c.l.b16 %v19
  %v160 = vunpack.c.l.b16 %v20
  %v161 = vunpack.c.l.b16 %v21
  %v162 = vunpack.c.l.b16 %v22
  %v163 = vunpack.c.l.b16 %v23
  %v164 = vunpack.c.l.b16 %v24
  %v165 = vunpack.c.l.b16 %v25
  %v166 = vunpack.c.l.b16 %v26
  %v167 = vunpack.c.l.b16 %v27
  %v168 = vunpack.c.l.b16 %v28
  %v169 = vunpack.c.l.b16 %v29
  %v170 = vunpack.c.l.b16 %v30
  %v171 = vunpack.c.l.b16 %v31
  %v172 = vunpack.c.l.b16 %v32
  %v173 = vunpack.c.l.b16 %v33
  %v174 = vunpack.c.l.b16 %v34
  %v175 = vunpack.c.l.b16 %v35
  %v176 = vunpack.c.l.b16 %v36
  %v177 = vunpack.c.l.b16 %v37
  %v178 = vunpack.c.l.b16 %v38
  %v179 = vunpack.c.l.b16 %v39
  %v180 = vunpack.c.l.b16 %v40
  %v181 = vunpack.c.l.b16 %v41
  %v182 = vunpack.c.l.b16 %v42
  %v183 = vunpack.c.l.b16 %v43
  %v184 = vunpack.c.l.b16 %v44
  %v185 = vunpack.c.l.b16 %v45
  %v186 = vunpack.c.l.b16 %v46
  %v187 = vunpack.c.l.b16 %v47
  %v188 = vunpack.c.l.b16 %v48
  %v189 = vunpack.c.l.b16 %v49
  %v190 = vunpack.c.l.b16 %v50
  %v191 = vunpack.c.l.b16 %v51
  %v192 = vunpack.c.l.b16 %v52
  %v193 = vunpack.c.l.b16 %v53
  %v194 = vunpack.c.l.b16 %v54
  %v195 = vunpack.c.l.b16 %v55
  %v196 = vunpack.c.l.b16 %v56
  %v197 = vunpack.c.l.b16 %v57
  %v198 = vunpack.c.l.b16 %v58
  %v199 = vunpack.c.l.b16 %v59
  %v200 = vunpack.c.l.b16 %v60
  %v201 = vunpack.c.l.b16 %v61
  %v202 = vunpack.c.l.b16 %v62
  %v203 = vunpack.c.l.b16 %v63
  %v204 = vunpack.c.l.b16 %v64
  %v205 = vunpack.c.l.b16 %v65
  %v206 = vunpack.c.l.b16 %v66
  %v207 = vunpack.c.l.b16 %v67
  %v208 = vunpack.c.l.b16 %v68
  %v209 = vunpack.c.l.b16 %v69
  %v210 = vunpack.c.l.b16 %v70
  %v211 = vunpack.c.l.b16 %v71
  %v212 = vunpack.c.l.b16 %v72
  %v213 = vunpack.c.l.b16 %v73
  %v214 = vunpack.c.l.b16 %v74
  %v215 = vunpack.c.l.b16 %v75
  %v216 = vunpack.c.l.b16 %v76
  %v217 = vunpack.c.l.b16 %v77
  %v218 = vunpack.c.l.b16 %v78
  %v219 = vpack.c.b16 %v156, %v155
  %v220 = vpack.c.b16 %v158, %v157
  %v221 = vpack.c.b16 %v160, %v159
  %v222 = vpack.c.b16 %v162, %v161
  %v223 = vpack.c.b16 %v164, %v163
  %v224 = vpack.c.b16 %v166, %v165
  %v225 = vpack.c.b16 %v168, %v167
  %v226 = vpack.c.b16 %v170, %v169
  %v227 = vpack.c.b16 %v172, %v171
  %v228 = vpack.c.b16 %v174, %v173
  %v229 = vpack.c.b16 %v176, %v175
  %v230 = vpack.c.b16 %v178, %v177
  %v231 = vpack.c.b16 %v180, %v179
  %v232 = vpack.c.b16 %v182, %v181
  %v233 = vpack.c.b16 %v184, %v183
  %v234 = vpack.c.b16 %v186, %v185
  %v235 = vpack.c.b16 %v188, %v187
  %v236 = vpack.c.b16 %v190, %v189
  %v237 = vpack.c.b16 %v192, %v191
  %v238 = vpack.c.b16 %v194, %v193
  %v239 = vpack.c.b16 %v196, %v195
  %v240 = vpack.c.b16 %v198, %v197
  %v241 = vpack.c.b16 %v200, %v199
  %v242 = vpack.c.b16 %v202, %v201
  %v243 = vpack.c.b16 %v204, %v203
  %v244 = vpack.c.b16 %v206, %v205
  %v245 = vpack.c.b16 %v208, %v207
  %v246 = vpack.c.b16 %v210, %v209
  %v247 = vpack.c.b16 %v212, %v211
  %v248 = vpack.c.b16 %v214, %v213
  %v249 = vpack.c.b16 %v216, %v215
  %v250 = vpack.c.b16 %v218, %v217
  %v256 = vunpack.c.l.b16 %v79
  %v257 = vunpack.c.l.b16 %v80
  %v258 = vunpack.c.l.b16 %v81
  %v259 = vunpack.c.l.b16 %v82
  %v260 = vunpack.c.l.b16 %v83
  %v261 = vpack.c.b16 %v257, %v256
  %v262 = vpack.c.b16 %v259, %v258
  %v263 = vpack.c.b16 %v260, %v260
  %vm266 = vcmask 293888
  %v268 = vsel %vm266, %v219, 0
  %v271 = vsel %vm266, %v220, 0
  %v274 = vsel %vm266, %v221, 0
  %v277 = vsel %vm266, %v222, 0
  %v280 = vsel %vm266, %v223, 0
  %v283 = vsel %vm266, %v224, 0
  %v286 = vsel %vm266, %v225, 0
  %v289 = vsel %vm266, %v226, 0
  %v292 = vsel %vm266, %v227, 0
  %v295 = vsel %vm266, %v228, 0
  %v298 = vsel %vm266, %v229, 0
  %v301 = vsel %vm266, %v230, 0
  %v304 = vsel %vm266, %v231, 0
  %v307 = vsel %vm266, %v232, 0
  %v310 = vsel %vm266, %v233, 0
  %v313 = vsel %vm266, %v234, 0
  %v316 = vsel %vm266, %v235, 0
  %v319 = vsel %vm266, %v236, 0
  %v322 = vsel %vm266, %v237, 0
  %v325 = vsel %vm266, %v238, 0
  %v328 = vsel %vm266, %v239, 0
  %v331 = vsel %vm266, %v240, 0
  %v334 = vsel %vm266, %v241, 0
  %v337 = vsel %vm266, %v242, 0
  %v340 = vsel %vm266, %v243, 0
  %v343 = vsel %vm266, %v244, 0
  %v346 = vsel %vm266, %v245, 0
  %v349 = vsel %vm266, %v246, 0
  %v352 = vsel %vm266, %v247, 0
  %v355 = vsel %vm266, %v248, 0
  %v358 = vsel %vm266, %v249, 0
  %v361 = vsel %vm266, %v250, 0
  %vm363 = vcmask 1041408
  %v365 = vsel %vm363, %v263, 0
  %367 = vmatprep.subr.bf16.mxu0 0
  %368 = vmatpush1.bf16.msra.mxu0 %v261
  %369 = vmatprep.subr.bf16.mxu0 0
  %370 = vmatpush1.bf16.msra.mxu0 %v262
  %371 = vmatprep.subr.bf16.mxu0 0
  %372 = vmatpush1.bf16.msra.mxu0 %v365
  %373 = vmatprep.subr.bf16.mxu0 0
  %374 = vmatpush1.bf16.msra.mxu0 0
  %375 = vmatprep.subr.bf16.mxu0 0
  %376 = vmatpush1.bf16.msra.mxu0 0
  %377 = vmatprep.subr.bf16.mxu0 0
  %378 = vmatpush1.bf16.msra.mxu0 0
  %379 = vmatprep.subr.bf16.mxu0 0
  %380 = vmatpush1.bf16.msra.mxu0 0
  %381 = vmatprep.subr.bf16.mxu0 0
  %382 = vmatpush1.bf16.msra.mxu0 0
  %383 = vmatprep.subr.bf16.mxu0 0
  %384 = vmatpush1.bf16.msra.mxu0 0
  %385 = vmatprep.subr.bf16.mxu0 0
  %386 = vmatpush1.bf16.msra.mxu0 0
  %387 = vmatprep.subr.bf16.mxu0 0
  %388 = vmatpush1.bf16.msra.mxu0 0
  %389 = vmatprep.subr.bf16.mxu0 0
  %390 = vmatpush1.bf16.msra.mxu0 0
  %391 = vmatprep.subr.bf16.mxu0 0
  %392 = vmatpush1.bf16.msra.mxu0 0
  %393 = vmatprep.subr.bf16.mxu0 0
  %394 = vmatpush1.bf16.msra.mxu0 0
  %395 = vmatprep.subr.bf16.mxu0 0
  %396 = vmatpush1.bf16.msra.mxu0 0
  %397 = vmatprep.subr.bf16.mxu0 0
  %398 = vmatpush1.bf16.msra.mxu0 0
  %399 = vmatprep.mubr.bf16.mxu0 0
  %400 = vmatmul.mubr.bf16.gmra.mrb[0].mxu0 %v268
  %v401 = vpop.f32.mrb[0].mxu0
  %v402 = vadd.f32 %v89, %v401
  %v403 = vpop.f32.mrb[0].mxu0
  %v404 = vpop.f32.mrb[0].mxu0
  %v405 = vadd.f32 %v89, %v404
  %v406 = vpop.f32.mrb[0].mxu0
  %407 = vmatprep.mubr.bf16.mxu0 0
  %408 = vmatmul.mubr.bf16.gmra.mrb[0].mxu0 %v271
  %v409 = vpop.f32.mrb[0].mxu0
  %v410 = vadd.f32 %v89, %v409
  %v411 = vpop.f32.mrb[0].mxu0
  %v412 = vpop.f32.mrb[0].mxu0
  %v413 = vadd.f32 %v89, %v412
  %v414 = vpop.f32.mrb[0].mxu0
  %415 = vmatprep.mubr.bf16.mxu0 0
  %416 = vmatmul.mubr.bf16.gmra.mrb[0].mxu0 %v274
  %v417 = vpop.f32.mrb[0].mxu0
  %v418 = vadd.f32 %v89, %v417
  %v419 = vpop.f32.mrb[0].mxu0
  %v420 = vpop.f32.mrb[0].mxu0
  %v421 = vadd.f32 %v89, %v420
  %v422 = vpop.f32.mrb[0].mxu0
  %423 = vmatprep.mubr.bf16.mxu0 0
  %424 = vmatmul.mubr.bf16.gmra.mrb[0].mxu0 %v277
  %v425 = vpop.f32.mrb[0].mxu0
  %v426 = vadd.f32 %v89, %v425
  %v427 = vpop.f32.mrb[0].mxu0
  %v428 = vpop.f32.mrb[0].mxu0
  %v429 = vadd.f32 %v89, %v428
  %v430 = vpop.f32.mrb[0].mxu0
  %431 = vmatprep.mubr.bf16.mxu0 0
  %432 = vmatmul.mubr.bf16.gmra.mrb[0].mxu0 %v280
  %v433 = vpop.f32.mrb[0].mxu0
  %v434 = vadd.f32 %v89, %v433
  %v435 = vpop.f32.mrb[0].mxu0
  %v436 = vpop.f32.mrb[0].mxu0
  %v437 = vadd.f32 %v89, %v436
  %v438 = vpop.f32.mrb[0].mxu0
  %439 = vmatprep.mubr.bf16.mxu0 0
  %440 = vmatmul.mubr.bf16.gmra.mrb[0].mxu0 %v283
  %v441 = vpop.f32.mrb[0].mxu0
  %v442 = vadd.f32 %v89, %v441
  %v443 = vpop.f32.mrb[0].mxu0
  %v444 = vpop.f32.mrb[0].mxu0
  %v445 = vadd.f32 %v89, %v444
  %v446 = vpop.f32.mrb[0].mxu0
  %447 = vmatprep.mubr.bf16.mxu0 0
  %448 = vmatmul.mubr.bf16.gmra.mrb[0].mxu0 %v286
  %v449 = vpop.f32.mrb[0].mxu0
  %v450 = vadd.f32 %v89, %v449
  %v451 = vpop.f32.mrb[0].mxu0
  %v452 = vpop.f32.mrb[0].mxu0
  %v453 = vadd.f32 %v89, %v452
  %v454 = vpop.f32.mrb[0].mxu0
  %455 = vmatprep.mubr.bf16.mxu0 0
  %456 = vmatmul.mubr.bf16.gmra.mrb[0].mxu0 %v289
  %v457 = vpop.f32.mrb[0].mxu0
  %v458 = vadd.f32 %v89, %v457
  %v459 = vpop.f32.mrb[0].mxu0
  %v460 = vpop.f32.mrb[0].mxu0
  %v461 = vadd.f32 %v89, %v460
  %v462 = vpop.f32.mrb[0].mxu0
  %463 = vmatprep.mubr.bf16.mxu0 0
  %464 = vmatmul.mubr.bf16.gmra.mrb[0].mxu0 %v292
  %v465 = vpop.f32.mrb[0].mxu0
  %v466 = vadd.f32 %v89, %v465
  %v467 = vpop.f32.mrb[0].mxu0
  %v468 = vpop.f32.mrb[0].mxu0
  %v469 = vadd.f32 %v89, %v468
  %v470 = vpop.f32.mrb[0].mxu0
  %471 = vmatprep.mubr.bf16.mxu0 0
  %472 = vmatmul.mubr.bf16.gmra.mrb[0].mxu0 %v295
  %v473 = vpop.f32.mrb[0].mxu0
  %v474 = vadd.f32 %v89, %v473
  %v475 = vpop.f32.mrb[0].mxu0
  %v476 = vpop.f32.mrb[0].mxu0
  %v477 = vadd.f32 %v89, %v476
  %v478 = vpop.f32.mrb[0].mxu0
  %479 = vmatprep.mubr.bf16.mxu0 0
  %480 = vmatmul.mubr.bf16.gmra.mrb[0].mxu0 %v298
  %v481 = vpop.f32.mrb[0].mxu0
  %v482 = vadd.f32 %v89, %v481
  %v483 = vpop.f32.mrb[0].mxu0
  %v484 = vpop.f32.mrb[0].mxu0
  %v485 = vadd.f32 %v89, %v484
  %v486 = vpop.f32.mrb[0].mxu0
  %487 = vmatprep.mubr.bf16.mxu0 0
  %488 = vmatmul.mubr.bf16.gmra.mrb[0].mxu0 %v301
  %v489 = vpop.f32.mrb[0].mxu0
  %v490 = vadd.f32 %v89, %v489
  %v491 = vpop.f32.mrb[0].mxu0
  %v492 = vpop.f32.mrb[0].mxu0
  %v493 = vadd.f32 %v89, %v492
  %v494 = vpop.f32.mrb[0].mxu0
  %495 = vmatprep.mubr.bf16.mxu0 0
  %496 = vmatmul.mubr.bf16.gmra.mrb[0].mxu0 %v304
  %v497 = vpop.f32.mrb[0].mxu0
  %v498 = vadd.f32 %v89, %v497
  %v499 = vpop.f32.mrb[0].mxu0
  %v500 = vpop.f32.mrb[0].mxu0
  %v501 = vadd.f32 %v89, %v500
  %v502 = vpop.f32.mrb[0].mxu0
  %503 = vmatprep.mubr.bf16.mxu0 0
  %504 = vmatmul.mubr.bf16.gmra.mrb[0].mxu0 %v307
  %v505 = vpop.f32.mrb[0].mxu0
  %v506 = vadd.f32 %v89, %v505
  %v507 = vpop.f32.mrb[0].mxu0
  %v508 = vpop.f32.mrb[0].mxu0
  %v509 = vadd.f32 %v89, %v508
  %v510 = vpop.f32.mrb[0].mxu0
  %511 = vmatprep.mubr.bf16.mxu0 0
  %512 = vmatmul.mubr.bf16.gmra.mrb[0].mxu0 %v310
  %v513 = vpop.f32.mrb[0].mxu0
  %v514 = vadd.f32 %v89, %v513
  %v515 = vpop.f32.mrb[0].mxu0
  %v516 = vpop.f32.mrb[0].mxu0
  %v517 = vadd.f32 %v89, %v516
  %v518 = vpop.f32.mrb[0].mxu0
  %519 = vmatprep.mubr.bf16.mxu0 0
  %520 = vmatmul.mubr.bf16.gmra.mrb[0].mxu0 %v313
  %v521 = vpop.f32.mrb[0].mxu0
  %v522 = vadd.f32 %v89, %v521
  %v523 = vpop.f32.mrb[0].mxu0
  %v524 = vpop.f32.mrb[0].mxu0
  %v525 = vadd.f32 %v89, %v524
  %v526 = vpop.f32.mrb[0].mxu0
  %527 = vmatprep.mubr.bf16.mxu0 0
  %528 = vmatmul.mubr.bf16.gmra.mrb[0].mxu0 %v316
  %v529 = vpop.f32.mrb[0].mxu0
  %v530 = vadd.f32 %v89, %v529
  %v531 = vpop.f32.mrb[0].mxu0
  %v532 = vpop.f32.mrb[0].mxu0
  %v533 = vadd.f32 %v89, %v532
  %v534 = vpop.f32.mrb[0].mxu0
  %535 = vmatprep.mubr.bf16.mxu0 0
  %536 = vmatmul.mubr.bf16.gmra.mrb[0].mxu0 %v319
  %v537 = vpop.f32.mrb[0].mxu0
  %v538 = vadd.f32 %v89, %v537
  %v539 = vpop.f32.mrb[0].mxu0
  %v540 = vpop.f32.mrb[0].mxu0
  %v541 = vadd.f32 %v89, %v540
  %v542 = vpop.f32.mrb[0].mxu0
  %543 = vmatprep.mubr.bf16.mxu0 0
  %544 = vmatmul.mubr.bf16.gmra.mrb[0].mxu0 %v322
  %v545 = vpop.f32.mrb[0].mxu0
  %v546 = vadd.f32 %v89, %v545
  %v547 = vpop.f32.mrb[0].mxu0
  %v548 = vpop.f32.mrb[0].mxu0
  %v549 = vadd.f32 %v89, %v548
  %v550 = vpop.f32.mrb[0].mxu0
  %551 = vmatprep.mubr.bf16.mxu0 0
  %552 = vmatmul.mubr.bf16.gmra.mrb[0].mxu0 %v325
  %v553 = vpop.f32.mrb[0].mxu0
  %v554 = vadd.f32 %v89, %v553
  %v555 = vpop.f32.mrb[0].mxu0
  %v556 = vpop.f32.mrb[0].mxu0
  %v557 = vadd.f32 %v89, %v556
  %v558 = vpop.f32.mrb[0].mxu0
  %559 = vmatprep.mubr.bf16.mxu0 0
  %560 = vmatmul.mubr.bf16.gmra.mrb[0].mxu0 %v328
  %v561 = vpop.f32.mrb[0].mxu0
  %v562 = vadd.f32 %v89, %v561
  %v563 = vpop.f32.mrb[0].mxu0
  %v564 = vpop.f32.mrb[0].mxu0
  %v565 = vadd.f32 %v89, %v564
  %v566 = vpop.f32.mrb[0].mxu0
  %567 = vmatprep.mubr.bf16.mxu0 0
  %568 = vmatmul.mubr.bf16.gmra.mrb[0].mxu0 %v331
  %v569 = vpop.f32.mrb[0].mxu0
  %v570 = vadd.f32 %v89, %v569
  %v571 = vpop.f32.mrb[0].mxu0
  %v572 = vpop.f32.mrb[0].mxu0
  %v573 = vadd.f32 %v89, %v572
  %v574 = vpop.f32.mrb[0].mxu0
  %575 = vmatprep.mubr.bf16.mxu0 0
  %576 = vmatmul.mubr.bf16.gmra.mrb[0].mxu0 %v334
  %v577 = vpop.f32.mrb[0].mxu0
  %v578 = vadd.f32 %v89, %v577
  %v579 = vpop.f32.mrb[0].mxu0
  %v580 = vpop.f32.mrb[0].mxu0
  %v581 = vadd.f32 %v89, %v580
  %v582 = vpop.f32.mrb[0].mxu0
  %583 = vmatprep.mubr.bf16.mxu0 0
  %584 = vmatmul.mubr.bf16.gmra.mrb[0].mxu0 %v337
  %v585 = vpop.f32.mrb[0].mxu0
  %v586 = vadd.f32 %v89, %v585
  %v587 = vpop.f32.mrb[0].mxu0
  %v588 = vpop.f32.mrb[0].mxu0
  %v589 = vadd.f32 %v89, %v588
  %v590 = vpop.f32.mrb[0].mxu0
  %591 = vmatprep.mubr.bf16.mxu0 0
  %592 = vmatmul.mubr.bf16.gmra.mrb[0].mxu0 %v340
  %v593 = vpop.f32.mrb[0].mxu0
  %v594 = vadd.f32 %v89, %v593
  %v595 = vpop.f32.mrb[0].mxu0
  %v596 = vpop.f32.mrb[0].mxu0
  %v597 = vadd.f32 %v89, %v596
  %v598 = vpop.f32.mrb[0].mxu0
  %599 = vmatprep.mubr.bf16.mxu0 0
  %600 = vmatmul.mubr.bf16.gmra.mrb[0].mxu0 %v343
  %v601 = vpop.f32.mrb[0].mxu0
  %v602 = vadd.f32 %v89, %v601
  %v603 = vpop.f32.mrb[0].mxu0
  %v604 = vpop.f32.mrb[0].mxu0
  %v605 = vadd.f32 %v89, %v604
  %v606 = vpop.f32.mrb[0].mxu0
  %607 = vmatprep.mubr.bf16.mxu0 0
  %608 = vmatmul.mubr.bf16.gmra.mrb[0].mxu0 %v346
  %v609 = vpop.f32.mrb[0].mxu0
  %v610 = vadd.f32 %v89, %v609
  %v611 = vpop.f32.mrb[0].mxu0
  %v612 = vpop.f32.mrb[0].mxu0
  %v613 = vadd.f32 %v89, %v612
  %v614 = vpop.f32.mrb[0].mxu0
  %615 = vmatprep.mubr.bf16.mxu0 0
  %616 = vmatmul.mubr.bf16.gmra.mrb[0].mxu0 %v349
  %v617 = vpop.f32.mrb[0].mxu0
  %v618 = vadd.f32 %v89, %v617
  %v619 = vpop.f32.mrb[0].mxu0
  %v620 = vpop.f32.mrb[0].mxu0
  %v621 = vadd.f32 %v89, %v620
  %v622 = vpop.f32.mrb[0].mxu0
  %623 = vmatprep.mubr.bf16.mxu0 0
  %624 = vmatmul.mubr.bf16.gmra.mrb[0].mxu0 %v352
  %v625 = vpop.f32.mrb[0].mxu0
  %v626 = vadd.f32 %v89, %v625
  %v627 = vpop.f32.mrb[0].mxu0
  %v628 = vpop.f32.mrb[0].mxu0
  %v629 = vadd.f32 %v89, %v628
  %v630 = vpop.f32.mrb[0].mxu0
  %631 = vmatprep.mubr.bf16.mxu0 0
  %632 = vmatmul.mubr.bf16.gmra.mrb[0].mxu0 %v355
  %v633 = vpop.f32.mrb[0].mxu0
  %v634 = vadd.f32 %v89, %v633
  %v635 = vpop.f32.mrb[0].mxu0
  %v636 = vpop.f32.mrb[0].mxu0
  %v637 = vadd.f32 %v89, %v636
  %v638 = vpop.f32.mrb[0].mxu0
  %639 = vmatprep.mubr.bf16.mxu0 0
  %640 = vmatmul.mubr.bf16.gmra.mrb[0].mxu0 %v358
  %v641 = vpop.f32.mrb[0].mxu0
  %v642 = vadd.f32 %v89, %v641
  %v643 = vpop.f32.mrb[0].mxu0
  %v644 = vpop.f32.mrb[0].mxu0
  %v645 = vadd.f32 %v89, %v644
  %v646 = vpop.f32.mrb[0].mxu0
  %647 = vmatprep.mubr.bf16.mxu0 0
  %648 = vmatmul.mubr.bf16.gmra.mrb[0].mxu0 %v361
  %v649 = vpop.f32.mrb[0].mxu0
  %v650 = vadd.f32 %v89, %v649
  %v651 = vpop.f32.mrb[0].mxu0
  %v652 = vpop.f32.mrb[0].mxu0
  %v653 = vadd.f32 %v89, %v652
  %v654 = vpop.f32.mrb[0].mxu0
  %655 = vdwg.mxu0
  %656 = vst [vmem:[%s3] sm:$0xff] %v402
  %657 = vst [vmem:[%s3 + $0x8] sm:$0xff] %v405
  %658 = vst [vmem:[%s3 + $0x10] sm:$0xff] %v410
  %659 = vst [vmem:[%s3 + $0x18] sm:$0xff] %v413
  %660 = vst [vmem:[%s3 + $0x20] sm:$0xff] %v418
  %661 = vst [vmem:[%s3 + $0x28] sm:$0xff] %v421
  %662 = vst [vmem:[%s3 + $0x30] sm:$0xff] %v426
  %663 = vst [vmem:[%s3 + $0x38] sm:$0xff] %v429
  %664 = vst [vmem:[%s3 + $0x40] sm:$0xff] %v434
  %665 = vst [vmem:[%s3 + $0x48] sm:$0xff] %v437
  %666 = vst [vmem:[%s3 + $0x50] sm:$0xff] %v442
  %667 = vst [vmem:[%s3 + $0x58] sm:$0xff] %v445
  %668 = vst [vmem:[%s3 + $0x60] sm:$0xff] %v450
  %669 = vst [vmem:[%s3 + $0x68] sm:$0xff] %v453
  %670 = vst [vmem:[%s3 + $0x70] sm:$0xff] %v458
  %671 = vst [vmem:[%s3 + $0x78] sm:$0xff] %v461
  %672 = vst [vmem:[%s3 + $0x80] sm:$0xff] %v466
  %673 = vst [vmem:[%s3 + $0x88] sm:$0xff] %v469
  %674 = vst [vmem:[%s3 + $0x90] sm:$0xff] %v474
  %675 = vst [vmem:[%s3 + $0x98] sm:$0xff] %v477
  %676 = vst [vmem:[%s3 + $0xa0] sm:$0xff] %v482
  %677 = vst [vmem:[%s3 + $0xa8] sm:$0xff] %v485
  %678 = vst [vmem:[%s3 + $0xb0] sm:$0xff] %v490
  %679 = vst [vmem:[%s3 + $0xb8] sm:$0xff] %v493
  %680 = vst [vmem:[%s3 + $0xc0] sm:$0xff] %v498
  %681 = vst [vmem:[%s3 + $0xc8] sm:$0xff] %v501
  %682 = vst [vmem:[%s3 + $0xd0] sm:$0xff] %v506
  %683 = vst [vmem:[%s3 + $0xd8] sm:$0xff] %v509
  %684 = vst [vmem:[%s3 + $0xe0] sm:$0xff] %v514
  %685 = vst [vmem:[%s3 + $0xe8] sm:$0xff] %v517
  %686 = vst [vmem:[%s3 + $0xf0] sm:$0xff] %v522
  %687 = vst [vmem:[%s3 + $0xf8] sm:$0xff] %v525
  %688 = vst [vmem:[%s3 + $0x100] sm:$0xff] %v530
  %689 = vst [vmem:[%s3 + $0x108] sm:$0xff] %v533
  %690 = vst [vmem:[%s3 + $0x110] sm:$0xff] %v538
  %691 = vst [vmem:[%s3 + $0x118] sm:$0xff] %v541
  %692 = vst [vmem:[%s3 + $0x120] sm:$0xff] %v546
  %693 = vst [vmem:[%s3 + $0x128] sm:$0xff] %v549
  %694 = vst [vmem:[%s3 + $0x130] sm:$0xff] %v554
  %695 = vst [vmem:[%s3 + $0x138] sm:$0xff] %v557
  %696 = vst [vmem:[%s3 + $0x140] sm:$0xff] %v562
  %697 = vst [vmem:[%s3 + $0x148] sm:$0xff] %v565
  %698 = vst [vmem:[%s3 + $0x150] sm:$0xff] %v570
  %699 = vst [vmem:[%s3 + $0x158] sm:$0xff] %v573
  %700 = vst [vmem:[%s3 + $0x160] sm:$0xff] %v578
  %701 = vst [vmem:[%s3 + $0x168] sm:$0xff] %v581
  %702 = vst [vmem:[%s3 + $0x170] sm:$0xff] %v586
  %703 = vst [vmem:[%s3 + $0x178] sm:$0xff] %v589
  %704 = vst [vmem:[%s3 + $0x180] sm:$0xff] %v594
  %705 = vst [vmem:[%s3 + $0x188] sm:$0xff] %v597
  %706 = vst [vmem:[%s3 + $0x190] sm:$0xff] %v602
  %707 = vst [vmem:[%s3 + $0x198] sm:$0xff] %v605
  %708 = vst [vmem:[%s3 + $0x1a0] sm:$0xff] %v610
  %709 = vst [vmem:[%s3 + $0x1a8] sm:$0xff] %v613
  %710 = vst [vmem:[%s3 + $0x1b0] sm:$0xff] %v618
  %711 = vst [vmem:[%s3 + $0x1b8] sm:$0xff] %v621
  %712 = vst [vmem:[%s3 + $0x1c0] sm:$0xff] %v626
  %713 = vst [vmem:[%s3 + $0x1c8] sm:$0xff] %v629
  %714 = vst [vmem:[%s3 + $0x1d0] sm:$0xff] %v634
  %715 = vst [vmem:[%s3 + $0x1d8] sm:$0xff] %v637
  %716 = vst [vmem:[%s3 + $0x1e0] sm:$0xff] %v642
  %717 = vst [vmem:[%s3 + $0x1e8] sm:$0xff] %v645
  %718 = vst [vmem:[%s3 + $0x1f0] sm:$0xff] %v650
  %719 = vst [vmem:[%s3 + $0x1f8] sm:$0xff] %v653
  // Predicated region
  $region14: #{deform_conv_v2_forward.2} parent=0 // pred_check
    _
  $region15: #{deform_conv_v2_forward.2} parent=0 // pred_check_branch
    %721 = sbr.rel (0) target = $region17
  $region16: #{deform_conv_v2_forward.2} parent=0 // pred_region
    _
  $region17: #{deform_conv_v2_forward.2} parent=0 // pred_fallthru
    _
  // Predicated region
  $region18: #{deform_conv_v2_forward.2} parent=0 // pred_check
    _
  $region19: #{deform_conv_v2_forward.2} parent=0 // pred_check_branch
    %723 = sbr.rel (0) target = $region21
  $region20: #{deform_conv_v2_forward.2} parent=0 // pred_region
    _
  $region21: #{deform_conv_v2_forward.2} parent=0 // pred_fallthru
    _

// kernel: tile.0
$region0: #{tile.0}
  %s0 = inlined_call_operand.vmem [shape: bf16[4,36,8], index: 0, kind: input, shape index: {}]
  %s1 = inlined_call_operand.vmem [shape: bf16[144,8], index: 1, kind: output, shape index: {}]
  $region1: #{tile.0} parent=0
    #allocation0 [shape = 'u8[8192]{0}', space=vmem, size = 0x2000, scoped, tag = 'scoped mem for output reshape']
    #allocation1 [shape = 'u8[32768]{0}', space=vmem, size = 0x8000, scoped, tag = 'scoped mem for input reshape']
    %s3 = smul.u32 2, 2
    %s4 = sshllo.u32 0, %s3
    %s5 = smul.addr 2, 7
    %s6 = scalar_lea.vmem %s0, %s5
    %s7 = sshrl.u32 %s4, 1
    %s8 = sor.u32 %s4, %s7
    %s9 = sand.u32 %s8, 85
    %s10 = sshrl.u32 %s9, 1
    %s11 = sor.u32 %s9, %s10
    %s12 = sand.u32 51, %s11
    %s13 = sshrl.u32 %s12, 2
    %s14 = sor.u32 %s12, %s13
    %s15 = sand.u32 15, %s14
    %v16 = vld [vmem:[%s6] sm:%s15]
    %v17 = vunpack.c.l.bf16 %v16
    %v18 = vunpack.c.h.bf16 %v16
    %s19 = scalar_lea.vmem [#allocation1], 56
    %20 = vst [vmem:[%s19] sm:%s4] %v17
    %s21 = smul.addr 2, 6
    %s22 = scalar_lea.vmem %s0, %s21
    %s23 = sshrl.u32 %s4, 1
    %s24 = sor.u32 %s4, %s23
    %s25 = sand.u32 %s24, 85
    %s26 = sshrl.u32 %s25, 1
    %s27 = sor.u32 %s25, %s26
    %s28 = sand.u32 51, %s27
    %s29 = sshrl.u32 %s28, 2
    %s30 = sor.u32 %s28, %s29
    %s31 = sand.u32 15, %s30
    %v32 = vld [vmem:[%s22] sm:%s31]
    %v33 = vunpack.c.l.bf16 %v32
    %v34 = vunpack.c.h.bf16 %v32
    %s35 = scalar_lea.vmem [#allocation1], 48
    %36 = vst [vmem:[%s35] sm:%s4] %v33
    %s37 = smul.addr 2, 5
    %s38 = scalar_lea.vmem %s0, %s37
    %s39 = sshrl.u32 %s4, 1
    %s40 = sor.u32 %s4, %s39
    %s41 = sand.u32 %s40, 85
    %s42 = sshrl.u32 %s41, 1
    %s43 = sor.u32 %s41, %s42
    %s44 = sand.u32 51, %s43
    %s45 = sshrl.u32 %s44, 2
    %s46 = sor.u32 %s44, %s45
    %s47 = sand.u32 15, %s46
    %v48 = vld [vmem:[%s38] sm:%s47]
    %v49 = vunpack.c.l.bf16 %v48
    %v50 = vunpack.c.h.bf16 %v48
    %s51 = scalar_lea.vmem [#allocation1], 40
    %52 = vst [vmem:[%s51] sm:%s4] %v49
    %s53 = smul.addr 2, 4
    %s54 = scalar_lea.vmem %s0, %s53
    %s55 = sshrl.u32 %s4, 1
    %s56 = sor.u32 %s4, %s55
    %s57 = sand.u32 %s56, 85
    %s58 = sshrl.u32 %s57, 1
    %s59 = sor.u32 %s57, %s58
    %s60 = sand.u32 51, %s59
    %s61 = sshrl.u32 %s60, 2
    %s62 = sor.u32 %s60, %s61
    %s63 = sand.u32 15, %s62
    %v64 = vld [vmem:[%s54] sm:%s63]
    %v65 = vunpack.c.l.bf16 %v64
    %v66 = vunpack.c.h.bf16 %v64
    %s67 = scalar_lea.vmem [#allocation1], 32
    %68 = vst [vmem:[%s67] sm:%s4] %v65
    %s69 = smul.addr 2, 3
    %s70 = scalar_lea.vmem %s0, %s69
    %s71 = sshrl.u32 %s4, 1
    %s72 = sor.u32 %s4, %s71
    %s73 = sand.u32 %s72, 85
    %s74 = sshrl.u32 %s73, 1
    %s75 = sor.u32 %s73, %s74
    %s76 = sand.u32 51, %s75
    %s77 = sshrl.u32 %s76, 2
    %s78 = sor.u32 %s76, %s77
    %s79 = sand.u32 15, %s78
    %v80 = vld [vmem:[%s70] sm:%s79]
    %v81 = vunpack.c.l.bf16 %v80
    %v82 = vunpack.c.h.bf16 %v80
    %s83 = scalar_lea.vmem [#allocation1], 24
    %84 = vst [vmem:[%s83] sm:%s4] %v81
    %s85 = smul.addr 2, 2
    %s86 = scalar_lea.vmem %s0, %s85
    %s87 = sshrl.u32 %s4, 1
    %s88 = sor.u32 %s4, %s87
    %s89 = sand.u32 %s88, 85
    %s90 = sshrl.u32 %s89, 1
    %s91 = sor.u32 %s89, %s90
    %s92 = sand.u32 51, %s91
    %s93 = sshrl.u32 %s92, 2
    %s94 = sor.u32 %s92, %s93
    %s95 = sand.u32 15, %s94
    %v96 = vld [vmem:[%s86] sm:%s95]
    %v97 = vunpack.c.l.bf16 %v96
    %v98 = vunpack.c.h.bf16 %v96
    %s99 = scalar_lea.vmem [#allocation1], 16
    %100 = vst [vmem:[%s99] sm:%s4] %v97
    %s101 = scalar_lea.vmem %s0, 2
    %s102 = sshrl.u32 %s4, 1
    %s103 = sor.u32 %s4, %s102
    %s104 = sand.u32 %s103, 85
    %s105 = sshrl.u32 %s104, 1
    %s106 = sor.u32 %s104, %s105
    %s107 = sand.u32 51, %s106
    %s108 = sshrl.u32 %s107, 2
    %s109 = sor.u32 %s107, %s108
    %s110 = sand.u32 15, %s109
    %v111 = vld [vmem:[%s101] sm:%s110]
    %v112 = vunpack.c.l.bf16 %v111
    %v113 = vunpack.c.h.bf16 %v111
    %s114 = scalar_lea.vmem [#allocation1], 8
    %115 = vst [vmem:[%s114] sm:%s4] %v112
    %s116 = sshrl.u32 %s4, 1
    %s117 = sor.u32 %s4, %s116
    %s118 = sand.u32 %s117, 85
    %s119 = sshrl.u32 %s118, 1
    %s120 = sor.u32 %s118, %s119
    %s121 = sand.u32 51, %s120
    %s122 = sshrl.u32 %s121, 2
    %s123 = sor.u32 %s121, %s122
    %s124 = sand.u32 15, %s123
    %v125 = vld [vmem:[%s0] sm:%s124]
    %v126 = vunpack.c.l.bf16 %v125
    %v127 = vunpack.c.h.bf16 %v125
    %128 = vst [vmem:[#allocation1] sm:%s4] %v126
    %v129 = vld [vmem:[#allocation1] ss:$8 sm:$0xf]
    %v130 = vld [vmem:[#allocation1] ss:$8 sm:$0xf0]
    %vm131 = vcmask 1047556
    %v132 = vsel %vm131, %v130, %v129
    %vm133 = vcmask 293888
    %134 = vst.msk [vmem:[#allocation0] sm:$0xff] %vm133, %v132
    %s135 = scalar_lea.vmem [#allocation1], 3
    %v136 = vld [vmem:[%s135] ss:$8 sm:$0xf]
    %s137 = scalar_lea.vmem [#allocation1], 3
    %v138 = vld [vmem:[%s137] ss:$8 sm:$0xf0]
    %vm139 = vcmask 1047556
    %v140 = vsel %vm139, %v138, %v136
    %s141 = scalar_lea.vmem [#allocation1], 3
    %v142 = vld [vmem:[%s141] ss:$8 sm:$0xf]
    %s143 = scalar_lea.vmem [#allocation1], 3
    %v144 = vld [vmem:[%s143] ss:$8 sm:$0xf0]
    %vm145 = vcmask 1047556
    %v146 = vsel %vm145, %v144, %v142
    %vm147 = vcmask 162816
    %v148 = vsel %vm147, %v146, %v140
    %149 = vrot.lane.b32.xlu0 %v148, 108
    %v150 = vpop.permute.xlu0 %149
    %vm151 = vcmask 130048
    %s152 = scalar_lea.vmem [#allocation0], 8
    %153 = vst.msk [vmem:[%s152] sm:$0xff] %vm151, %v150
    %vm154 = vcmask 1048416
    %155 = vst.msk [vmem:[#allocation0] sm:$0xff] %vm154, %v150
    %s156 = scalar_lea.vmem [#allocation1], 2
    %v157 = vld [vmem:[%s156] ss:$8 sm:$0xf]
    %s158 = scalar_lea.vmem [#allocation1], 2
    %v159 = vld [vmem:[%s158] ss:$8 sm:$0xf0]
    %vm160 = vcmask 1047556
    %v161 = vsel %vm160, %v159, %v157
    %162 = vrot.lane.b32.xlu0 %v161, 72
    %v163 = vpop.permute.xlu0 %162
    %vm164 = vcmask 884288
    %165 = vst.msk [vmem:[#allocation0] sm:$0xff] %vm164, %v163
    %s166 = scalar_lea.vmem [#allocation1], 1
    %v167 = vld [vmem:[%s166] ss:$8 sm:$0xf]
    %s168 = scalar_lea.vmem [#allocation1], 1
    %v169 = vld [vmem:[%s168] ss:$8 sm:$0xf0]
    %vm170 = vcmask 1047556
    %v171 = vsel %vm170, %v169, %v167
    %172 = vrot.lane.b32.xlu0 %v171, 36
    %v173 = vpop.permute.xlu0 %172
    %vm174 = vcmask 589088
    %175 = vst.msk [vmem:[#allocation0] sm:$0xff] %vm174, %v173
    %s177 = smul.u32 4, 2
    %s178 = sshllo.u32 0, %s177
    %s179 = sshrl.u32 %s177, 1
    %v180 = vld [vmem:[#allocation0] sm:%s178]
    %v181 = vpack.c.bf16 0.0, %v180
    %s182 = sshllo.u32 0, %s179
    %183 = vst [vmem:[%s1] sm:%s182] %v181
    %s184 = scalar_lea.vmem [#allocation0], 8
    %v185 = vld [vmem:[%s184] sm:%s178]
    %v186 = vpack.c.bf16 0.0, %v185
    %s187 = sshllo.u32 0, %s179
    %s188 = scalar_lea.vmem %s1, 4
    %189 = vst [vmem:[%s188] sm:%s187] %v186

// kernel: deform_conv_v2_forward.3
$region0: #{deform_conv_v2_forward.3}
  #allocation0 [shape = 'u32[]', space=smem, size = 0x4, offset = 0x4, fixed_abs, tag = 'smem constant byte address 0x4 - core index']
  #allocation1 [shape = 'u32[144,128]{1,0:T(1,128)}', space=vmem, size = 0x12000, scoped, tag = 'internal scratch']
  %s0 = inlined_call_operand.vmem [shape: bf16[512,144], index: 0, kind: input, shape index: {}]
  %s1 = inlined_call_operand.vmem [shape: f32[512,36], index: 1, kind: input, shape index: {}]
  %s2 = inlined_call_operand.vmem [shape: f32[512,9], index: 2, kind: input, shape index: {}]
  %s3 = inlined_call_operand.vmem [shape: f32[36,144], index: 3, kind: input, shape index: {}]
  %s4 = inlined_call_operand.vmem [shape: f32[9,144], index: 4, kind: input, shape index: {}]
  %s5 = inlined_call_operand.vmem [shape: bf16[144,128], index: 5, kind: input, shape index: {}]
  %s6 = inlined_call_operand.vmem [shape: f32[1,128], index: 6, kind: input, shape index: {}]
  %s7 = inlined_call_operand.vmem [shape: f32[512,128], index: 7, kind: output, shape index: {}]
  %s8 = sld [smem:[#allocation0]]
  $region38: #{deform_conv_v2_forward.3} parent=0
    _
  %s10 = ssub.s32 1, %s8
  %s11 = scalar_select 0, %s10, %s8
  // Predicated region
  $region2: #{deform_conv_v2_forward.3} parent=0 // pred_check
    _
  $region3: #{deform_conv_v2_forward.3} parent=0 // pred_check_branch
    %13 = sbr.rel (0) target = $region5
  $region4: #{deform_conv_v2_forward.3} parent=0 // pred_region
    _
  $region5: #{deform_conv_v2_forward.3} parent=0 // pred_fallthru
    _
  // Predicated region
  $region6: #{deform_conv_v2_forward.3} parent=0 // pred_check
    _
  $region7: #{deform_conv_v2_forward.3} parent=0 // pred_check_branch
    %15 = sbr.rel (0) target = $region9
  $region8: #{deform_conv_v2_forward.3} parent=0 // pred_region
    _
  $region9: #{deform_conv_v2_forward.3} parent=0 // pred_fallthru
    _
  // Predicated region
  $region10: #{deform_conv_v2_forward.3} parent=0 // pred_check
    _
  $region11: #{deform_conv_v2_forward.3} parent=0 // pred_check_branch
    %17 = sbr.rel (0) target = $region13
  $region12: #{deform_conv_v2_forward.3} parent=0 // pred_region
    _
  $region13: #{deform_conv_v2_forward.3} parent=0 // pred_fallthru
    _
  // Predicated region
  $region14: #{deform_conv_v2_forward.3} parent=0 // pred_check
    _
  $region15: #{deform_conv_v2_forward.3} parent=0 // pred_check_branch
    %19 = sbr.rel (0) target = $region17
  $region16: #{deform_conv_v2_forward.3} parent=0 // pred_region
    _
  $region17: #{deform_conv_v2_forward.3} parent=0 // pred_fallthru
    _
  // Predicated region
  $region18: #{deform_conv_v2_forward.3} parent=0 // pred_check
    _
  $region19: #{deform_conv_v2_forward.3} parent=0 // pred_check_branch
    %21 = sbr.rel (0) target = $region21
  $region20: #{deform_conv_v2_forward.3} parent=0 // pred_region
    _
  $region21: #{deform_conv_v2_forward.3} parent=0 // pred_fallthru
    _
  // Predicated region
  $region22: #{deform_conv_v2_forward.3} parent=0 // pred_check
    _
  $region23: #{deform_conv_v2_forward.3} parent=0 // pred_check_branch
    %23 = sbr.rel (0) target = $region25
  $region24: #{deform_conv_v2_forward.3} parent=0 // pred_region
    _
  $region25: #{deform_conv_v2_forward.3} parent=0 // pred_fallthru
    _
  // Predicated region
  $region26: #{deform_conv_v2_forward.3} parent=0 // pred_check
    _
  $region27: #{deform_conv_v2_forward.3} parent=0 // pred_check_branch
    %25 = sbr.rel (0) target = $region29
  $region28: #{deform_conv_v2_forward.3} parent=0 // pred_region
    _
  $region29: #{deform_conv_v2_forward.3} parent=0 // pred_fallthru
    _
  %v27 = vld [vmem:[%s2] sm:$0xff]
  %v28 = vld [vmem:[%s2 + $0x8] sm:$0xff]
  %v29 = vld [vmem:[%s2 + $0x10] sm:$0xff]
  %v30 = vld [vmem:[%s2 + $0x18] sm:$0xff]
  %v31 = vld [vmem:[%s2 + $0x20] sm:$0xff]
  %v32 = vld [vmem:[%s2 + $0x28] sm:$0xff]
  %v33 = vld [vmem:[%s2 + $0x30] sm:$0xff]
  %v34 = vld [vmem:[%s2 + $0x38] sm:$0xff]
  %v35 = vld [vmem:[%s2 + $0x40] sm:$0xff]
  %v36 = vld [vmem:[%s2 + $0x48] sm:$0xff]
  %v37 = vld [vmem:[%s2 + $0x50] sm:$0xff]
  %v38 = vld [vmem:[%s2 + $0x58] sm:$0xff]
  %v39 = vld [vmem:[%s2 + $0x60] sm:$0xff]
  %v40 = vld [vmem:[%s2 + $0x68] sm:$0xff]
  %v41 = vld [vmem:[%s2 + $0x70] sm:$0xff]
  %v42 = vld [vmem:[%s2 + $0x78] sm:$0xff]
  %v43 = vld [vmem:[%s2 + $0x80] sm:$0xff]
  %v44 = vld [vmem:[%s2 + $0x88] sm:$0xff]
  %v45 = vld [vmem:[%s2 + $0x90] sm:$0xff]
  %v46 = vld [vmem:[%s2 + $0x98] sm:$0xff]
  %v47 = vld [vmem:[%s2 + $0xa0] sm:$0xff]
  %v48 = vld [vmem:[%s2 + $0xa8] sm:$0xff]
  %v49 = vld [vmem:[%s2 + $0xb0] sm:$0xff]
  %v50 = vld [vmem:[%s2 + $0xb8] sm:$0xff]
  %v51 = vld [vmem:[%s2 + $0xc0] sm:$0xff]
  %v52 = vld [vmem:[%s2 + $0xc8] sm:$0xff]
  %v53 = vld [vmem:[%s2 + $0xd0] sm:$0xff]
  %v54 = vld [vmem:[%s2 + $0xd8] sm:$0xff]
  %v55 = vld [vmem:[%s2 + $0xe0] sm:$0xff]
  %v56 = vld [vmem:[%s2 + $0xe8] sm:$0xff]
  %v57 = vld [vmem:[%s2 + $0xf0] sm:$0xff]
  %v58 = vld [vmem:[%s2 + $0xf8] sm:$0xff]
  %v59 = vld [vmem:[%s2 + $0x100] sm:$0xff]
  %v60 = vld [vmem:[%s2 + $0x108] sm:$0xff]
  %v61 = vld [vmem:[%s2 + $0x110] sm:$0xff]
  %v62 = vld [vmem:[%s2 + $0x118] sm:$0xff]
  %v63 = vld [vmem:[%s2 + $0x120] sm:$0xff]
  %v64 = vld [vmem:[%s2 + $0x128] sm:$0xff]
  %v65 = vld [vmem:[%s2 + $0x130] sm:$0xff]
  %v66 = vld [vmem:[%s2 + $0x138] sm:$0xff]
  %v67 = vld [vmem:[%s2 + $0x140] sm:$0xff]
  %v68 = vld [vmem:[%s2 + $0x148] sm:$0xff]
  %v69 = vld [vmem:[%s2 + $0x150] sm:$0xff]
  %v70 = vld [vmem:[%s2 + $0x158] sm:$0xff]
  %v71 = vld [vmem:[%s2 + $0x160] sm:$0xff]
  %v72 = vld [vmem:[%s2 + $0x168] sm:$0xff]
  %v73 = vld [vmem:[%s2 + $0x170] sm:$0xff]
  %v74 = vld [vmem:[%s2 + $0x178] sm:$0xff]
  %v75 = vld [vmem:[%s2 + $0x180] sm:$0xff]
  %v76 = vld [vmem:[%s2 + $0x188] sm:$0xff]
  %v77 = vld [vmem:[%s2 + $0x190] sm:$0xff]
  %v78 = vld [vmem:[%s2 + $0x198] sm:$0xff]
  %v79 = vld [vmem:[%s2 + $0x1a0] sm:$0xff]
  %v80 = vld [vmem:[%s2 + $0x1a8] sm:$0xff]
  %v81 = vld [vmem:[%s2 + $0x1b0] sm:$0xff]
  %v82 = vld [vmem:[%s2 + $0x1b8] sm:$0xff]
  %v83 = vld [vmem:[%s2 + $0x1c0] sm:$0xff]
  %v84 = vld [vmem:[%s2 + $0x1c8] sm:$0xff]
  %v85 = vld [vmem:[%s2 + $0x1d0] sm:$0xff]
  %v86 = vld [vmem:[%s2 + $0x1d8] sm:$0xff]
  %v87 = vld [vmem:[%s2 + $0x1e0] sm:$0xff]
  %v88 = vld [vmem:[%s2 + $0x1e8] sm:$0xff]
  %v89 = vld [vmem:[%s2 + $0x1f0] sm:$0xff]
  %v90 = vld [vmem:[%s2 + $0x1f8] sm:$0xff]
  %v91 = vsub.f32 0.0, %v27
  %v92 = vsub.f32 0.0, %v28
  %v93 = vsub.f32 0.0, %v29
  %v94 = vsub.f32 0.0, %v30
  %v95 = vsub.f32 0.0, %v31
  %v96 = vsub.f32 0.0, %v32
  %v97 = vsub.f32 0.0, %v33
  %v98 = vsub.f32 0.0, %v34
  %v99 = vsub.f32 0.0, %v35
  %v100 = vsub.f32 0.0, %v36
  %v101 = vsub.f32 0.0, %v37
  %v102 = vsub.f32 0.0, %v38
  %v103 = vsub.f32 0.0, %v39
  %v104 = vsub.f32 0.0, %v40
  %v105 = vsub.f32 0.0, %v41
  %v106 = vsub.f32 0.0, %v42
  %v107 = vsub.f32 0.0, %v43
  %v108 = vsub.f32 0.0, %v44
  %v109 = vsub.f32 0.0, %v45
  %v110 = vsub.f32 0.0, %v46
  %v111 = vsub.f32 0.0, %v47
  %v112 = vsub.f32 0.0, %v48
  %v113 = vsub.f32 0.0, %v49
  %v114 = vsub.f32 0.0, %v50
  %v115 = vsub.f32 0.0, %v51
  %v116 = vsub.f32 0.0, %v52
  %v117 = vsub.f32 0.0, %v53
  %v118 = vsub.f32 0.0, %v54
  %v119 = vsub.f32 0.0, %v55
  %v120 = vsub.f32 0.0, %v56
  %v121 = vsub.f32 0.0, %v57
  %v122 = vsub.f32 0.0, %v58
  %v123 = vsub.f32 0.0, %v59
  %v124 = vsub.f32 0.0, %v60
  %v125 = vsub.f32 0.0, %v61
  %v126 = vsub.f32 0.0, %v62
  %v127 = vsub.f32 0.0, %v63
  %v128 = vsub.f32 0.0, %v64
  %v129 = vsub.f32 0.0, %v65
  %v130 = vsub.f32 0.0, %v66
  %v131 = vsub.f32 0.0, %v67
  %v132 = vsub.f32 0.0, %v68
  %v133 = vsub.f32 0.0, %v69
  %v134 = vsub.f32 0.0, %v70
  %v135 = vsub.f32 0.0, %v71
  %v136 = vsub.f32 0.0, %v72
  %v137 = vsub.f32 0.0, %v73
  %v138 = vsub.f32 0.0, %v74
  %v139 = vsub.f32 0.0, %v75
  %v140 = vsub.f32 0.0, %v76
  %v141 = vsub.f32 0.0, %v77
  %v142 = vsub.f32 0.0, %v78
  %v143 = vsub.f32 0.0, %v79
  %v144 = vsub.f32 0.0, %v80
  %v145 = vsub.f32 0.0, %v81
  %v146 = vsub.f32 0.0, %v82
  %v147 = vsub.f32 0.0, %v83
  %v148 = vsub.f32 0.0, %v84
  %v149 = vsub.f32 0.0, %v85
  %v150 = vsub.f32 0.0, %v86
  %v151 = vsub.f32 0.0, %v87
  %v152 = vsub.f32 0.0, %v88
  %v153 = vsub.f32 0.0, %v89
  %v154 = vsub.f32 0.0, %v90
  %v155 = vmul.f32 %v91, 1.442695
  %v156 = vpow.pop %v155
  %v157 = vmul.f32 %v92, 1.442695
  %v158 = vpow.pop %v157
  %v159 = vmul.f32 %v93, 1.442695
  %v160 = vpow.pop %v159
  %v161 = vmul.f32 %v94, 1.442695
  %v162 = vpow.pop %v161
  %v163 = vmul.f32 %v95, 1.442695
  %v164 = vpow.pop %v163
  %v165 = vmul.f32 %v96, 1.442695
  %v166 = vpow.pop %v165
  %v167 = vmul.f32 %v97, 1.442695
  %v168 = vpow.pop %v167
  %v169 = vmul.f32 %v98, 1.442695
  %v170 = vpow.pop %v169
  %v171 = vmul.f32 %v99, 1.442695
  %v172 = vpow.pop %v171
  %v173 = vmul.f32 %v100, 1.442695
  %v174 = vpow.pop %v173
  %v175 = vmul.f32 %v101, 1.442695
  %v176 = vpow.pop %v175
  %v177 = vmul.f32 %v102, 1.442695
  %v178 = vpow.pop %v177
  %v179 = vmul.f32 %v103, 1.442695
  %v180 = vpow.pop %v179
  %v181 = vmul.f32 %v104, 1.442695
  %v182 = vpow.pop %v181
  %v183 = vmul.f32 %v105, 1.442695
  %v184 = vpow.pop %v183
  %v185 = vmul.f32 %v106, 1.442695
  %v186 = vpow.pop %v185
  %v187 = vmul.f32 %v107, 1.442695
  %v188 = vpow.pop %v187
  %v189 = vmul.f32 %v108, 1.442695
  %v190 = vpow.pop %v189
  %v191 = vmul.f32 %v109, 1.442695
  %v192 = vpow.pop %v191
  %v193 = vmul.f32 %v110, 1.442695
  %v194 = vpow.pop %v193
  %v195 = vmul.f32 %v111, 1.442695
  %v196 = vpow.pop %v195
  %v197 = vmul.f32 %v112, 1.442695
  %v198 = vpow.pop %v197
  %v199 = vmul.f32 %v113, 1.442695
  %v200 = vpow.pop %v199
  %v201 = vmul.f32 %v114, 1.442695
  %v202 = vpow.pop %v201
  %v203 = vmul.f32 %v115, 1.442695
  %v204 = vpow.pop %v203
  %v205 = vmul.f32 %v116, 1.442695
  %v206 = vpow.pop %v205
  %v207 = vmul.f32 %v117, 1.442695
  %v208 = vpow.pop %v207
  %v209 = vmul.f32 %v118, 1.442695
  %v210 = vpow.pop %v209
  %v211 = vmul.f32 %v119, 1.442695
  %v212 = vpow.pop %v211
  %v213 = vmul.f32 %v120, 1.442695
  %v214 = vpow.pop %v213
  %v215 = vmul.f32 %v121, 1.442695
  %v216 = vpow.pop %v215
  %v217 = vmul.f32 %v122, 1.442695
  %v218 = vpow.pop %v217
  %v219 = vmul.f32 %v123, 1.442695
  %v220 = vpow.pop %v219
  %v221 = vmul.f32 %v124, 1.442695
  %v222 = vpow.pop %v221
  %v223 = vmul.f32 %v125, 1.442695
  %v224 = vpow.pop %v223
  %v225 = vmul.f32 %v126, 1.442695
  %v226 = vpow.pop %v225
  %v227 = vmul.f32 %v127, 1.442695
  %v228 = vpow.pop %v227
  %v229 = vmul.f32 %v128, 1.442695
  %v230 = vpow.pop %v229
  %v231 = vmul.f32 %v129, 1.442695
  %v232 = vpow.pop %v231
  %v233 = vmul.f32 %v130, 1.442695
  %v234 = vpow.pop %v233
  %v235 = vmul.f32 %v131, 1.442695
  %v236 = vpow.pop %v235
  %v237 = vmul.f32 %v132, 1.442695
  %v238 = vpow.pop %v237
  %v239 = vmul.f32 %v133, 1.442695
  %v240 = vpow.pop %v239
  %v241 = vmul.f32 %v134, 1.442695
  %v242 = vpow.pop %v241
  %v243 = vmul.f32 %v135, 1.442695
  %v244 = vpow.pop %v243
  %v245 = vmul.f32 %v136, 1.442695
  %v246 = vpow.pop %v245
  %v247 = vmul.f32 %v137, 1.442695
  %v248 = vpow.pop %v247
  %v249 = vmul.f32 %v138, 1.442695
  %v250 = vpow.pop %v249
  %v251 = vmul.f32 %v139, 1.442695
  %v252 = vpow.pop %v251
  %v253 = vmul.f32 %v140, 1.442695
  %v254 = vpow.pop %v253
  %v255 = vmul.f32 %v141, 1.442695
  %v256 = vpow.pop %v255
  %v257 = vmul.f32 %v142, 1.442695
  %v258 = vpow.pop %v257
  %v259 = vmul.f32 %v143, 1.442695
  %v260 = vpow.pop %v259
  %v261 = vmul.f32 %v144, 1.442695
  %v262 = vpow.pop %v261
  %v263 = vmul.f32 %v145, 1.442695
  %v264 = vpow.pop %v263
  %v265 = vmul.f32 %v146, 1.442695
  %v266 = vpow.pop %v265
  %v267 = vmul.f32 %v147, 1.442695
  %v268 = vpow.pop %v267
  %v269 = vmul.f32 %v148, 1.442695
  %v270 = vpow.pop %v269
  %v271 = vmul.f32 %v149, 1.442695
  %v272 = vpow.pop %v271
  %v273 = vmul.f32 %v150, 1.442695
  %v274 = vpow.pop %v273
  %v275 = vmul.f32 %v151, 1.442695
  %v276 = vpow.pop %v275
  %v277 = vmul.f32 %v152, 1.442695
  %v278 = vpow.pop %v277
  %v279 = vmul.f32 %v153, 1.442695
  %v280 = vpow.pop %v279
  %v281 = vmul.f32 %v154, 1.442695
  %v282 = vpow.pop %v281
  %v283 = vadd.f32 %v156, 1.0
  %v284 = vadd.f32 %v158, 1.0
  %v285 = vadd.f32 %v160, 1.0
  %v286 = vadd.f32 %v162, 1.0
  %v287 = vadd.f32 %v164, 1.0
  %v288 = vadd.f32 %v166, 1.0
  %v289 = vadd.f32 %v168, 1.0
  %v290 = vadd.f32 %v170, 1.0
  %v291 = vadd.f32 %v172, 1.0
  %v292 = vadd.f32 %v174, 1.0
  %v293 = vadd.f32 %v176, 1.0
  %v294 = vadd.f32 %v178, 1.0
  %v295 = vadd.f32 %v180, 1.0
  %v296 = vadd.f32 %v182, 1.0
  %v297 = vadd.f32 %v184, 1.0
  %v298 = vadd.f32 %v186, 1.0
  %v299 = vadd.f32 %v188, 1.0
  %v300 = vadd.f32 %v190, 1.0
  %v301 = vadd.f32 %v192, 1.0
  %v302 = vadd.f32 %v194, 1.0
  %v303 = vadd.f32 %v196, 1.0
  %v304 = vadd.f32 %v198, 1.0
  %v305 = vadd.f32 %v200, 1.0
  %v306 = vadd.f32 %v202, 1.0
  %v307 = vadd.f32 %v204, 1.0
  %v308 = vadd.f32 %v206, 1.0
  %v309 = vadd.f32 %v208, 1.0
  %v310 = vadd.f32 %v210, 1.0
  %v311 = vadd.f32 %v212, 1.0
  %v312 = vadd.f32 %v214, 1.0
  %v313 = vadd.f32 %v216, 1.0
  %v314 = vadd.f32 %v218, 1.0
  %v315 = vadd.f32 %v220, 1.0
  %v316 = vadd.f32 %v222, 1.0
  %v317 = vadd.f32 %v224, 1.0
  %v318 = vadd.f32 %v226, 1.0
  %v319 = vadd.f32 %v228, 1.0
  %v320 = vadd.f32 %v230, 1.0
  %v321 = vadd.f32 %v232, 1.0
  %v322 = vadd.f32 %v234, 1.0
  %v323 = vadd.f32 %v236, 1.0
  %v324 = vadd.f32 %v238, 1.0
  %v325 = vadd.f32 %v240, 1.0
  %v326 = vadd.f32 %v242, 1.0
  %v327 = vadd.f32 %v244, 1.0
  %v328 = vadd.f32 %v246, 1.0
  %v329 = vadd.f32 %v248, 1.0
  %v330 = vadd.f32 %v250, 1.0
  %v331 = vadd.f32 %v252, 1.0
  %v332 = vadd.f32 %v254, 1.0
  %v333 = vadd.f32 %v256, 1.0
  %v334 = vadd.f32 %v258, 1.0
  %v335 = vadd.f32 %v260, 1.0
  %v336 = vadd.f32 %v262, 1.0
  %v337 = vadd.f32 %v264, 1.0
  %v338 = vadd.f32 %v266, 1.0
  %v339 = vadd.f32 %v268, 1.0
  %v340 = vadd.f32 %v270, 1.0
  %v341 = vadd.f32 %v272, 1.0
  %v342 = vadd.f32 %v274, 1.0
  %v343 = vadd.f32 %v276, 1.0
  %v344 = vadd.f32 %v278, 1.0
  %v345 = vadd.f32 %v280, 1.0
  %v346 = vadd.f32 %v282, 1.0
  %v347 = vrcp.pop %v283
  %v348 = vmul.f32 1.0, %v347
  %v349 = vrcp.pop %v284
  %v350 = vmul.f32 1.0, %v349
  %v351 = vrcp.pop %v285
  %v352 = vmul.f32 1.0, %v351
  %v353 = vrcp.pop %v286
  %v354 = vmul.f32 1.0, %v353
  %v355 = vrcp.pop %v287
  %v356 = vmul.f32 1.0, %v355
  %v357 = vrcp.pop %v288
  %v358 = vmul.f32 1.0, %v357
  %v359 = vrcp.pop %v289
  %v360 = vmul.f32 1.0, %v359
  %v361 = vrcp.pop %v290
  %v362 = vmul.f32 1.0, %v361
  %v363 = vrcp.pop %v291
  %v364 = vmul.f32 1.0, %v363
  %v365 = vrcp.pop %v292
  %v366 = vmul.f32 1.0, %v365
  %v367 = vrcp.pop %v293
  %v368 = vmul.f32 1.0, %v367
  %v369 = vrcp.pop %v294
  %v370 = vmul.f32 1.0, %v369
  %v371 = vrcp.pop %v295
  %v372 = vmul.f32 1.0, %v371
  %v373 = vrcp.pop %v296
  %v374 = vmul.f32 1.0, %v373
  %v375 = vrcp.pop %v297
  %v376 = vmul.f32 1.0, %v375
  %v377 = vrcp.pop %v298
  %v378 = vmul.f32 1.0, %v377
  %v379 = vrcp.pop %v299
  %v380 = vmul.f32 1.0, %v379
  %v381 = vrcp.pop %v300
  %v382 = vmul.f32 1.0, %v381
  %v383 = vrcp.pop %v301
  %v384 = vmul.f32 1.0, %v383
  %v385 = vrcp.pop %v302
  %v386 = vmul.f32 1.0, %v385
  %v387 = vrcp.pop %v303
  %v388 = vmul.f32 1.0, %v387
  %v389 = vrcp.pop %v304
  %v390 = vmul.f32 1.0, %v389
  %v391 = vrcp.pop %v305
  %v392 = vmul.f32 1.0, %v391
  %v393 = vrcp.pop %v306
  %v394 = vmul.f32 1.0, %v393
  %v395 = vrcp.pop %v307
  %v396 = vmul.f32 1.0, %v395
  %v397 = vrcp.pop %v308
  %v398 = vmul.f32 1.0, %v397
  %v399 = vrcp.pop %v309
  %v400 = vmul.f32 1.0, %v399
  %v401 = vrcp.pop %v310
  %v402 = vmul.f32 1.0, %v401
  %v403 = vrcp.pop %v311
  %v404 = vmul.f32 1.0, %v403
  %v405 = vrcp.pop %v312
  %v406 = vmul.f32 1.0, %v405
  %v407 = vrcp.pop %v313
  %v408 = vmul.f32 1.0, %v407
  %v409 = vrcp.pop %v314
  %v410 = vmul.f32 1.0, %v409
  %v411 = vrcp.pop %v315
  %v412 = vmul.f32 1.0, %v411
  %v413 = vrcp.pop %v316
  %v414 = vmul.f32 1.0, %v413
  %v415 = vrcp.pop %v317
  %v416 = vmul.f32 1.0, %v415
  %v417 = vrcp.pop %v318
  %v418 = vmul.f32 1.0, %v417
  %v419 = vrcp.pop %v319
  %v420 = vmul.f32 1.0, %v419
  %v421 = vrcp.pop %v320
  %v422 = vmul.f32 1.0, %v421
  %v423 = vrcp.pop %v321
  %v424 = vmul.f32 1.0, %v423
  %v425 = vrcp.pop %v322
  %v426 = vmul.f32 1.0, %v425
  %v427 = vrcp.pop %v323
  %v428 = vmul.f32 1.0, %v427
  %v429 = vrcp.pop %v324
  %v430 = vmul.f32 1.0, %v429
  %v431 = vrcp.pop %v325
  %v432 = vmul.f32 1.0, %v431
  %v433 = vrcp.pop %v326
  %v434 = vmul.f32 1.0, %v433
  %v435 = vrcp.pop %v327
  %v436 = vmul.f32 1.0, %v435
  %v437 = vrcp.pop %v328
  %v438 = vmul.f32 1.0, %v437
  %v439 = vrcp.pop %v329
  %v440 = vmul.f32 1.0, %v439
  %v441 = vrcp.pop %v330
  %v442 = vmul.f32 1.0, %v441
  %v443 = vrcp.pop %v331
  %v444 = vmul.f32 1.0, %v443
  %v445 = vrcp.pop %v332
  %v446 = vmul.f32 1.0, %v445
  %v447 = vrcp.pop %v333
  %v448 = vmul.f32 1.0, %v447
  %v449 = vrcp.pop %v334
  %v450 = vmul.f32 1.0, %v449
  %v451 = vrcp.pop %v335
  %v452 = vmul.f32 1.0, %v451
  %v453 = vrcp.pop %v336
  %v454 = vmul.f32 1.0, %v453
  %v455 = vrcp.pop %v337
  %v456 = vmul.f32 1.0, %v455
  %v457 = vrcp.pop %v338
  %v458 = vmul.f32 1.0, %v457
  %v459 = vrcp.pop %v339
  %v460 = vmul.f32 1.0, %v459
  %v461 = vrcp.pop %v340
  %v462 = vmul.f32 1.0, %v461
  %v463 = vrcp.pop %v341
  %v464 = vmul.f32 1.0, %v463
  %v465 = vrcp.pop %v342
  %v466 = vmul.f32 1.0, %v465
  %v467 = vrcp.pop %v343
  %v468 = vmul.f32 1.0, %v467
  %v469 = vrcp.pop %v344
  %v470 = vmul.f32 1.0, %v469
  %v471 = vrcp.pop %v345
  %v472 = vmul.f32 1.0, %v471
  %v473 = vrcp.pop %v346
  %v474 = vmul.f32 1.0, %v473
  %v475 = vld [vmem:[%s1] sm:$0xff]
  %v476 = vld [vmem:[%s1 + $0x8] sm:$0xff]
  %v477 = vld [vmem:[%s1 + $0x10] sm:$0xff]
  %v478 = vld [vmem:[%s1 + $0x18] sm:$0xff]
  %v479 = vld [vmem:[%s1 + $0x20] sm:$0xff]
  %v480 = vld [vmem:[%s1 + $0x28] sm:$0xff]
  %v481 = vld [vmem:[%s1 + $0x30] sm:$0xff]
  %v482 = vld [vmem:[%s1 + $0x38] sm:$0xff]
  %v483 = vld [vmem:[%s1 + $0x40] sm:$0xff]
  %v484 = vld [vmem:[%s1 + $0x48] sm:$0xff]
  %v485 = vld [vmem:[%s1 + $0x50] sm:$0xff]
  %v486 = vld [vmem:[%s1 + $0x58] sm:$0xff]
  %v487 = vld [vmem:[%s1 + $0x60] sm:$0xff]
  %v488 = vld [vmem:[%s1 + $0x68] sm:$0xff]
  %v489 = vld [vmem:[%s1 + $0x70] sm:$0xff]
  %v490 = vld [vmem:[%s1 + $0x78] sm:$0xff]
  %v491 = vld [vmem:[%s1 + $0x80] sm:$0xff]
  %v492 = vld [vmem:[%s1 + $0x88] sm:$0xff]
  %v493 = vld [vmem:[%s1 + $0x90] sm:$0xff]
  %v494 = vld [vmem:[%s1 + $0x98] sm:$0xff]
  %v495 = vld [vmem:[%s1 + $0xa0] sm:$0xff]
  %v496 = vld [vmem:[%s1 + $0xa8] sm:$0xff]
  %v497 = vld [vmem:[%s1 + $0xb0] sm:$0xff]
  %v498 = vld [vmem:[%s1 + $0xb8] sm:$0xff]
  %v499 = vld [vmem:[%s1 + $0xc0] sm:$0xff]
  %v500 = vld [vmem:[%s1 + $0xc8] sm:$0xff]
  %v501 = vld [vmem:[%s1 + $0xd0] sm:$0xff]
  %v502 = vld [vmem:[%s1 + $0xd8] sm:$0xff]
  %v503 = vld [vmem:[%s1 + $0xe0] sm:$0xff]
  %v504 = vld [vmem:[%s1 + $0xe8] sm:$0xff]
  %v505 = vld [vmem:[%s1 + $0xf0] sm:$0xff]
  %v506 = vld [vmem:[%s1 + $0xf8] sm:$0xff]
  %v507 = vld [vmem:[%s1 + $0x100] sm:$0xff]
  %v508 = vld [vmem:[%s1 + $0x108] sm:$0xff]
  %v509 = vld [vmem:[%s1 + $0x110] sm:$0xff]
  %v510 = vld [vmem:[%s1 + $0x118] sm:$0xff]
  %v511 = vld [vmem:[%s1 + $0x120] sm:$0xff]
  %v512 = vld [vmem:[%s1 + $0x128] sm:$0xff]
  %v513 = vld [vmem:[%s1 + $0x130] sm:$0xff]
  %v514 = vld [vmem:[%s1 + $0x138] sm:$0xff]
  %v515 = vld [vmem:[%s1 + $0x140] sm:$0xff]
  %v516 = vld [vmem:[%s1 + $0x148] sm:$0xff]
  %v517 = vld [vmem:[%s1 + $0x150] sm:$0xff]
  %v518 = vld [vmem:[%s1 + $0x158] sm:$0xff]
  %v519 = vld [vmem:[%s1 + $0x160] sm:$0xff]
  %v520 = vld [vmem:[%s1 + $0x168] sm:$0xff]
  %v521 = vld [vmem:[%s1 + $0x170] sm:$0xff]
  %v522 = vld [vmem:[%s1 + $0x178] sm:$0xff]
  %v523 = vld [vmem:[%s1 + $0x180] sm:$0xff]
  %v524 = vld [vmem:[%s1 + $0x188] sm:$0xff]
  %v525 = vld [vmem:[%s1 + $0x190] sm:$0xff]
  %v526 = vld [vmem:[%s1 + $0x198] sm:$0xff]
  %v527 = vld [vmem:[%s1 + $0x1a0] sm:$0xff]
  %v528 = vld [vmem:[%s1 + $0x1a8] sm:$0xff]
  %v529 = vld [vmem:[%s1 + $0x1b0] sm:$0xff]
  %v530 = vld [vmem:[%s1 + $0x1b8] sm:$0xff]
  %v531 = vld [vmem:[%s1 + $0x1c0] sm:$0xff]
  %v532 = vld [vmem:[%s1 + $0x1c8] sm:$0xff]
  %v533 = vld [vmem:[%s1 + $0x1d0] sm:$0xff]
  %v534 = vld [vmem:[%s1 + $0x1d8] sm:$0xff]
  %v535 = vld [vmem:[%s1 + $0x1e0] sm:$0xff]
  %v536 = vld [vmem:[%s1 + $0x1e8] sm:$0xff]
  %v537 = vld [vmem:[%s1 + $0x1f0] sm:$0xff]
  %v538 = vld [vmem:[%s1 + $0x1f8] sm:$0xff]
  %v539 = vld [vmem:[%s3] sm:$0xff]
  %v540 = vld [vmem:[%s3 + $0x8] sm:$0xff]
  %v541 = vld [vmem:[%s3 + $0x10] sm:$0xff]
  %v542 = vld [vmem:[%s3 + $0x18] sm:$0xff]
  %v543 = vld [vmem:[%s3 + $0x20] sm:$0xff]
  %v544 = vld [vmem:[%s3 + $0x28] sm:$0xff]
  %v545 = vld [vmem:[%s3 + $0x30] sm:$0xff]
  %v546 = vld [vmem:[%s3 + $0x38] sm:$0xff]
  %v547 = vld [vmem:[%s3 + $0x40] sm:$0xf]
  %v548 = vld [vmem:[%s3 + $0x48] sm:$0xf]
  %vm549 = vcmask 293888
  %v551 = vsel %vm549, %v475, 0
  %v554 = vsel %vm549, %v476, 0
  %v557 = vsel %vm549, %v477, 0
  %v560 = vsel %vm549, %v478, 0
  %v563 = vsel %vm549, %v479, 0
  %v566 = vsel %vm549, %v480, 0
  %v569 = vsel %vm549, %v481, 0
  %v572 = vsel %vm549, %v482, 0
  %v575 = vsel %vm549, %v483, 0
  %v578 = vsel %vm549, %v484, 0
  %v581 = vsel %vm549, %v485, 0
  %v584 = vsel %vm549, %v486, 0
  %v587 = vsel %vm549, %v487, 0
  %v590 = vsel %vm549, %v488, 0
  %v593 = vsel %vm549, %v489, 0
  %v596 = vsel %vm549, %v490, 0
  %v599 = vsel %vm549, %v491, 0
  %v602 = vsel %vm549, %v492, 0
  %v605 = vsel %vm549, %v493, 0
  %v608 = vsel %vm549, %v494, 0
  %v611 = vsel %vm549, %v495, 0
  %v614 = vsel %vm549, %v496, 0
  %v617 = vsel %vm549, %v497, 0
  %v620 = vsel %vm549, %v498, 0
  %v623 = vsel %vm549, %v499, 0
  %v626 = vsel %vm549, %v500, 0
  %v629 = vsel %vm549, %v501, 0
  %v632 = vsel %vm549, %v502, 0
  %v635 = vsel %vm549, %v503, 0
  %v638 = vsel %vm549, %v504, 0
  %v641 = vsel %vm549, %v505, 0
  %v644 = vsel %vm549, %v506, 0
  %v647 = vsel %vm549, %v507, 0
  %v650 = vsel %vm549, %v508, 0
  %v653 = vsel %vm549, %v509, 0
  %v656 = vsel %vm549, %v510, 0
  %v659 = vsel %vm549, %v511, 0
  %v662 = vsel %vm549, %v512, 0
  %v665 = vsel %vm549, %v513, 0
  %v668 = vsel %vm549, %v514, 0
  %v671 = vsel %vm549, %v515, 0
  %v674 = vsel %vm549, %v516, 0
  %v677 = vsel %vm549, %v517, 0
  %v680 = vsel %vm549, %v518, 0
  %v683 = vsel %vm549, %v519, 0
  %v686 = vsel %vm549, %v520, 0
  %v689 = vsel %vm549, %v521, 0
  %v692 = vsel %vm549, %v522, 0
  %v695 = vsel %vm549, %v523, 0
  %v698 = vsel %vm549, %v524, 0
  %v701 = vsel %vm549, %v525, 0
  %v704 = vsel %vm549, %v526, 0
  %v707 = vsel %vm549, %v527, 0
  %v710 = vsel %vm549, %v528, 0
  %v713 = vsel %vm549, %v529, 0
  %v716 = vsel %vm549, %v530, 0
  %v719 = vsel %vm549, %v531, 0
  %v722 = vsel %vm549, %v532, 0
  %v725 = vsel %vm549, %v533, 0
  %v728 = vsel %vm549, %v534, 0
  %v731 = vsel %vm549, %v535, 0
  %v734 = vsel %vm549, %v536, 0
  %v737 = vsel %vm549, %v537, 0
  %v740 = vsel %vm549, %v538, 0
  %vm742 = vcmask 1043456
  %v744 = vsel %vm742, %v547, 0
  %v747 = vsel %vm742, %v548, 0
  %749 = vmatprep.subr.mxu0 %v540
  %750 = vmatpush1.msra.mxu0 %v539
  %751 = vmatprep.subr.mxu0 %v542
  %752 = vmatpush1.msra.mxu0 %v541
  %753 = vmatprep.subr.mxu0 %v544
  %754 = vmatpush1.msra.mxu0 %v543
  %755 = vmatprep.subr.mxu0 %v546
  %756 = vmatpush1.msra.mxu0 %v545
  %757 = vmatprep.subr.mxu0 %v747
  %758 = vmatpush1.msra.mxu0 %v744
  %759 = vmatprep.subr.mxu0 0.0
  %760 = vmatpush1.msra.mxu0 0.0
  %761 = vmatprep.subr.mxu0 0.0
  %762 = vmatpush1.msra.mxu0 0.0
  %763 = vmatprep.subr.mxu0 0.0
  %764 = vmatpush1.msra.mxu0 0.0
  %765 = vmatprep.subr.mxu0 0.0
  %766 = vmatpush1.msra.mxu0 0.0
  %767 = vmatprep.subr.mxu0 0.0
  %768 = vmatpush1.msra.mxu0 0.0
  %769 = vmatprep.subr.mxu0 0.0
  %770 = vmatpush1.msra.mxu0 0.0
  %771 = vmatprep.subr.mxu0 0.0
  %772 = vmatpush1.msra.mxu0 0.0
  %773 = vmatprep.subr.mxu0 0.0
  %774 = vmatpush1.msra.mxu0 0.0
  %775 = vmatprep.subr.mxu0 0.0
  %776 = vmatpush1.msra.mxu0 0.0
  %777 = vmatprep.subr.mxu0 0.0
  %778 = vmatpush1.msra.mxu0 0.0
  %779 = vmatprep.subr.mxu0 0.0
  %780 = vmatpush1.msra.mxu0 0.0
  %781 = vmatprep.subr.mxu0 0.0
  %782 = vmatpush1.msra.mxu0 0.0
  %783 = vmatprep.subr.mxu0 0.0
  %784 = vmatpush1.msra.mxu0 0.0
  %785 = vmatprep.subr.mxu0 0.0
  %786 = vmatpush1.msra.mxu0 0.0
  %787 = vmatprep.subr.mxu0 0.0
  %788 = vmatpush1.msra.mxu0 0.0
  %789 = vmatprep.subr.mxu0 0.0
  %790 = vmatpush1.msra.mxu0 0.0
  %791 = vmatprep.subr.mxu0 0.0
  %792 = vmatpush1.msra.mxu0 0.0
  %793 = vmatprep.subr.mxu0 0.0
  %794 = vmatpush1.msra.mxu0 0.0
  %795 = vmatprep.subr.mxu0 0.0
  %796 = vmatpush1.msra.mxu0 0.0
  %797 = vmatprep.subr.mxu0 0.0
  %798 = vmatpush1.msra.mxu0 0.0
  %799 = vmatprep.subr.mxu0 0.0
  %800 = vmatpush1.msra.mxu0 0.0
  %801 = vmatprep.subr.mxu0 0.0
  %802 = vmatpush1.msra.mxu0 0.0
  %803 = vmatprep.subr.mxu0 0.0
  %804 = vmatpush1.msra.mxu0 0.0
  %805 = vmatprep.subr.mxu0 0.0
  %806 = vmatpush1.msra.mxu0 0.0
  %807 = vmatprep.subr.mxu0 0.0
  %808 = vmatpush1.msra.mxu0 0.0
  %809 = vmatprep.subr.mxu0 0.0
  %810 = vmatpush1.msra.mxu0 0.0
  %811 = vmatprep.subr.mxu0 0.0
  %812 = vmatpush1.msra.mxu0 0.0
  %813 = vmatprep.mubr.f32.mxu0 0.0
  %814 = vmatmul.mubr.f32.gmra.mrb[0].mxu0 %v551
  %v815 = vpop.f32.mrb[0].mxu0
  %v816 = vadd.f32 0.0, %v815
  %v817 = vpop.f32.mrb[0].mxu0
  %v818 = vadd.f32 0.0, %v817
  %819 = vmatprep.mubr.f32.mxu0 0.0
  %820 = vmatmul.mubr.f32.gmra.mrb[0].mxu0 %v554
  %v821 = vpop.f32.mrb[0].mxu0
  %v822 = vadd.f32 0.0, %v821
  %v823 = vpop.f32.mrb[0].mxu0
  %v824 = vadd.f32 0.0, %v823
  %825 = vmatprep.mubr.f32.mxu0 0.0
  %826 = vmatmul.mubr.f32.gmra.mrb[0].mxu0 %v557
  %v827 = vpop.f32.mrb[0].mxu0
  %v828 = vadd.f32 0.0, %v827
  %v829 = vpop.f32.mrb[0].mxu0
  %v830 = vadd.f32 0.0, %v829
  %831 = vmatprep.mubr.f32.mxu0 0.0
  %832 = vmatmul.mubr.f32.gmra.mrb[0].mxu0 %v560
  %v833 = vpop.f32.mrb[0].mxu0
  %v834 = vadd.f32 0.0, %v833
  %v835 = vpop.f32.mrb[0].mxu0
  %v836 = vadd.f32 0.0, %v835
  %837 = vmatprep.mubr.f32.mxu0 0.0
  %838 = vmatmul.mubr.f32.gmra.mrb[0].mxu0 %v563
  %v839 = vpop.f32.mrb[0].mxu0
  %v840 = vadd.f32 0.0, %v839
  %v841 = vpop.f32.mrb[0].mxu0
  %v842 = vadd.f32 0.0, %v841
  %843 = vmatprep.mubr.f32.mxu0 0.0
  %844 = vmatmul.mubr.f32.gmra.mrb[0].mxu0 %v566
  %v845 = vpop.f32.mrb[0].mxu0
  %v846 = vadd.f32 0.0, %v845
  %v847 = vpop.f32.mrb[0].mxu0
  %v848 = vadd.f32 0.0, %v847
  %849 = vmatprep.mubr.f32.mxu0 0.0
  %850 = vmatmul.mubr.f32.gmra.mrb[0].mxu0 %v569
  %v851 = vpop.f32.mrb[0].mxu0
  %v852 = vadd.f32 0.0, %v851
  %v853 = vpop.f32.mrb[0].mxu0
  %v854 = vadd.f32 0.0, %v853
  %855 = vmatprep.mubr.f32.mxu0 0.0
  %856 = vmatmul.mubr.f32.gmra.mrb[0].mxu0 %v572
  %v857 = vpop.f32.mrb[0].mxu0
  %v858 = vadd.f32 0.0, %v857
  %v859 = vpop.f32.mrb[0].mxu0
  %v860 = vadd.f32 0.0, %v859
  %861 = vmatprep.mubr.f32.mxu0 0.0
  %862 = vmatmul.mubr.f32.gmra.mrb[0].mxu0 %v575
  %v863 = vpop.f32.mrb[0].mxu0
  %v864 = vadd.f32 0.0, %v863
  %v865 = vpop.f32.mrb[0].mxu0
  %v866 = vadd.f32 0.0, %v865
  %867 = vmatprep.mubr.f32.mxu0 0.0
  %868 = vmatmul.mubr.f32.gmra.mrb[0].mxu0 %v578
  %v869 = vpop.f32.mrb[0].mxu0
  %v870 = vadd.f32 0.0, %v869
  %v871 = vpop.f32.mrb[0].mxu0
  %v872 = vadd.f32 0.0, %v871
  %873 = vmatprep.mubr.f32.mxu0 0.0
  %874 = vmatmul.mubr.f32.gmra.mrb[0].mxu0 %v581
  %v875 = vpop.f32.mrb[0].mxu0
  %v876 = vadd.f32 0.0, %v875
  %v877 = vpop.f32.mrb[0].mxu0
  %v878 = vadd.f32 0.0, %v877
  %879 = vmatprep.mubr.f32.mxu0 0.0
  %880 = vmatmul.mubr.f32.gmra.mrb[0].mxu0 %v584
  %v881 = vpop.f32.mrb[0].mxu0
  %v882 = vadd.f32 0.0, %v881
  %v883 = vpop.f32.mrb[0].mxu0
  %v884 = vadd.f32 0.0, %v883
  %885 = vmatprep.mubr.f32.mxu0 0.0
  %886 = vmatmul.mubr.f32.gmra.mrb[0].mxu0 %v587
  %v887 = vpop.f32.mrb[0].mxu0
  %v888 = vadd.f32 0.0, %v887
  %v889 = vpop.f32.mrb[0].mxu0
  %v890 = vadd.f32 0.0, %v889
  %891 = vmatprep.mubr.f32.mxu0 0.0
  %892 = vmatmul.mubr.f32.gmra.mrb[0].mxu0 %v590
  %v893 = vpop.f32.mrb[0].mxu0
  %v894 = vadd.f32 0.0, %v893
  %v895 = vpop.f32.mrb[0].mxu0
  %v896 = vadd.f32 0.0, %v895
  %897 = vmatprep.mubr.f32.mxu0 0.0
  %898 = vmatmul.mubr.f32.gmra.mrb[0].mxu0 %v593
  %v899 = vpop.f32.mrb[0].mxu0
  %v900 = vadd.f32 0.0, %v899
  %v901 = vpop.f32.mrb[0].mxu0
  %v902 = vadd.f32 0.0, %v901
  %903 = vmatprep.mubr.f32.mxu0 0.0
  %904 = vmatmul.mubr.f32.gmra.mrb[0].mxu0 %v596
  %v905 = vpop.f32.mrb[0].mxu0
  %v906 = vadd.f32 0.0, %v905
  %v907 = vpop.f32.mrb[0].mxu0
  %v908 = vadd.f32 0.0, %v907
  %909 = vmatprep.mubr.f32.mxu0 0.0
  %910 = vmatmul.mubr.f32.gmra.mrb[0].mxu0 %v599
  %v911 = vpop.f32.mrb[0].mxu0
  %v912 = vadd.f32 0.0, %v911
  %v913 = vpop.f32.mrb[0].mxu0
  %v914 = vadd.f32 0.0, %v913
  %915 = vmatprep.mubr.f32.mxu0 0.0
  %916 = vmatmul.mubr.f32.gmra.mrb[0].mxu0 %v602
  %v917 = vpop.f32.mrb[0].mxu0
  %v918 = vadd.f32 0.0, %v917
  %v919 = vpop.f32.mrb[0].mxu0
  %v920 = vadd.f32 0.0, %v919
  %921 = vmatprep.mubr.f32.mxu0 0.0
  %922 = vmatmul.mubr.f32.gmra.mrb[0].mxu0 %v605
  %v923 = vpop.f32.mrb[0].mxu0
  %v924 = vadd.f32 0.0, %v923
  %v925 = vpop.f32.mrb[0].mxu0
  %v926 = vadd.f32 0.0, %v925
  %927 = vmatprep.mubr.f32.mxu0 0.0
  %928 = vmatmul.mubr.f32.gmra.mrb[0].mxu0 %v608
  %v929 = vpop.f32.mrb[0].mxu0
  %v930 = vadd.f32 0.0, %v929
  %v931 = vpop.f32.mrb[0].mxu0
  %v932 = vadd.f32 0.0, %v931
  %933 = vmatprep.mubr.f32.mxu0 0.0
  %934 = vmatmul.mubr.f32.gmra.mrb[0].mxu0 %v611
  %v935 = vpop.f32.mrb[0].mxu0
  %v936 = vadd.f32 0.0, %v935
  %v937 = vpop.f32.mrb[0].mxu0
  %v938 = vadd.f32 0.0, %v937
  %939 = vmatprep.mubr.f32.mxu0 0.0
  %940 = vmatmul.mubr.f32.gmra.mrb[0].mxu0 %v614
  %v941 = vpop.f32.mrb[0].mxu0
  %v942 = vadd.f32 0.0, %v941
  %v943 = vpop.f32.mrb[0].mxu0
  %v944 = vadd.f32 0.0, %v943
  %945 = vmatprep.mubr.f32.mxu0 0.0
  %946 = vmatmul.mubr.f32.gmra.mrb[0].mxu0 %v617
  %v947 = vpop.f32.mrb[0].mxu0
  %v948 = vadd.f32 0.0, %v947
  %v949 = vpop.f32.mrb[0].mxu0
  %v950 = vadd.f32 0.0, %v949
  %951 = vmatprep.mubr.f32.mxu0 0.0
  %952 = vmatmul.mubr.f32.gmra.mrb[0].mxu0 %v620
  %v953 = vpop.f32.mrb[0].mxu0
  %v954 = vadd.f32 0.0, %v953
  %v955 = vpop.f32.mrb[0].mxu0
  %v956 = vadd.f32 0.0, %v955
  %957 = vmatprep.mubr.f32.mxu0 0.0
  %958 = vmatmul.mubr.f32.gmra.mrb[0].mxu0 %v623
  %v959 = vpop.f32.mrb[0].mxu0
  %v960 = vadd.f32 0.0, %v959
  %v961 = vpop.f32.mrb[0].mxu0
  %v962 = vadd.f32 0.0, %v961
  %963 = vmatprep.mubr.f32.mxu0 0.0
  %964 = vmatmul.mubr.f32.gmra.mrb[0].mxu0 %v626
  %v965 = vpop.f32.mrb[0].mxu0
  %v966 = vadd.f32 0.0, %v965
  %v967 = vpop.f32.mrb[0].mxu0
  %v968 = vadd.f32 0.0, %v967
  %969 = vmatprep.mubr.f32.mxu0 0.0
  %970 = vmatmul.mubr.f32.gmra.mrb[0].mxu0 %v629
  %v971 = vpop.f32.mrb[0].mxu0
  %v972 = vadd.f32 0.0, %v971
  %v973 = vpop.f32.mrb[0].mxu0
  %v974 = vadd.f32 0.0, %v973
  %975 = vmatprep.mubr.f32.mxu0 0.0
  %976 = vmatmul.mubr.f32.gmra.mrb[0].mxu0 %v632
  %v977 = vpop.f32.mrb[0].mxu0
  %v978 = vadd.f32 0.0, %v977
  %v979 = vpop.f32.mrb[0].mxu0
  %v980 = vadd.f32 0.0, %v979
  %981 = vmatprep.mubr.f32.mxu0 0.0
  %982 = vmatmul.mubr.f32.gmra.mrb[0].mxu0 %v635
  %v983 = vpop.f32.mrb[0].mxu0
  %v984 = vadd.f32 0.0, %v983
  %v985 = vpop.f32.mrb[0].mxu0
  %v986 = vadd.f32 0.0, %v985
  %987 = vmatprep.mubr.f32.mxu0 0.0
  %988 = vmatmul.mubr.f32.gmra.mrb[0].mxu0 %v638
  %v989 = vpop.f32.mrb[0].mxu0
  %v990 = vadd.f32 0.0, %v989
  %v991 = vpop.f32.mrb[0].mxu0
  %v992 = vadd.f32 0.0, %v991
  %993 = vmatprep.mubr.f32.mxu0 0.0
  %994 = vmatmul.mubr.f32.gmra.mrb[0].mxu0 %v641
  %v995 = vpop.f32.mrb[0].mxu0
  %v996 = vadd.f32 0.0, %v995
  %v997 = vpop.f32.mrb[0].mxu0
  %v998 = vadd.f32 0.0, %v997
  %999 = vmatprep.mubr.f32.mxu0 0.0
  %1000 = vmatmul.mubr.f32.gmra.mrb[0].mxu0 %v644
  %v1001 = vpop.f32.mrb[0].mxu0
  %v1002 = vadd.f32 0.0, %v1001
  %v1003 = vpop.f32.mrb[0].mxu0
  %v1004 = vadd.f32 0.0, %v1003
  %1005 = vmatprep.mubr.f32.mxu0 0.0
  %1006 = vmatmul.mubr.f32.gmra.mrb[0].mxu0 %v647
  %v1007 = vpop.f32.mrb[0].mxu0
  %v1008 = vadd.f32 0.0, %v1007
  %v1009 = vpop.f32.mrb[0].mxu0
  %v1010 = vadd.f32 0.0, %v1009
  %1011 = vmatprep.mubr.f32.mxu0 0.0
  %1012 = vmatmul.mubr.f32.gmra.mrb[0].mxu0 %v650
  %v1013 = vpop.f32.mrb[0].mxu0
  %v1014 = vadd.f32 0.0, %v1013
  %v1015 = vpop.f32.mrb[0].mxu0
  %v1016 = vadd.f32 0.0, %v1015
  %1017 = vmatprep.mubr.f32.mxu0 0.0
  %1018 = vmatmul.mubr.f32.gmra.mrb[0].mxu0 %v653
  %v1019 = vpop.f32.mrb[0].mxu0
  %v1020 = vadd.f32 0.0, %v1019
  %v1021 = vpop.f32.mrb[0].mxu0
  %v1022 = vadd.f32 0.0, %v1021
  %1023 = vmatprep.mubr.f32.mxu0 0.0
  %1024 = vmatmul.mubr.f32.gmra.mrb[0].mxu0 %v656
  %v1025 = vpop.f32.mrb[0].mxu0
  %v1026 = vadd.f32 0.0, %v1025
  %v1027 = vpop.f32.mrb[0].mxu0
  %v1028 = vadd.f32 0.0, %v1027
  %1029 = vmatprep.mubr.f32.mxu0 0.0
  %1030 = vmatmul.mubr.f32.gmra.mrb[0].mxu0 %v659
  %v1031 = vpop.f32.mrb[0].mxu0
  %v1032 = vadd.f32 0.0, %v1031
  %v1033 = vpop.f32.mrb[0].mxu0
  %v1034 = vadd.f32 0.0, %v1033
  %1035 = vmatprep.mubr.f32.mxu0 0.0
  %1036 = vmatmul.mubr.f32.gmra.mrb[0].mxu0 %v662
  %v1037 = vpop.f32.mrb[0].mxu0
  %v1038 = vadd.f32 0.0, %v1037
  %v1039 = vpop.f32.mrb[0].mxu0
  %v1040 = vadd.f32 0.0, %v1039
  %1041 = vmatprep.mubr.f32.mxu0 0.0
  %1042 = vmatmul.mubr.f32.gmra.mrb[0].mxu0 %v665
  %v1043 = vpop.f32.mrb[0].mxu0
  %v1044 = vadd.f32 0.0, %v1043
  %v1045 = vpop.f32.mrb[0].mxu0
  %v1046 = vadd.f32 0.0, %v1045
  %1047 = vmatprep.mubr.f32.mxu0 0.0
  %1048 = vmatmul.mubr.f32.gmra.mrb[0].mxu0 %v668
  %v1049 = vpop.f32.mrb[0].mxu0
  %v1050 = vadd.f32 0.0, %v1049
  %v1051 = vpop.f32.mrb[0].mxu0
  %v1052 = vadd.f32 0.0, %v1051
  %1053 = vmatprep.mubr.f32.mxu0 0.0
  %1054 = vmatmul.mubr.f32.gmra.mrb[0].mxu0 %v671
  %v1055 = vpop.f32.mrb[0].mxu0
  %v1056 = vadd.f32 0.0, %v1055
  %v1057 = vpop.f32.mrb[0].mxu0
  %v1058 = vadd.f32 0.0, %v1057
  %1059 = vmatprep.mubr.f32.mxu0 0.0
  %1060 = vmatmul.mubr.f32.gmra.mrb[0].mxu0 %v674
  %v1061 = vpop.f32.mrb[0].mxu0
  %v1062 = vadd.f32 0.0, %v1061
  %v1063 = vpop.f32.mrb[0].mxu0
  %v1064 = vadd.f32 0.0, %v1063
  %1065 = vmatprep.mubr.f32.mxu0 0.0
  %1066 = vmatmul.mubr.f32.gmra.mrb[0].mxu0 %v677
  %v1067 = vpop.f32.mrb[0].mxu0
  %v1068 = vadd.f32 0.0, %v1067
  %v1069 = vpop.f32.mrb[0].mxu0
  %v1070 = vadd.f32 0.0, %v1069
  %1071 = vmatprep.mubr.f32.mxu0 0.0
  %1072 = vmatmul.mubr.f32.gmra.mrb[0].mxu0 %v680
  %v1073 = vpop.f32.mrb[0].mxu0
  %v1074 = vadd.f32 0.0, %v1073
  %v1075 = vpop.f32.mrb[0].mxu0
  %v1076 = vadd.f32 0.0, %v1075
  %1077 = vmatprep.mubr.f32.mxu0 0.0
  %1078 = vmatmul.mubr.f32.gmra.mrb[0].mxu0 %v683
  %v1079 = vpop.f32.mrb[0].mxu0
  %v1080 = vadd.f32 0.0, %v1079
  %v1081 = vpop.f32.mrb[0].mxu0
  %v1082 = vadd.f32 0.0, %v1081
  %1083 = vmatprep.mubr.f32.mxu0 0.0
  %1084 = vmatmul.mubr.f32.gmra.mrb[0].mxu0 %v686
  %v1085 = vpop.f32.mrb[0].mxu0
  %v1086 = vadd.f32 0.0, %v1085
  %v1087 = vpop.f32.mrb[0].mxu0
  %v1088 = vadd.f32 0.0, %v1087
  %1089 = vmatprep.mubr.f32.mxu0 0.0
  %1090 = vmatmul.mubr.f32.gmra.mrb[0].mxu0 %v689
  %v1091 = vpop.f32.mrb[0].mxu0
  %v1092 = vadd.f32 0.0, %v1091
  %v1093 = vpop.f32.mrb[0].mxu0
  %v1094 = vadd.f32 0.0, %v1093
  %1095 = vmatprep.mubr.f32.mxu0 0.0
  %1096 = vmatmul.mubr.f32.gmra.mrb[0].mxu0 %v692
  %v1097 = vpop.f32.mrb[0].mxu0
  %v1098 = vadd.f32 0.0, %v1097
  %v1099 = vpop.f32.mrb[0].mxu0
  %v1100 = vadd.f32 0.0, %v1099
  %1101 = vmatprep.mubr.f32.mxu0 0.0
  %1102 = vmatmul.mubr.f32.gmra.mrb[0].mxu0 %v695
  %v1103 = vpop.f32.mrb[0].mxu0
  %v1104 = vadd.f32 0.0, %v1103
  %v1105 = vpop.f32.mrb[0].mxu0
  %v1106 = vadd.f32 0.0, %v1105
  %1107 = vmatprep.mubr.f32.mxu0 0.0
  %1108 = vmatmul.mubr.f32.gmra.mrb[0].mxu0 %v698
  %v1109 = vpop.f32.mrb[0].mxu0
  %v1110 = vadd.f32 0.0, %v1109
  %v1111 = vpop.f32.mrb[0].mxu0
  %v1112 = vadd.f32 0.0, %v1111
  %1113 = vmatprep.mubr.f32.mxu0 0.0
  %1114 = vmatmul.mubr.f32.gmra.mrb[0].mxu0 %v701
  %v1115 = vpop.f32.mrb[0].mxu0
  %v1116 = vadd.f32 0.0, %v1115
  %v1117 = vpop.f32.mrb[0].mxu0
  %v1118 = vadd.f32 0.0, %v1117
  %1119 = vmatprep.mubr.f32.mxu0 0.0
  %1120 = vmatmul.mubr.f32.gmra.mrb[0].mxu0 %v704
  %v1121 = vpop.f32.mrb[0].mxu0
  %v1122 = vadd.f32 0.0, %v1121
  %v1123 = vpop.f32.mrb[0].mxu0
  %v1124 = vadd.f32 0.0, %v1123
  %1125 = vmatprep.mubr.f32.mxu0 0.0
  %1126 = vmatmul.mubr.f32.gmra.mrb[0].mxu0 %v707
  %v1127 = vpop.f32.mrb[0].mxu0
  %v1128 = vadd.f32 0.0, %v1127
  %v1129 = vpop.f32.mrb[0].mxu0
  %v1130 = vadd.f32 0.0, %v1129
  %1131 = vmatprep.mubr.f32.mxu0 0.0
  %1132 = vmatmul.mubr.f32.gmra.mrb[0].mxu0 %v710
  %v1133 = vpop.f32.mrb[0].mxu0
  %v1134 = vadd.f32 0.0, %v1133
  %v1135 = vpop.f32.mrb[0].mxu0
  %v1136 = vadd.f32 0.0, %v1135
  %1137 = vmatprep.mubr.f32.mxu0 0.0
  %1138 = vmatmul.mubr.f32.gmra.mrb[0].mxu0 %v713
  %v1139 = vpop.f32.mrb[0].mxu0
  %v1140 = vadd.f32 0.0, %v1139
  %v1141 = vpop.f32.mrb[0].mxu0
  %v1142 = vadd.f32 0.0, %v1141
  %1143 = vmatprep.mubr.f32.mxu0 0.0
  %1144 = vmatmul.mubr.f32.gmra.mrb[0].mxu0 %v716
  %v1145 = vpop.f32.mrb[0].mxu0
  %v1146 = vadd.f32 0.0, %v1145
  %v1147 = vpop.f32.mrb[0].mxu0
  %v1148 = vadd.f32 0.0, %v1147
  %1149 = vmatprep.mubr.f32.mxu0 0.0
  %1150 = vmatmul.mubr.f32.gmra.mrb[0].mxu0 %v719
  %v1151 = vpop.f32.mrb[0].mxu0
  %v1152 = vadd.f32 0.0, %v1151
  %v1153 = vpop.f32.mrb[0].mxu0
  %v1154 = vadd.f32 0.0, %v1153
  %1155 = vmatprep.mubr.f32.mxu0 0.0
  %1156 = vmatmul.mubr.f32.gmra.mrb[0].mxu0 %v722
  %v1157 = vpop.f32.mrb[0].mxu0
  %v1158 = vadd.f32 0.0, %v1157
  %v1159 = vpop.f32.mrb[0].mxu0
  %v1160 = vadd.f32 0.0, %v1159
  %1161 = vmatprep.mubr.f32.mxu0 0.0
  %1162 = vmatmul.mubr.f32.gmra.mrb[0].mxu0 %v725
  %v1163 = vpop.f32.mrb[0].mxu0
  %v1164 = vadd.f32 0.0, %v1163
  %v1165 = vpop.f32.mrb[0].mxu0
  %v1166 = vadd.f32 0.0, %v1165
  %1167 = vmatprep.mubr.f32.mxu0 0.0
  %1168 = vmatmul.mubr.f32.gmra.mrb[0].mxu0 %v728
  %v1169 = vpop.f32.mrb[0].mxu0
  %v1170 = vadd.f32 0.0, %v1169
  %v1171 = vpop.f32.mrb[0].mxu0
  %v1172 = vadd.f32 0.0, %v1171
  %1173 = vmatprep.mubr.f32.mxu0 0.0
  %1174 = vmatmul.mubr.f32.gmra.mrb[0].mxu0 %v731
  %v1175 = vpop.f32.mrb[0].mxu0
  %v1176 = vadd.f32 0.0, %v1175
  %v1177 = vpop.f32.mrb[0].mxu0
  %v1178 = vadd.f32 0.0, %v1177
  %1179 = vmatprep.mubr.f32.mxu0 0.0
  %1180 = vmatmul.mubr.f32.gmra.mrb[0].mxu0 %v734
  %v1181 = vpop.f32.mrb[0].mxu0
  %v1182 = vadd.f32 0.0, %v1181
  %v1183 = vpop.f32.mrb[0].mxu0
  %v1184 = vadd.f32 0.0, %v1183
  %1185 = vmatprep.mubr.f32.mxu0 0.0
  %1186 = vmatmul.mubr.f32.gmra.mrb[0].mxu0 %v737
  %v1187 = vpop.f32.mrb[0].mxu0
  %v1188 = vadd.f32 0.0, %v1187
  %v1189 = vpop.f32.mrb[0].mxu0
  %v1190 = vadd.f32 0.0, %v1189
  %1191 = vmatprep.mubr.f32.mxu0 0.0
  %1192 = vmatmul.mubr.f32.gmra.mrb[0].mxu0 %v740
  %v1193 = vpop.f32.mrb[0].mxu0
  %v1194 = vadd.f32 0.0, %v1193
  %v1195 = vpop.f32.mrb[0].mxu0
  %v1196 = vadd.f32 0.0, %v1195
  %1197 = vdwg.mxu0
  %v1198 = vld [vmem:[%s4] sm:$0xff]
  %v1199 = vld [vmem:[%s4 + $0x8] sm:$0xff]
  %v1200 = vld [vmem:[%s4 + $0x10] sm:$0x1]
  %v1201 = vld [vmem:[%s4 + $0x18] sm:$0x1]
  %vm1202 = vcmask 72704
  %v1204 = vsel %vm1202, %v348, 0
  %v1207 = vsel %vm1202, %v350, 0
  %v1210 = vsel %vm1202, %v352, 0
  %v1213 = vsel %vm1202, %v354, 0
  %v1216 = vsel %vm1202, %v356, 0
  %v1219 = vsel %vm1202, %v358, 0
  %v1222 = vsel %vm1202, %v360, 0
  %v1225 = vsel %vm1202, %v362, 0
  %v1228 = vsel %vm1202, %v364, 0
  %v1231 = vsel %vm1202, %v366, 0
  %v1234 = vsel %vm1202, %v368, 0
  %v1237 = vsel %vm1202, %v370, 0
  %v1240 = vsel %vm1202, %v372, 0
  %v1243 = vsel %vm1202, %v374, 0
  %v1246 = vsel %vm1202, %v376, 0
  %v1249 = vsel %vm1202, %v378, 0
  %v1252 = vsel %vm1202, %v380, 0
  %v1255 = vsel %vm1202, %v382, 0
  %v1258 = vsel %vm1202, %v384, 0
  %v1261 = vsel %vm1202, %v386, 0
  %v1264 = vsel %vm1202, %v388, 0
  %v1267 = vsel %vm1202, %v390, 0
  %v1270 = vsel %vm1202, %v392, 0
  %v1273 = vsel %vm1202, %v394, 0
  %v1276 = vsel %vm1202, %v396, 0
  %v1279 = vsel %vm1202, %v398, 0
  %v1282 = vsel %vm1202, %v400, 0
  %v1285 = vsel %vm1202, %v402, 0
  %v1288 = vsel %vm1202, %v404, 0
  %v1291 = vsel %vm1202, %v406, 0
  %v1294 = vsel %vm1202, %v408, 0
  %v1297 = vsel %vm1202, %v410, 0
  %v1300 = vsel %vm1202, %v412, 0
  %v1303 = vsel %vm1202, %v414, 0
  %v1306 = vsel %vm1202, %v416, 0
  %v1309 = vsel %vm1202, %v418, 0
  %v1312 = vsel %vm1202, %v420, 0
  %v1315 = vsel %vm1202, %v422, 0
  %v1318 = vsel %vm1202, %v424, 0
  %v1321 = vsel %vm1202, %v426, 0
  %v1324 = vsel %vm1202, %v428, 0
  %v1327 = vsel %vm1202, %v430, 0
  %v1330 = vsel %vm1202, %v432, 0
  %v1333 = vsel %vm1202, %v434, 0
  %v1336 = vsel %vm1202, %v436, 0
  %v1339 = vsel %vm1202, %v438, 0
  %v1342 = vsel %vm1202, %v440, 0
  %v1345 = vsel %vm1202, %v442, 0
  %v1348 = vsel %vm1202, %v444, 0
  %v1351 = vsel %vm1202, %v446, 0
  %v1354 = vsel %vm1202, %v448, 0
  %v1357 = vsel %vm1202, %v450, 0
  %v1360 = vsel %vm1202, %v452, 0
  %v1363 = vsel %vm1202, %v454, 0
  %v1366 = vsel %vm1202, %v456, 0
  %v1369 = vsel %vm1202, %v458, 0
  %v1372 = vsel %vm1202, %v460, 0
  %v1375 = vsel %vm1202, %v462, 0
  %v1378 = vsel %vm1202, %v464, 0
  %v1381 = vsel %vm1202, %v466, 0
  %v1384 = vsel %vm1202, %v468, 0
  %v1387 = vsel %vm1202, %v470, 0
  %v1390 = vsel %vm1202, %v472, 0
  %v1393 = vsel %vm1202, %v474, 0
  %vm1395 = vcmask 1040384
  %v1397 = vsel %vm1395, %v1200, 0
  %v1400 = vsel %vm1395, %v1201, 0
  %1402 = vmatprep.subr.mxu0 %v1199
  %1403 = vmatpush1.msra.mxu0 %v1198
  %1404 = vmatprep.subr.mxu0 %v1400
  %1405 = vmatpush1.msra.mxu0 %v1397
  %1406 = vmatprep.subr.mxu0 0.0
  %1407 = vmatpush1.msra.mxu0 0.0
  %1408 = vmatprep.subr.mxu0 0.0
  %1409 = vmatpush1.msra.mxu0 0.0
  %1410 = vmatprep.subr.mxu0 0.0
  %1411 = vmatpush1.msra.mxu0 0.0
  %1412 = vmatprep.subr.mxu0 0.0
  %1413 = vmatpush1.msra.mxu0 0.0
  %1414 = vmatprep.subr.mxu0 0.0
  %1415 = vmatpush1.msra.mxu0 0.0
  %1416 = vmatprep.subr.mxu0 0.0
  %1417 = vmatpush1.msra.mxu0 0.0
  %1418 = vmatprep.subr.mxu0 0.0
  %1419 = vmatpush1.msra.mxu0 0.0
  %1420 = vmatprep.subr.mxu0 0.0
  %1421 = vmatpush1.msra.mxu0 0.0
  %1422 = vmatprep.subr.mxu0 0.0
  %1423 = vmatpush1.msra.mxu0 0.0
  %1424 = vmatprep.subr.mxu0 0.0
  %1425 = vmatpush1.msra.mxu0 0.0
  %1426 = vmatprep.subr.mxu0 0.0
  %1427 = vmatpush1.msra.mxu0 0.0
  %1428 = vmatprep.subr.mxu0 0.0
  %1429 = vmatpush1.msra.mxu0 0.0
  %1430 = vmatprep.subr.mxu0 0.0
  %1431 = vmatpush1.msra.mxu0 0.0
  %1432 = vmatprep.subr.mxu0 0.0
  %1433 = vmatpush1.msra.mxu0 0.0
  %1434 = vmatprep.subr.mxu0 0.0
  %1435 = vmatpush1.msra.mxu0 0.0
  %1436 = vmatprep.subr.mxu0 0.0
  %1437 = vmatpush1.msra.mxu0 0.0
  %1438 = vmatprep.subr.mxu0 0.0
  %1439 = vmatpush1.msra.mxu0 0.0
  %1440 = vmatprep.subr.mxu0 0.0
  %1441 = vmatpush1.msra.mxu0 0.0
  %1442 = vmatprep.subr.mxu0 0.0
  %1443 = vmatpush1.msra.mxu0 0.0
  %1444 = vmatprep.subr.mxu0 0.0
  %1445 = vmatpush1.msra.mxu0 0.0
  %1446 = vmatprep.subr.mxu0 0.0
  %1447 = vmatpush1.msra.mxu0 0.0
  %1448 = vmatprep.subr.mxu0 0.0
  %1449 = vmatpush1.msra.mxu0 0.0
  %1450 = vmatprep.subr.mxu0 0.0
  %1451 = vmatpush1.msra.mxu0 0.0
  %1452 = vmatprep.subr.mxu0 0.0
  %1453 = vmatpush1.msra.mxu0 0.0
  %1454 = vmatprep.subr.mxu0 0.0
  %1455 = vmatpush1.msra.mxu0 0.0
  %1456 = vmatprep.subr.mxu0 0.0
  %1457 = vmatpush1.msra.mxu0 0.0
  %1458 = vmatprep.subr.mxu0 0.0
  %1459 = vmatpush1.msra.mxu0 0.0
  %1460 = vmatprep.subr.mxu0 0.0
  %1461 = vmatpush1.msra.mxu0 0.0
  %1462 = vmatprep.subr.mxu0 0.0
  %1463 = vmatpush1.msra.mxu0 0.0
  %1464 = vmatprep.subr.mxu0 0.0
  %1465 = vmatpush1.msra.mxu0 0.0
  %1466 = vmatprep.mubr.f32.mxu0 0.0
  %1467 = vmatmul.mubr.f32.gmra.mrb[0].mxu0 %v1204
  %v1468 = vpop.f32.mrb[0].mxu0
  %v1469 = vadd.f32 0.0, %v1468
  %v1470 = vpop.f32.mrb[0].mxu0
  %v1471 = vadd.f32 0.0, %v1470
  %1472 = vmatprep.mubr.f32.mxu0 0.0
  %1473 = vmatmul.mubr.f32.gmra.mrb[0].mxu0 %v1207
  %v1474 = vpop.f32.mrb[0].mxu0
  %v1475 = vadd.f32 0.0, %v1474
  %v1476 = vpop.f32.mrb[0].mxu0
  %v1477 = vadd.f32 0.0, %v1476
  %1478 = vmatprep.mubr.f32.mxu0 0.0
  %1479 = vmatmul.mubr.f32.gmra.mrb[0].mxu0 %v1210
  %v1480 = vpop.f32.mrb[0].mxu0
  %v1481 = vadd.f32 0.0, %v1480
  %v1482 = vpop.f32.mrb[0].mxu0
  %v1483 = vadd.f32 0.0, %v1482
  %1484 = vmatprep.mubr.f32.mxu0 0.0
  %1485 = vmatmul.mubr.f32.gmra.mrb[0].mxu0 %v1213
  %v1486 = vpop.f32.mrb[0].mxu0
  %v1487 = vadd.f32 0.0, %v1486
  %v1488 = vpop.f32.mrb[0].mxu0
  %v1489 = vadd.f32 0.0, %v1488
  %1490 = vmatprep.mubr.f32.mxu0 0.0
  %1491 = vmatmul.mubr.f32.gmra.mrb[0].mxu0 %v1216
  %v1492 = vpop.f32.mrb[0].mxu0
  %v1493 = vadd.f32 0.0, %v1492
  %v1494 = vpop.f32.mrb[0].mxu0
  %v1495 = vadd.f32 0.0, %v1494
  %1496 = vmatprep.mubr.f32.mxu0 0.0
  %1497 = vmatmul.mubr.f32.gmra.mrb[0].mxu0 %v1219
  %v1498 = vpop.f32.mrb[0].mxu0
  %v1499 = vadd.f32 0.0, %v1498
  %v1500 = vpop.f32.mrb[0].mxu0
  %v1501 = vadd.f32 0.0, %v1500
  %1502 = vmatprep.mubr.f32.mxu0 0.0
  %1503 = vmatmul.mubr.f32.gmra.mrb[0].mxu0 %v1222
  %v1504 = vpop.f32.mrb[0].mxu0
  %v1505 = vadd.f32 0.0, %v1504
  %v1506 = vpop.f32.mrb[0].mxu0
  %v1507 = vadd.f32 0.0, %v1506
  %1508 = vmatprep.mubr.f32.mxu0 0.0
  %1509 = vmatmul.mubr.f32.gmra.mrb[0].mxu0 %v1225
  %v1510 = vpop.f32.mrb[0].mxu0
  %v1511 = vadd.f32 0.0, %v1510
  %v1512 = vpop.f32.mrb[0].mxu0
  %v1513 = vadd.f32 0.0, %v1512
  %1514 = vmatprep.mubr.f32.mxu0 0.0
  %1515 = vmatmul.mubr.f32.gmra.mrb[0].mxu0 %v1228
  %v1516 = vpop.f32.mrb[0].mxu0
  %v1517 = vadd.f32 0.0, %v1516
  %v1518 = vpop.f32.mrb[0].mxu0
  %v1519 = vadd.f32 0.0, %v1518
  %1520 = vmatprep.mubr.f32.mxu0 0.0
  %1521 = vmatmul.mubr.f32.gmra.mrb[0].mxu0 %v1231
  %v1522 = vpop.f32.mrb[0].mxu0
  %v1523 = vadd.f32 0.0, %v1522
  %v1524 = vpop.f32.mrb[0].mxu0
  %v1525 = vadd.f32 0.0, %v1524
  %1526 = vmatprep.mubr.f32.mxu0 0.0
  %1527 = vmatmul.mubr.f32.gmra.mrb[0].mxu0 %v1234
  %v1528 = vpop.f32.mrb[0].mxu0
  %v1529 = vadd.f32 0.0, %v1528
  %v1530 = vpop.f32.mrb[0].mxu0
  %v1531 = vadd.f32 0.0, %v1530
  %1532 = vmatprep.mubr.f32.mxu0 0.0
  %1533 = vmatmul.mubr.f32.gmra.mrb[0].mxu0 %v1237
  %v1534 = vpop.f32.mrb[0].mxu0
  %v1535 = vadd.f32 0.0, %v1534
  %v1536 = vpop.f32.mrb[0].mxu0
  %v1537 = vadd.f32 0.0, %v1536
  %1538 = vmatprep.mubr.f32.mxu0 0.0
  %1539 = vmatmul.mubr.f32.gmra.mrb[0].mxu0 %v1240
  %v1540 = vpop.f32.mrb[0].mxu0
  %v1541 = vadd.f32 0.0, %v1540
  %v1542 = vpop.f32.mrb[0].mxu0
  %v1543 = vadd.f32 0.0, %v1542
  %1544 = vmatprep.mubr.f32.mxu0 0.0
  %1545 = vmatmul.mubr.f32.gmra.mrb[0].mxu0 %v1243
  %v1546 = vpop.f32.mrb[0].mxu0
  %v1547 = vadd.f32 0.0, %v1546
  %v1548 = vpop.f32.mrb[0].mxu0
  %v1549 = vadd.f32 0.0, %v1548
  %1550 = vmatprep.mubr.f32.mxu0 0.0
  %1551 = vmatmul.mubr.f32.gmra.mrb[0].mxu0 %v1246
  %v1552 = vpop.f32.mrb[0].mxu0
  %v1553 = vadd.f32 0.0, %v1552
  %v1554 = vpop.f32.mrb[0].mxu0
  %v1555 = vadd.f32 0.0, %v1554
  %1556 = vmatprep.mubr.f32.mxu0 0.0
  %1557 = vmatmul.mubr.f32.gmra.mrb[0].mxu0 %v1249
  %v1558 = vpop.f32.mrb[0].mxu0
  %v1559 = vadd.f32 0.0, %v1558
  %v1560 = vpop.f32.mrb[0].mxu0
  %v1561 = vadd.f32 0.0, %v1560
  %1562 = vmatprep.mubr.f32.mxu0 0.0
  %1563 = vmatmul.mubr.f32.gmra.mrb[0].mxu0 %v1252
  %v1564 = vpop.f32.mrb[0].mxu0
  %v1565 = vadd.f32 0.0, %v1564
  %v1566 = vpop.f32.mrb[0].mxu0
  %v1567 = vadd.f32 0.0, %v1566
  %1568 = vmatprep.mubr.f32.mxu0 0.0
  %1569 = vmatmul.mubr.f32.gmra.mrb[0].mxu0 %v1255
  %v1570 = vpop.f32.mrb[0].mxu0
  %v1571 = vadd.f32 0.0, %v1570
  %v1572 = vpop.f32.mrb[0].mxu0
  %v1573 = vadd.f32 0.0, %v1572
  %1574 = vmatprep.mubr.f32.mxu0 0.0
  %1575 = vmatmul.mubr.f32.gmra.mrb[0].mxu0 %v1258
  %v1576 = vpop.f32.mrb[0].mxu0
  %v1577 = vadd.f32 0.0, %v1576
  %v1578 = vpop.f32.mrb[0].mxu0
  %v1579 = vadd.f32 0.0, %v1578
  %1580 = vmatprep.mubr.f32.mxu0 0.0
  %1581 = vmatmul.mubr.f32.gmra.mrb[0].mxu0 %v1261
  %v1582 = vpop.f32.mrb[0].mxu0
  %v1583 = vadd.f32 0.0, %v1582
  %v1584 = vpop.f32.mrb[0].mxu0
  %v1585 = vadd.f32 0.0, %v1584
  %1586 = vmatprep.mubr.f32.mxu0 0.0
  %1587 = vmatmul.mubr.f32.gmra.mrb[0].mxu0 %v1264
  %v1588 = vpop.f32.mrb[0].mxu0
  %v1589 = vadd.f32 0.0, %v1588
  %v1590 = vpop.f32.mrb[0].mxu0
  %v1591 = vadd.f32 0.0, %v1590
  %1592 = vmatprep.mubr.f32.mxu0 0.0
  %1593 = vmatmul.mubr.f32.gmra.mrb[0].mxu0 %v1267
  %v1594 = vpop.f32.mrb[0].mxu0
  %v1595 = vadd.f32 0.0, %v1594
  %v1596 = vpop.f32.mrb[0].mxu0
  %v1597 = vadd.f32 0.0, %v1596
  %1598 = vmatprep.mubr.f32.mxu0 0.0
  %1599 = vmatmul.mubr.f32.gmra.mrb[0].mxu0 %v1270
  %v1600 = vpop.f32.mrb[0].mxu0
  %v1601 = vadd.f32 0.0, %v1600
  %v1602 = vpop.f32.mrb[0].mxu0
  %v1603 = vadd.f32 0.0, %v1602
  %1604 = vmatprep.mubr.f32.mxu0 0.0
  %1605 = vmatmul.mubr.f32.gmra.mrb[0].mxu0 %v1273
  %v1606 = vpop.f32.mrb[0].mxu0
  %v1607 = vadd.f32 0.0, %v1606
  %v1608 = vpop.f32.mrb[0].mxu0
  %v1609 = vadd.f32 0.0, %v1608
  %1610 = vmatprep.mubr.f32.mxu0 0.0
  %1611 = vmatmul.mubr.f32.gmra.mrb[0].mxu0 %v1276
  %v1612 = vpop.f32.mrb[0].mxu0
  %v1613 = vadd.f32 0.0, %v1612
  %v1614 = vpop.f32.mrb[0].mxu0
  %v1615 = vadd.f32 0.0, %v1614
  %1616 = vmatprep.mubr.f32.mxu0 0.0
  %1617 = vmatmul.mubr.f32.gmra.mrb[0].mxu0 %v1279
  %v1618 = vpop.f32.mrb[0].mxu0
  %v1619 = vadd.f32 0.0, %v1618
  %v1620 = vpop.f32.mrb[0].mxu0
  %v1621 = vadd.f32 0.0, %v1620
  %1622 = vmatprep.mubr.f32.mxu0 0.0
  %1623 = vmatmul.mubr.f32.gmra.mrb[0].mxu0 %v1282
  %v1624 = vpop.f32.mrb[0].mxu0
  %v1625 = vadd.f32 0.0, %v1624
  %v1626 = vpop.f32.mrb[0].mxu0
  %v1627 = vadd.f32 0.0, %v1626
  %1628 = vmatprep.mubr.f32.mxu0 0.0
  %1629 = vmatmul.mubr.f32.gmra.mrb[0].mxu0 %v1285
  %v1630 = vpop.f32.mrb[0].mxu0
  %v1631 = vadd.f32 0.0, %v1630
  %v1632 = vpop.f32.mrb[0].mxu0
  %v1633 = vadd.f32 0.0, %v1632
  %1634 = vmatprep.mubr.f32.mxu0 0.0
  %1635 = vmatmul.mubr.f32.gmra.mrb[0].mxu0 %v1288
  %v1636 = vpop.f32.mrb[0].mxu0
  %v1637 = vadd.f32 0.0, %v1636
  %v1638 = vpop.f32.mrb[0].mxu0
  %v1639 = vadd.f32 0.0, %v1638
  %1640 = vmatprep.mubr.f32.mxu0 0.0
  %1641 = vmatmul.mubr.f32.gmra.mrb[0].mxu0 %v1291
  %v1642 = vpop.f32.mrb[0].mxu0
  %v1643 = vadd.f32 0.0, %v1642
  %v1644 = vpop.f32.mrb[0].mxu0
  %v1645 = vadd.f32 0.0, %v1644
  %1646 = vmatprep.mubr.f32.mxu0 0.0
  %1647 = vmatmul.mubr.f32.gmra.mrb[0].mxu0 %v1294
  %v1648 = vpop.f32.mrb[0].mxu0
  %v1649 = vadd.f32 0.0, %v1648
  %v1650 = vpop.f32.mrb[0].mxu0
  %v1651 = vadd.f32 0.0, %v1650
  %1652 = vmatprep.mubr.f32.mxu0 0.0
  %1653 = vmatmul.mubr.f32.gmra.mrb[0].mxu0 %v1297
  %v1654 = vpop.f32.mrb[0].mxu0
  %v1655 = vadd.f32 0.0, %v1654
  %v1656 = vpop.f32.mrb[0].mxu0
  %v1657 = vadd.f32 0.0, %v1656
  %1658 = vmatprep.mubr.f32.mxu0 0.0
  %1659 = vmatmul.mubr.f32.gmra.mrb[0].mxu0 %v1300
  %v1660 = vpop.f32.mrb[0].mxu0
  %v1661 = vadd.f32 0.0, %v1660
  %v1662 = vpop.f32.mrb[0].mxu0
  %v1663 = vadd.f32 0.0, %v1662
  %1664 = vmatprep.mubr.f32.mxu0 0.0
  %1665 = vmatmul.mubr.f32.gmra.mrb[0].mxu0 %v1303
  %v1666 = vpop.f32.mrb[0].mxu0
  %v1667 = vadd.f32 0.0, %v1666
  %v1668 = vpop.f32.mrb[0].mxu0
  %v1669 = vadd.f32 0.0, %v1668
  %1670 = vmatprep.mubr.f32.mxu0 0.0
  %1671 = vmatmul.mubr.f32.gmra.mrb[0].mxu0 %v1306
  %v1672 = vpop.f32.mrb[0].mxu0
  %v1673 = vadd.f32 0.0, %v1672
  %v1674 = vpop.f32.mrb[0].mxu0
  %v1675 = vadd.f32 0.0, %v1674
  %1676 = vmatprep.mubr.f32.mxu0 0.0
  %1677 = vmatmul.mubr.f32.gmra.mrb[0].mxu0 %v1309
  %v1678 = vpop.f32.mrb[0].mxu0
  %v1679 = vadd.f32 0.0, %v1678
  %v1680 = vpop.f32.mrb[0].mxu0
  %v1681 = vadd.f32 0.0, %v1680
  %1682 = vmatprep.mubr.f32.mxu0 0.0
  %1683 = vmatmul.mubr.f32.gmra.mrb[0].mxu0 %v1312
  %v1684 = vpop.f32.mrb[0].mxu0
  %v1685 = vadd.f32 0.0, %v1684
  %v1686 = vpop.f32.mrb[0].mxu0
  %v1687 = vadd.f32 0.0, %v1686
  %1688 = vmatprep.mubr.f32.mxu0 0.0
  %1689 = vmatmul.mubr.f32.gmra.mrb[0].mxu0 %v1315
  %v1690 = vpop.f32.mrb[0].mxu0
  %v1691 = vadd.f32 0.0, %v1690
  %v1692 = vpop.f32.mrb[0].mxu0
  %v1693 = vadd.f32 0.0, %v1692
  %1694 = vmatprep.mubr.f32.mxu0 0.0
  %1695 = vmatmul.mubr.f32.gmra.mrb[0].mxu0 %v1318
  %v1696 = vpop.f32.mrb[0].mxu0
  %v1697 = vadd.f32 0.0, %v1696
  %v1698 = vpop.f32.mrb[0].mxu0
  %v1699 = vadd.f32 0.0, %v1698
  %1700 = vmatprep.mubr.f32.mxu0 0.0
  %1701 = vmatmul.mubr.f32.gmra.mrb[0].mxu0 %v1321
  %v1702 = vpop.f32.mrb[0].mxu0
  %v1703 = vadd.f32 0.0, %v1702
  %v1704 = vpop.f32.mrb[0].mxu0
  %v1705 = vadd.f32 0.0, %v1704
  %1706 = vmatprep.mubr.f32.mxu0 0.0
  %1707 = vmatmul.mubr.f32.gmra.mrb[0].mxu0 %v1324
  %v1708 = vpop.f32.mrb[0].mxu0
  %v1709 = vadd.f32 0.0, %v1708
  %v1710 = vpop.f32.mrb[0].mxu0
  %v1711 = vadd.f32 0.0, %v1710
  %1712 = vmatprep.mubr.f32.mxu0 0.0
  %1713 = vmatmul.mubr.f32.gmra.mrb[0].mxu0 %v1327
  %v1714 = vpop.f32.mrb[0].mxu0
  %v1715 = vadd.f32 0.0, %v1714
  %v1716 = vpop.f32.mrb[0].mxu0
  %v1717 = vadd.f32 0.0, %v1716
  %1718 = vmatprep.mubr.f32.mxu0 0.0
  %1719 = vmatmul.mubr.f32.gmra.mrb[0].mxu0 %v1330
  %v1720 = vpop.f32.mrb[0].mxu0
  %v1721 = vadd.f32 0.0, %v1720
  %v1722 = vpop.f32.mrb[0].mxu0
  %v1723 = vadd.f32 0.0, %v1722
  %1724 = vmatprep.mubr.f32.mxu0 0.0
  %1725 = vmatmul.mubr.f32.gmra.mrb[0].mxu0 %v1333
  %v1726 = vpop.f32.mrb[0].mxu0
  %v1727 = vadd.f32 0.0, %v1726
  %v1728 = vpop.f32.mrb[0].mxu0
  %v1729 = vadd.f32 0.0, %v1728
  %1730 = vmatprep.mubr.f32.mxu0 0.0
  %1731 = vmatmul.mubr.f32.gmra.mrb[0].mxu0 %v1336
  %v1732 = vpop.f32.mrb[0].mxu0
  %v1733 = vadd.f32 0.0, %v1732
  %v1734 = vpop.f32.mrb[0].mxu0
  %v1735 = vadd.f32 0.0, %v1734
  %1736 = vmatprep.mubr.f32.mxu0 0.0
  %1737 = vmatmul.mubr.f32.gmra.mrb[0].mxu0 %v1339
  %v1738 = vpop.f32.mrb[0].mxu0
  %v1739 = vadd.f32 0.0, %v1738
  %v1740 = vpop.f32.mrb[0].mxu0
  %v1741 = vadd.f32 0.0, %v1740
  %1742 = vmatprep.mubr.f32.mxu0 0.0
  %1743 = vmatmul.mubr.f32.gmra.mrb[0].mxu0 %v1342
  %v1744 = vpop.f32.mrb[0].mxu0
  %v1745 = vadd.f32 0.0, %v1744
  %v1746 = vpop.f32.mrb[0].mxu0
  %v1747 = vadd.f32 0.0, %v1746
  %1748 = vmatprep.mubr.f32.mxu0 0.0
  %1749 = vmatmul.mubr.f32.gmra.mrb[0].mxu0 %v1345
  %v1750 = vpop.f32.mrb[0].mxu0
  %v1751 = vadd.f32 0.0, %v1750
  %v1752 = vpop.f32.mrb[0].mxu0
  %v1753 = vadd.f32 0.0, %v1752
  %1754 = vmatprep.mubr.f32.mxu0 0.0
  %1755 = vmatmul.mubr.f32.gmra.mrb[0].mxu0 %v1348
  %v1756 = vpop.f32.mrb[0].mxu0
  %v1757 = vadd.f32 0.0, %v1756
  %v1758 = vpop.f32.mrb[0].mxu0
  %v1759 = vadd.f32 0.0, %v1758
  %1760 = vmatprep.mubr.f32.mxu0 0.0
  %1761 = vmatmul.mubr.f32.gmra.mrb[0].mxu0 %v1351
  %v1762 = vpop.f32.mrb[0].mxu0
  %v1763 = vadd.f32 0.0, %v1762
  %v1764 = vpop.f32.mrb[0].mxu0
  %v1765 = vadd.f32 0.0, %v1764
  %1766 = vmatprep.mubr.f32.mxu0 0.0
  %1767 = vmatmul.mubr.f32.gmra.mrb[0].mxu0 %v1354
  %v1768 = vpop.f32.mrb[0].mxu0
  %v1769 = vadd.f32 0.0, %v1768
  %v1770 = vpop.f32.mrb[0].mxu0
  %v1771 = vadd.f32 0.0, %v1770
  %1772 = vmatprep.mubr.f32.mxu0 0.0
  %1773 = vmatmul.mubr.f32.gmra.mrb[0].mxu0 %v1357
  %v1774 = vpop.f32.mrb[0].mxu0
  %v1775 = vadd.f32 0.0, %v1774
  %v1776 = vpop.f32.mrb[0].mxu0
  %v1777 = vadd.f32 0.0, %v1776
  %1778 = vmatprep.mubr.f32.mxu0 0.0
  %1779 = vmatmul.mubr.f32.gmra.mrb[0].mxu0 %v1360
  %v1780 = vpop.f32.mrb[0].mxu0
  %v1781 = vadd.f32 0.0, %v1780
  %v1782 = vpop.f32.mrb[0].mxu0
  %v1783 = vadd.f32 0.0, %v1782
  %1784 = vmatprep.mubr.f32.mxu0 0.0
  %1785 = vmatmul.mubr.f32.gmra.mrb[0].mxu0 %v1363
  %v1786 = vpop.f32.mrb[0].mxu0
  %v1787 = vadd.f32 0.0, %v1786
  %v1788 = vpop.f32.mrb[0].mxu0
  %v1789 = vadd.f32 0.0, %v1788
  %1790 = vmatprep.mubr.f32.mxu0 0.0
  %1791 = vmatmul.mubr.f32.gmra.mrb[0].mxu0 %v1366
  %v1792 = vpop.f32.mrb[0].mxu0
  %v1793 = vadd.f32 0.0, %v1792
  %v1794 = vpop.f32.mrb[0].mxu0
  %v1795 = vadd.f32 0.0, %v1794
  %1796 = vmatprep.mubr.f32.mxu0 0.0
  %1797 = vmatmul.mubr.f32.gmra.mrb[0].mxu0 %v1369
  %v1798 = vpop.f32.mrb[0].mxu0
  %v1799 = vadd.f32 0.0, %v1798
  %v1800 = vpop.f32.mrb[0].mxu0
  %v1801 = vadd.f32 0.0, %v1800
  %1802 = vmatprep.mubr.f32.mxu0 0.0
  %1803 = vmatmul.mubr.f32.gmra.mrb[0].mxu0 %v1372
  %v1804 = vpop.f32.mrb[0].mxu0
  %v1805 = vadd.f32 0.0, %v1804
  %v1806 = vpop.f32.mrb[0].mxu0
  %v1807 = vadd.f32 0.0, %v1806
  %1808 = vmatprep.mubr.f32.mxu0 0.0
  %1809 = vmatmul.mubr.f32.gmra.mrb[0].mxu0 %v1375
  %v1810 = vpop.f32.mrb[0].mxu0
  %v1811 = vadd.f32 0.0, %v1810
  %v1812 = vpop.f32.mrb[0].mxu0
  %v1813 = vadd.f32 0.0, %v1812
  %1814 = vmatprep.mubr.f32.mxu0 0.0
  %1815 = vmatmul.mubr.f32.gmra.mrb[0].mxu0 %v1378
  %v1816 = vpop.f32.mrb[0].mxu0
  %v1817 = vadd.f32 0.0, %v1816
  %v1818 = vpop.f32.mrb[0].mxu0
  %v1819 = vadd.f32 0.0, %v1818
  %1820 = vmatprep.mubr.f32.mxu0 0.0
  %1821 = vmatmul.mubr.f32.gmra.mrb[0].mxu0 %v1381
  %v1822 = vpop.f32.mrb[0].mxu0
  %v1823 = vadd.f32 0.0, %v1822
  %v1824 = vpop.f32.mrb[0].mxu0
  %v1825 = vadd.f32 0.0, %v1824
  %1826 = vmatprep.mubr.f32.mxu0 0.0
  %1827 = vmatmul.mubr.f32.gmra.mrb[0].mxu0 %v1384
  %v1828 = vpop.f32.mrb[0].mxu0
  %v1829 = vadd.f32 0.0, %v1828
  %v1830 = vpop.f32.mrb[0].mxu0
  %v1831 = vadd.f32 0.0, %v1830
  %1832 = vmatprep.mubr.f32.mxu0 0.0
  %1833 = vmatmul.mubr.f32.gmra.mrb[0].mxu0 %v1387
  %v1834 = vpop.f32.mrb[0].mxu0
  %v1835 = vadd.f32 0.0, %v1834
  %v1836 = vpop.f32.mrb[0].mxu0
  %v1837 = vadd.f32 0.0, %v1836
  %1838 = vmatprep.mubr.f32.mxu0 0.0
  %1839 = vmatmul.mubr.f32.gmra.mrb[0].mxu0 %v1390
  %v1840 = vpop.f32.mrb[0].mxu0
  %v1841 = vadd.f32 0.0, %v1840
  %v1842 = vpop.f32.mrb[0].mxu0
  %v1843 = vadd.f32 0.0, %v1842
  %1844 = vmatprep.mubr.f32.mxu0 0.0
  %1845 = vmatmul.mubr.f32.gmra.mrb[0].mxu0 %v1393
  %v1846 = vpop.f32.mrb[0].mxu0
  %v1847 = vadd.f32 0.0, %v1846
  %v1848 = vpop.f32.mrb[0].mxu0
  %v1849 = vadd.f32 0.0, %v1848
  %1850 = vdwg.mxu0
  %v1851 = vmul.f32 %v816, %v1469
  %v1852 = vmul.f32 %v818, %v1471
  %v1853 = vmul.f32 %v822, %v1475
  %v1854 = vmul.f32 %v824, %v1477
  %v1855 = vmul.f32 %v828, %v1481
  %v1856 = vmul.f32 %v830, %v1483
  %v1857 = vmul.f32 %v834, %v1487
  %v1858 = vmul.f32 %v836, %v1489
  %v1859 = vmul.f32 %v840, %v1493
  %v1860 = vmul.f32 %v842, %v1495
  %v1861 = vmul.f32 %v846, %v1499
  %v1862 = vmul.f32 %v848, %v1501
  %v1863 = vmul.f32 %v852, %v1505
  %v1864 = vmul.f32 %v854, %v1507
  %v1865 = vmul.f32 %v858, %v1511
  %v1866 = vmul.f32 %v860, %v1513
  %v1867 = vmul.f32 %v864, %v1517
  %v1868 = vmul.f32 %v866, %v1519
  %v1869 = vmul.f32 %v870, %v1523
  %v1870 = vmul.f32 %v872, %v1525
  %v1871 = vmul.f32 %v876, %v1529
  %v1872 = vmul.f32 %v878, %v1531
  %v1873 = vmul.f32 %v882, %v1535
  %v1874 = vmul.f32 %v884, %v1537
  %v1875 = vmul.f32 %v888, %v1541
  %v1876 = vmul.f32 %v890, %v1543
  %v1877 = vmul.f32 %v894, %v1547
  %v1878 = vmul.f32 %v896, %v1549
  %v1879 = vmul.f32 %v900, %v1553
  %v1880 = vmul.f32 %v902, %v1555
  %v1881 = vmul.f32 %v906, %v1559
  %v1882 = vmul.f32 %v908, %v1561
  %v1883 = vmul.f32 %v912, %v1565
  %v1884 = vmul.f32 %v914, %v1567
  %v1885 = vmul.f32 %v918, %v1571
  %v1886 = vmul.f32 %v920, %v1573
  %v1887 = vmul.f32 %v924, %v1577
  %v1888 = vmul.f32 %v926, %v1579
  %v1889 = vmul.f32 %v930, %v1583
  %v1890 = vmul.f32 %v932, %v1585
  %v1891 = vmul.f32 %v936, %v1589
  %v1892 = vmul.f32 %v938, %v1591
  %v1893 = vmul.f32 %v942, %v1595
  %v1894 = vmul.f32 %v944, %v1597
  %v1895 = vmul.f32 %v948, %v1601
  %v1896 = vmul.f32 %v950, %v1603
  %v1897 = vmul.f32 %v954, %v1607
  %v1898 = vmul.f32 %v956, %v1609
  %v1899 = vmul.f32 %v960, %v1613
  %v1900 = vmul.f32 %v962, %v1615
  %v1901 = vmul.f32 %v966, %v1619
  %v1902 = vmul.f32 %v968, %v1621
  %v1903 = vmul.f32 %v972, %v1625
  %v1904 = vmul.f32 %v974, %v1627
  %v1905 = vmul.f32 %v978, %v1631
  %v1906 = vmul.f32 %v980, %v1633
  %v1907 = vmul.f32 %v984, %v1637
  %v1908 = vmul.f32 %v986, %v1639
  %v1909 = vmul.f32 %v990, %v1643
  %v1910 = vmul.f32 %v992, %v1645
  %v1911 = vmul.f32 %v996, %v1649
  %v1912 = vmul.f32 %v998, %v1651
  %v1913 = vmul.f32 %v1002, %v1655
  %v1914 = vmul.f32 %v1004, %v1657
  %v1915 = vmul.f32 %v1008, %v1661
  %v1916 = vmul.f32 %v1010, %v1663
  %v1917 = vmul.f32 %v1014, %v1667
  %v1918 = vmul.f32 %v1016, %v1669
  %v1919 = vmul.f32 %v1020, %v1673
  %v1920 = vmul.f32 %v1022, %v1675
  %v1921 = vmul.f32 %v1026, %v1679
  %v1922 = vmul.f32 %v1028, %v1681
  %v1923 = vmul.f32 %v1032, %v1685
  %v1924 = vmul.f32 %v1034, %v1687
  %v1925 = vmul.f32 %v1038, %v1691
  %v1926 = vmul.f32 %v1040, %v1693
  %v1927 = vmul.f32 %v1044, %v1697
  %v1928 = vmul.f32 %v1046, %v1699
  %v1929 = vmul.f32 %v1050, %v1703
  %v1930 = vmul.f32 %v1052, %v1705
  %v1931 = vmul.f32 %v1056, %v1709
  %v1932 = vmul.f32 %v1058, %v1711
  %v1933 = vmul.f32 %v1062, %v1715
  %v1934 = vmul.f32 %v1064, %v1717
  %v1935 = vmul.f32 %v1068, %v1721
  %v1936 = vmul.f32 %v1070, %v1723
  %v1937 = vmul.f32 %v1074, %v1727
  %v1938 = vmul.f32 %v1076, %v1729
  %v1939 = vmul.f32 %v1080, %v1733
  %v1940 = vmul.f32 %v1082, %v1735
  %v1941 = vmul.f32 %v1086, %v1739
  %v1942 = vmul.f32 %v1088, %v1741
  %v1943 = vmul.f32 %v1092, %v1745
  %v1944 = vmul.f32 %v1094, %v1747
  %v1945 = vmul.f32 %v1098, %v1751
  %v1946 = vmul.f32 %v1100, %v1753
  %v1947 = vmul.f32 %v1104, %v1757
  %v1948 = vmul.f32 %v1106, %v1759
  %v1949 = vmul.f32 %v1110, %v1763
  %v1950 = vmul.f32 %v1112, %v1765
  %v1951 = vmul.f32 %v1116, %v1769
  %v1952 = vmul.f32 %v1118, %v1771
  %v1953 = vmul.f32 %v1122, %v1775
  %v1954 = vmul.f32 %v1124, %v1777
  %v1955 = vmul.f32 %v1128, %v1781
  %v1956 = vmul.f32 %v1130, %v1783
  %v1957 = vmul.f32 %v1134, %v1787
  %v1958 = vmul.f32 %v1136, %v1789
  %v1959 = vmul.f32 %v1140, %v1793
  %v1960 = vmul.f32 %v1142, %v1795
  %v1961 = vmul.f32 %v1146, %v1799
  %v1962 = vmul.f32 %v1148, %v1801
  %v1963 = vmul.f32 %v1152, %v1805
  %v1964 = vmul.f32 %v1154, %v1807
  %v1965 = vmul.f32 %v1158, %v1811
  %v1966 = vmul.f32 %v1160, %v1813
  %v1967 = vmul.f32 %v1164, %v1817
  %v1968 = vmul.f32 %v1166, %v1819
  %v1969 = vmul.f32 %v1170, %v1823
  %v1970 = vmul.f32 %v1172, %v1825
  %v1971 = vmul.f32 %v1176, %v1829
  %v1972 = vmul.f32 %v1178, %v1831
  %v1973 = vmul.f32 %v1182, %v1835
  %v1974 = vmul.f32 %v1184, %v1837
  %v1975 = vmul.f32 %v1188, %v1841
  %v1976 = vmul.f32 %v1190, %v1843
  %v1977 = vmul.f32 %v1194, %v1847
  %v1978 = vmul.f32 %v1196, %v1849
  %v1979 = vld [vmem:[%s0] sm:$0xff]
  %v1980 = vld [vmem:[%s0 + $0x8] sm:$0xff]
  %v1981 = vld [vmem:[%s0 + $0x10] sm:$0xff]
  %v1982 = vld [vmem:[%s0 + $0x18] sm:$0xff]
  %v1983 = vld [vmem:[%s0 + $0x20] sm:$0xff]
  %v1984 = vld [vmem:[%s0 + $0x28] sm:$0xff]
  %v1985 = vld [vmem:[%s0 + $0x30] sm:$0xff]
  %v1986 = vld [vmem:[%s0 + $0x38] sm:$0xff]
  %v1987 = vld [vmem:[%s0 + $0x40] sm:$0xff]
  %v1988 = vld [vmem:[%s0 + $0x48] sm:$0xff]
  %v1989 = vld [vmem:[%s0 + $0x50] sm:$0xff]
  %v1990 = vld [vmem:[%s0 + $0x58] sm:$0xff]
  %v1991 = vld [vmem:[%s0 + $0x60] sm:$0xff]
  %v1992 = vld [vmem:[%s0 + $0x68] sm:$0xff]
  %v1993 = vld [vmem:[%s0 + $0x70] sm:$0xff]
  %v1994 = vld [vmem:[%s0 + $0x78] sm:$0xff]
  %v1995 = vld [vmem:[%s0 + $0x80] sm:$0xff]
  %v1996 = vld [vmem:[%s0 + $0x88] sm:$0xff]
  %v1997 = vld [vmem:[%s0 + $0x90] sm:$0xff]
  %v1998 = vld [vmem:[%s0 + $0x98] sm:$0xff]
  %v1999 = vld [vmem:[%s0 + $0xa0] sm:$0xff]
  %v2000 = vld [vmem:[%s0 + $0xa8] sm:$0xff]
  %v2001 = vld [vmem:[%s0 + $0xb0] sm:$0xff]
  %v2002 = vld [vmem:[%s0 + $0xb8] sm:$0xff]
  %v2003 = vld [vmem:[%s0 + $0xc0] sm:$0xff]
  %v2004 = vld [vmem:[%s0 + $0xc8] sm:$0xff]
  %v2005 = vld [vmem:[%s0 + $0xd0] sm:$0xff]
  %v2006 = vld [vmem:[%s0 + $0xd8] sm:$0xff]
  %v2007 = vld [vmem:[%s0 + $0xe0] sm:$0xff]
  %v2008 = vld [vmem:[%s0 + $0xe8] sm:$0xff]
  %v2009 = vld [vmem:[%s0 + $0xf0] sm:$0xff]
  %v2010 = vld [vmem:[%s0 + $0xf8] sm:$0xff]
  %v2011 = vld [vmem:[%s0 + $0x100] sm:$0xff]
  %v2012 = vld [vmem:[%s0 + $0x108] sm:$0xff]
  %v2013 = vld [vmem:[%s0 + $0x110] sm:$0xff]
  %v2014 = vld [vmem:[%s0 + $0x118] sm:$0xff]
  %v2015 = vld [vmem:[%s0 + $0x120] sm:$0xff]
  %v2016 = vld [vmem:[%s0 + $0x128] sm:$0xff]
  %v2017 = vld [vmem:[%s0 + $0x130] sm:$0xff]
  %v2018 = vld [vmem:[%s0 + $0x138] sm:$0xff]
  %v2019 = vld [vmem:[%s0 + $0x140] sm:$0xff]
  %v2020 = vld [vmem:[%s0 + $0x148] sm:$0xff]
  %v2021 = vld [vmem:[%s0 + $0x150] sm:$0xff]
  %v2022 = vld [vmem:[%s0 + $0x158] sm:$0xff]
  %v2023 = vld [vmem:[%s0 + $0x160] sm:$0xff]
  %v2024 = vld [vmem:[%s0 + $0x168] sm:$0xff]
  %v2025 = vld [vmem:[%s0 + $0x170] sm:$0xff]
  %v2026 = vld [vmem:[%s0 + $0x178] sm:$0xff]
  %v2027 = vld [vmem:[%s0 + $0x180] sm:$0xff]
  %v2028 = vld [vmem:[%s0 + $0x188] sm:$0xff]
  %v2029 = vld [vmem:[%s0 + $0x190] sm:$0xff]
  %v2030 = vld [vmem:[%s0 + $0x198] sm:$0xff]
  %v2031 = vld [vmem:[%s0 + $0x1a0] sm:$0xff]
  %v2032 = vld [vmem:[%s0 + $0x1a8] sm:$0xff]
  %v2033 = vld [vmem:[%s0 + $0x1b0] sm:$0xff]
  %v2034 = vld [vmem:[%s0 + $0x1b8] sm:$0xff]
  %v2035 = vld [vmem:[%s0 + $0x1c0] sm:$0xff]
  %v2036 = vld [vmem:[%s0 + $0x1c8] sm:$0xff]
  %v2037 = vld [vmem:[%s0 + $0x1d0] sm:$0xff]
  %v2038 = vld [vmem:[%s0 + $0x1d8] sm:$0xff]
  %v2039 = vld [vmem:[%s0 + $0x1e0] sm:$0xff]
  %v2040 = vld [vmem:[%s0 + $0x1e8] sm:$0xff]
  %v2041 = vld [vmem:[%s0 + $0x1f0] sm:$0xff]
  %v2042 = vld [vmem:[%s0 + $0x1f8] sm:$0xff]
  %v2043 = vunpack.c.l.bf16 %v1979
  %v2044 = vunpack.c.h.bf16 %v1979
  %v2045 = vunpack.c.l.bf16 %v1980
  %v2046 = vunpack.c.h.bf16 %v1980
  %v2047 = vunpack.c.l.bf16 %v1981
  %v2048 = vunpack.c.h.bf16 %v1981
  %v2049 = vunpack.c.l.bf16 %v1982
  %v2050 = vunpack.c.h.bf16 %v1982
  %v2051 = vunpack.c.l.bf16 %v1983
  %v2052 = vunpack.c.h.bf16 %v1983
  %v2053 = vunpack.c.l.bf16 %v1984
  %v2054 = vunpack.c.h.bf16 %v1984
  %v2055 = vunpack.c.l.bf16 %v1985
  %v2056 = vunpack.c.h.bf16 %v1985
  %v2057 = vunpack.c.l.bf16 %v1986
  %v2058 = vunpack.c.h.bf16 %v1986
  %v2059 = vunpack.c.l.bf16 %v1987
  %v2060 = vunpack.c.h.bf16 %v1987
  %v2061 = vunpack.c.l.bf16 %v1988
  %v2062 = vunpack.c.h.bf16 %v1988
  %v2063 = vunpack.c.l.bf16 %v1989
  %v2064 = vunpack.c.h.bf16 %v1989
  %v2065 = vunpack.c.l.bf16 %v1990
  %v2066 = vunpack.c.h.bf16 %v1990
  %v2067 = vunpack.c.l.bf16 %v1991
  %v2068 = vunpack.c.h.bf16 %v1991
  %v2069 = vunpack.c.l.bf16 %v1992
  %v2070 = vunpack.c.h.bf16 %v1992
  %v2071 = vunpack.c.l.bf16 %v1993
  %v2072 = vunpack.c.h.bf16 %v1993
  %v2073 = vunpack.c.l.bf16 %v1994
  %v2074 = vunpack.c.h.bf16 %v1994
  %v2075 = vunpack.c.l.bf16 %v1995
  %v2076 = vunpack.c.h.bf16 %v1995
  %v2077 = vunpack.c.l.bf16 %v1996
  %v2078 = vunpack.c.h.bf16 %v1996
  %v2079 = vunpack.c.l.bf16 %v1997
  %v2080 = vunpack.c.h.bf16 %v1997
  %v2081 = vunpack.c.l.bf16 %v1998
  %v2082 = vunpack.c.h.bf16 %v1998
  %v2083 = vunpack.c.l.bf16 %v1999
  %v2084 = vunpack.c.h.bf16 %v1999
  %v2085 = vunpack.c.l.bf16 %v2000
  %v2086 = vunpack.c.h.bf16 %v2000
  %v2087 = vunpack.c.l.bf16 %v2001
  %v2088 = vunpack.c.h.bf16 %v2001
  %v2089 = vunpack.c.l.bf16 %v2002
  %v2090 = vunpack.c.h.bf16 %v2002
  %v2091 = vunpack.c.l.bf16 %v2003
  %v2092 = vunpack.c.h.bf16 %v2003
  %v2093 = vunpack.c.l.bf16 %v2004
  %v2094 = vunpack.c.h.bf16 %v2004
  %v2095 = vunpack.c.l.bf16 %v2005
  %v2096 = vunpack.c.h.bf16 %v2005
  %v2097 = vunpack.c.l.bf16 %v2006
  %v2098 = vunpack.c.h.bf16 %v2006
  %v2099 = vunpack.c.l.bf16 %v2007
  %v2100 = vunpack.c.h.bf16 %v2007
  %v2101 = vunpack.c.l.bf16 %v2008
  %v2102 = vunpack.c.h.bf16 %v2008
  %v2103 = vunpack.c.l.bf16 %v2009
  %v2104 = vunpack.c.h.bf16 %v2009
  %v2105 = vunpack.c.l.bf16 %v2010
  %v2106 = vunpack.c.h.bf16 %v2010
  %v2107 = vunpack.c.l.bf16 %v2011
  %v2108 = vunpack.c.h.bf16 %v2011
  %v2109 = vunpack.c.l.bf16 %v2012
  %v2110 = vunpack.c.h.bf16 %v2012
  %v2111 = vunpack.c.l.bf16 %v2013
  %v2112 = vunpack.c.h.bf16 %v2013
  %v2113 = vunpack.c.l.bf16 %v2014
  %v2114 = vunpack.c.h.bf16 %v2014
  %v2115 = vunpack.c.l.bf16 %v2015
  %v2116 = vunpack.c.h.bf16 %v2015
  %v2117 = vunpack.c.l.bf16 %v2016
  %v2118 = vunpack.c.h.bf16 %v2016
  %v2119 = vunpack.c.l.bf16 %v2017
  %v2120 = vunpack.c.h.bf16 %v2017
  %v2121 = vunpack.c.l.bf16 %v2018
  %v2122 = vunpack.c.h.bf16 %v2018
  %v2123 = vunpack.c.l.bf16 %v2019
  %v2124 = vunpack.c.h.bf16 %v2019
  %v2125 = vunpack.c.l.bf16 %v2020
  %v2126 = vunpack.c.h.bf16 %v2020
  %v2127 = vunpack.c.l.bf16 %v2021
  %v2128 = vunpack.c.h.bf16 %v2021
  %v2129 = vunpack.c.l.bf16 %v2022
  %v2130 = vunpack.c.h.bf16 %v2022
  %v2131 = vunpack.c.l.bf16 %v2023
  %v2132 = vunpack.c.h.bf16 %v2023
  %v2133 = vunpack.c.l.bf16 %v2024
  %v2134 = vunpack.c.h.bf16 %v2024
  %v2135 = vunpack.c.l.bf16 %v2025
  %v2136 = vunpack.c.h.bf16 %v2025
  %v2137 = vunpack.c.l.bf16 %v2026
  %v2138 = vunpack.c.h.bf16 %v2026
  %v2139 = vunpack.c.l.bf16 %v2027
  %v2140 = vunpack.c.h.bf16 %v2027
  %v2141 = vunpack.c.l.bf16 %v2028
  %v2142 = vunpack.c.h.bf16 %v2028
  %v2143 = vunpack.c.l.bf16 %v2029
  %v2144 = vunpack.c.h.bf16 %v2029
  %v2145 = vunpack.c.l.bf16 %v2030
  %v2146 = vunpack.c.h.bf16 %v2030
  %v2147 = vunpack.c.l.bf16 %v2031
  %v2148 = vunpack.c.h.bf16 %v2031
  %v2149 = vunpack.c.l.bf16 %v2032
  %v2150 = vunpack.c.h.bf16 %v2032
  %v2151 = vunpack.c.l.bf16 %v2033
  %v2152 = vunpack.c.h.bf16 %v2033
  %v2153 = vunpack.c.l.bf16 %v2034
  %v2154 = vunpack.c.h.bf16 %v2034
  %v2155 = vunpack.c.l.bf16 %v2035
  %v2156 = vunpack.c.h.bf16 %v2035
  %v2157 = vunpack.c.l.bf16 %v2036
  %v2158 = vunpack.c.h.bf16 %v2036
  %v2159 = vunpack.c.l.bf16 %v2037
  %v2160 = vunpack.c.h.bf16 %v2037
  %v2161 = vunpack.c.l.bf16 %v2038
  %v2162 = vunpack.c.h.bf16 %v2038
  %v2163 = vunpack.c.l.bf16 %v2039
  %v2164 = vunpack.c.h.bf16 %v2039
  %v2165 = vunpack.c.l.bf16 %v2040
  %v2166 = vunpack.c.h.bf16 %v2040
  %v2167 = vunpack.c.l.bf16 %v2041
  %v2168 = vunpack.c.h.bf16 %v2041
  %v2169 = vunpack.c.l.bf16 %v2042
  %v2170 = vunpack.c.h.bf16 %v2042
  %v2171 = vmul.f32 %v2043, %v1851
  %v2172 = vmul.f32 %v2044, %v1852
  %v2173 = vmul.f32 %v2045, %v1853
  %v2174 = vmul.f32 %v2046, %v1854
  %v2175 = vmul.f32 %v2047, %v1855
  %v2176 = vmul.f32 %v2048, %v1856
  %v2177 = vmul.f32 %v2049, %v1857
  %v2178 = vmul.f32 %v2050, %v1858
  %v2179 = vmul.f32 %v2051, %v1859
  %v2180 = vmul.f32 %v2052, %v1860
  %v2181 = vmul.f32 %v2053, %v1861
  %v2182 = vmul.f32 %v2054, %v1862
  %v2183 = vmul.f32 %v2055, %v1863
  %v2184 = vmul.f32 %v2056, %v1864
  %v2185 = vmul.f32 %v2057, %v1865
  %v2186 = vmul.f32 %v2058, %v1866
  %v2187 = vmul.f32 %v2059, %v1867
  %v2188 = vmul.f32 %v2060, %v1868
  %v2189 = vmul.f32 %v2061, %v1869
  %v2190 = vmul.f32 %v2062, %v1870
  %v2191 = vmul.f32 %v2063, %v1871
  %v2192 = vmul.f32 %v2064, %v1872
  %v2193 = vmul.f32 %v2065, %v1873
  %v2194 = vmul.f32 %v2066, %v1874
  %v2195 = vmul.f32 %v2067, %v1875
  %v2196 = vmul.f32 %v2068, %v1876
  %v2197 = vmul.f32 %v2069, %v1877
  %v2198 = vmul.f32 %v2070, %v1878
  %v2199 = vmul.f32 %v2071, %v1879
  %v2200 = vmul.f32 %v2072, %v1880
  %v2201 = vmul.f32 %v2073, %v1881
  %v2202 = vmul.f32 %v2074, %v1882
  %v2203 = vmul.f32 %v2075, %v1883
  %v2204 = vmul.f32 %v2076, %v1884
  %v2205 = vmul.f32 %v2077, %v1885
  %v2206 = vmul.f32 %v2078, %v1886
  %v2207 = vmul.f32 %v2079, %v1887
  %v2208 = vmul.f32 %v2080, %v1888
  %v2209 = vmul.f32 %v2081, %v1889
  %v2210 = vmul.f32 %v2082, %v1890
  %v2211 = vmul.f32 %v2083, %v1891
  %v2212 = vmul.f32 %v2084, %v1892
  %v2213 = vmul.f32 %v2085, %v1893
  %v2214 = vmul.f32 %v2086, %v1894
  %v2215 = vmul.f32 %v2087, %v1895
  %v2216 = vmul.f32 %v2088, %v1896
  %v2217 = vmul.f32 %v2089, %v1897
  %v2218 = vmul.f32 %v2090, %v1898
  %v2219 = vmul.f32 %v2091, %v1899
  %v2220 = vmul.f32 %v2092, %v1900
  %v2221 = vmul.f32 %v2093, %v1901
  %v2222 = vmul.f32 %v2094, %v1902
  %v2223 = vmul.f32 %v2095, %v1903
  %v2224 = vmul.f32 %v2096, %v1904
  %v2225 = vmul.f32 %v2097, %v1905
  %v2226 = vmul.f32 %v2098, %v1906
  %v2227 = vmul.f32 %v2099, %v1907
  %v2228 = vmul.f32 %v2100, %v1908
  %v2229 = vmul.f32 %v2101, %v1909
  %v2230 = vmul.f32 %v2102, %v1910
  %v2231 = vmul.f32 %v2103, %v1911
  %v2232 = vmul.f32 %v2104, %v1912
  %v2233 = vmul.f32 %v2105, %v1913
  %v2234 = vmul.f32 %v2106, %v1914
  %v2235 = vmul.f32 %v2107, %v1915
  %v2236 = vmul.f32 %v2108, %v1916
  %v2237 = vmul.f32 %v2109, %v1917
  %v2238 = vmul.f32 %v2110, %v1918
  %v2239 = vmul.f32 %v2111, %v1919
  %v2240 = vmul.f32 %v2112, %v1920
  %v2241 = vmul.f32 %v2113, %v1921
  %v2242 = vmul.f32 %v2114, %v1922
  %v2243 = vmul.f32 %v2115, %v1923
  %v2244 = vmul.f32 %v2116, %v1924
  %v2245 = vmul.f32 %v2117, %v1925
  %v2246 = vmul.f32 %v2118, %v1926
  %v2247 = vmul.f32 %v2119, %v1927
  %v2248 = vmul.f32 %v2120, %v1928
  %v2249 = vmul.f32 %v2121, %v1929
  %v2250 = vmul.f32 %v2122, %v1930
  %v2251 = vmul.f32 %v2123, %v1931
  %v2252 = vmul.f32 %v2124, %v1932
  %v2253 = vmul.f32 %v2125, %v1933
  %v2254 = vmul.f32 %v2126, %v1934
  %v2255 = vmul.f32 %v2127, %v1935
  %v2256 = vmul.f32 %v2128, %v1936
  %v2257 = vmul.f32 %v2129, %v1937
  %v2258 = vmul.f32 %v2130, %v1938
  %v2259 = vmul.f32 %v2131, %v1939
  %v2260 = vmul.f32 %v2132, %v1940
  %v2261 = vmul.f32 %v2133, %v1941
  %v2262 = vmul.f32 %v2134, %v1942
  %v2263 = vmul.f32 %v2135, %v1943
  %v2264 = vmul.f32 %v2136, %v1944
  %v2265 = vmul.f32 %v2137, %v1945
  %v2266 = vmul.f32 %v2138, %v1946
  %v2267 = vmul.f32 %v2139, %v1947
  %v2268 = vmul.f32 %v2140, %v1948
  %v2269 = vmul.f32 %v2141, %v1949
  %v2270 = vmul.f32 %v2142, %v1950
  %v2271 = vmul.f32 %v2143, %v1951
  %v2272 = vmul.f32 %v2144, %v1952
  %v2273 = vmul.f32 %v2145, %v1953
  %v2274 = vmul.f32 %v2146, %v1954
  %v2275 = vmul.f32 %v2147, %v1955
  %v2276 = vmul.f32 %v2148, %v1956
  %v2277 = vmul.f32 %v2149, %v1957
  %v2278 = vmul.f32 %v2150, %v1958
  %v2279 = vmul.f32 %v2151, %v1959
  %v2280 = vmul.f32 %v2152, %v1960
  %v2281 = vmul.f32 %v2153, %v1961
  %v2282 = vmul.f32 %v2154, %v1962
  %v2283 = vmul.f32 %v2155, %v1963
  %v2284 = vmul.f32 %v2156, %v1964
  %v2285 = vmul.f32 %v2157, %v1965
  %v2286 = vmul.f32 %v2158, %v1966
  %v2287 = vmul.f32 %v2159, %v1967
  %v2288 = vmul.f32 %v2160, %v1968
  %v2289 = vmul.f32 %v2161, %v1969
  %v2290 = vmul.f32 %v2162, %v1970
  %v2291 = vmul.f32 %v2163, %v1971
  %v2292 = vmul.f32 %v2164, %v1972
  %v2293 = vmul.f32 %v2165, %v1973
  %v2294 = vmul.f32 %v2166, %v1974
  %v2295 = vmul.f32 %v2167, %v1975
  %v2296 = vmul.f32 %v2168, %v1976
  %v2297 = vmul.f32 %v2169, %v1977
  %v2298 = vmul.f32 %v2170, %v1978
  %v2299 = vpack.c.bf16 %v2173, %v2171
  %v2300 = vpack.c.bf16 %v2174, %v2172
  %v2301 = vpack.c.bf16 %v2177, %v2175
  %v2302 = vpack.c.bf16 %v2178, %v2176
  %v2303 = vpack.c.bf16 %v2181, %v2179
  %v2304 = vpack.c.bf16 %v2182, %v2180
  %v2305 = vpack.c.bf16 %v2185, %v2183
  %v2306 = vpack.c.bf16 %v2186, %v2184
  %v2307 = vpack.c.bf16 %v2189, %v2187
  %v2308 = vpack.c.bf16 %v2190, %v2188
  %v2309 = vpack.c.bf16 %v2193, %v2191
  %v2310 = vpack.c.bf16 %v2194, %v2192
  %v2311 = vpack.c.bf16 %v2197, %v2195
  %v2312 = vpack.c.bf16 %v2198, %v2196
  %v2313 = vpack.c.bf16 %v2201, %v2199
  %v2314 = vpack.c.bf16 %v2202, %v2200
  %v2315 = vpack.c.bf16 %v2205, %v2203
  %v2316 = vpack.c.bf16 %v2206, %v2204
  %v2317 = vpack.c.bf16 %v2209, %v2207
  %v2318 = vpack.c.bf16 %v2210, %v2208
  %v2319 = vpack.c.bf16 %v2213, %v2211
  %v2320 = vpack.c.bf16 %v2214, %v2212
  %v2321 = vpack.c.bf16 %v2217, %v2215
  %v2322 = vpack.c.bf16 %v2218, %v2216
  %v2323 = vpack.c.bf16 %v2221, %v2219
  %v2324 = vpack.c.bf16 %v2222, %v2220
  %v2325 = vpack.c.bf16 %v2225, %v2223
  %v2326 = vpack.c.bf16 %v2226, %v2224
  %v2327 = vpack.c.bf16 %v2229, %v2227
  %v2328 = vpack.c.bf16 %v2230, %v2228
  %v2329 = vpack.c.bf16 %v2233, %v2231
  %v2330 = vpack.c.bf16 %v2234, %v2232
  %v2331 = vpack.c.bf16 %v2237, %v2235
  %v2332 = vpack.c.bf16 %v2238, %v2236
  %v2333 = vpack.c.bf16 %v2241, %v2239
  %v2334 = vpack.c.bf16 %v2242, %v2240
  %v2335 = vpack.c.bf16 %v2245, %v2243
  %v2336 = vpack.c.bf16 %v2246, %v2244
  %v2337 = vpack.c.bf16 %v2249, %v2247
  %v2338 = vpack.c.bf16 %v2250, %v2248
  %v2339 = vpack.c.bf16 %v2253, %v2251
  %v2340 = vpack.c.bf16 %v2254, %v2252
  %v2341 = vpack.c.bf16 %v2257, %v2255
  %v2342 = vpack.c.bf16 %v2258, %v2256
  %v2343 = vpack.c.bf16 %v2261, %v2259
  %v2344 = vpack.c.bf16 %v2262, %v2260
  %v2345 = vpack.c.bf16 %v2265, %v2263
  %v2346 = vpack.c.bf16 %v2266, %v2264
  %v2347 = vpack.c.bf16 %v2269, %v2267
  %v2348 = vpack.c.bf16 %v2270, %v2268
  %v2349 = vpack.c.bf16 %v2273, %v2271
  %v2350 = vpack.c.bf16 %v2274, %v2272
  %v2351 = vpack.c.bf16 %v2277, %v2275
  %v2352 = vpack.c.bf16 %v2278, %v2276
  %v2353 = vpack.c.bf16 %v2281, %v2279
  %v2354 = vpack.c.bf16 %v2282, %v2280
  %v2355 = vpack.c.bf16 %v2285, %v2283
  %v2356 = vpack.c.bf16 %v2286, %v2284
  %v2357 = vpack.c.bf16 %v2289, %v2287
  %v2358 = vpack.c.bf16 %v2290, %v2288
  %v2359 = vpack.c.bf16 %v2293, %v2291
  %v2360 = vpack.c.bf16 %v2294, %v2292
  %v2361 = vpack.c.bf16 %v2297, %v2295
  %v2362 = vpack.c.bf16 %v2298, %v2296
  %v2363 = vld [vmem:[%s5] sm:$0xf]
  %v2364 = vld [vmem:[%s5 + $0x4] sm:$0xf]
  %v2365 = vld [vmem:[%s5 + $0x8] sm:$0xf]
  %v2366 = vld [vmem:[%s5 + $0xc] sm:$0xf]
  %v2367 = vld [vmem:[%s5 + $0x10] sm:$0xf]
  %v2368 = vld [vmem:[%s5 + $0x14] sm:$0xf]
  %v2369 = vld [vmem:[%s5 + $0x18] sm:$0xf]
  %v2370 = vld [vmem:[%s5 + $0x1c] sm:$0xf]
  %v2371 = vld [vmem:[%s5 + $0x20] sm:$0xf]
  %v2372 = vld [vmem:[%s5 + $0x24] sm:$0xf]
  %v2373 = vld [vmem:[%s5 + $0x28] sm:$0xf]
  %v2374 = vld [vmem:[%s5 + $0x2c] sm:$0xf]
  %v2375 = vld [vmem:[%s5 + $0x30] sm:$0xf]
  %v2376 = vld [vmem:[%s5 + $0x34] sm:$0xf]
  %v2377 = vld [vmem:[%s5 + $0x38] sm:$0xf]
  %v2378 = vld [vmem:[%s5 + $0x3c] sm:$0xf]
  %v2379 = vld [vmem:[%s5 + $0x40] sm:$0xf]
  %v2380 = vld [vmem:[%s5 + $0x44] sm:$0xf]
  %v2381 = vld [vmem:[%s6] sm:$0x1]
  %v2383 = vlaneseq
  %v2384 = vshrl.u32 %v2383, 7
  %v2385 = vsub.s32 0, %v2384
  %v2386 = vrot.slane %v2381, %v2385
  %v2406 = vunpack.c.l.b16 %v2363
  %v2407 = vunpack.c.l.b16 %v2364
  %v2408 = vunpack.c.l.b16 %v2365
  %v2409 = vunpack.c.l.b16 %v2366
  %v2410 = vunpack.c.l.b16 %v2367
  %v2411 = vunpack.c.l.b16 %v2368
  %v2412 = vunpack.c.l.b16 %v2369
  %v2413 = vunpack.c.l.b16 %v2370
  %v2414 = vunpack.c.l.b16 %v2371
  %v2415 = vunpack.c.l.b16 %v2372
  %v2416 = vunpack.c.l.b16 %v2373
  %v2417 = vunpack.c.l.b16 %v2374
  %v2418 = vunpack.c.l.b16 %v2375
  %v2419 = vunpack.c.l.b16 %v2376
  %v2420 = vunpack.c.l.b16 %v2377
  %v2421 = vunpack.c.l.b16 %v2378
  %v2422 = vunpack.c.l.b16 %v2379
  %v2423 = vunpack.c.l.b16 %v2380
  %v2424 = vpack.c.b16 %v2407, %v2406
  %v2425 = vpack.c.b16 %v2409, %v2408
  %v2426 = vpack.c.b16 %v2411, %v2410
  %v2427 = vpack.c.b16 %v2413, %v2412
  %v2428 = vpack.c.b16 %v2415, %v2414
  %v2429 = vpack.c.b16 %v2417, %v2416
  %v2430 = vpack.c.b16 %v2419, %v2418
  %v2431 = vpack.c.b16 %v2421, %v2420
  %v2432 = vpack.c.b16 %v2423, %v2422
  %vm2442 = vcmask 130048
  %v2444 = vsel %vm2442, %v2300, 0
  %v2447 = vsel %vm2442, %v2302, 0
  %v2450 = vsel %vm2442, %v2304, 0
  %v2453 = vsel %vm2442, %v2306, 0
  %v2456 = vsel %vm2442, %v2308, 0
  %v2459 = vsel %vm2442, %v2310, 0
  %v2462 = vsel %vm2442, %v2312, 0
  %v2465 = vsel %vm2442, %v2314, 0
  %v2468 = vsel %vm2442, %v2316, 0
  %v2471 = vsel %vm2442, %v2318, 0
  %v2474 = vsel %vm2442, %v2320, 0
  %v2477 = vsel %vm2442, %v2322, 0
  %v2480 = vsel %vm2442, %v2324, 0
  %v2483 = vsel %vm2442, %v2326, 0
  %v2486 = vsel %vm2442, %v2328, 0
  %v2489 = vsel %vm2442, %v2330, 0
  %v2492 = vsel %vm2442, %v2332, 0
  %v2495 = vsel %vm2442, %v2334, 0
  %v2498 = vsel %vm2442, %v2336, 0
  %v2501 = vsel %vm2442, %v2338, 0
  %v2504 = vsel %vm2442, %v2340, 0
  %v2507 = vsel %vm2442, %v2342, 0
  %v2510 = vsel %vm2442, %v2344, 0
  %v2513 = vsel %vm2442, %v2346, 0
  %v2516 = vsel %vm2442, %v2348, 0
  %v2519 = vsel %vm2442, %v2350, 0
  %v2522 = vsel %vm2442, %v2352, 0
  %v2525 = vsel %vm2442, %v2354, 0
  %v2528 = vsel %vm2442, %v2356, 0
  %v2531 = vsel %vm2442, %v2358, 0
  %v2534 = vsel %vm2442, %v2360, 0
  %v2537 = vsel %vm2442, %v2362, 0
  %2539 = vmatprep.subr.bf16.mxu0 0
  %2540 = vmatpush1.bf16.msra.mxu0 %v2424
  %2541 = vmatprep.subr.bf16.mxu0 0
  %2542 = vmatpush1.bf16.msra.mxu0 %v2425
  %2543 = vmatprep.subr.bf16.mxu0 0
  %2544 = vmatpush1.bf16.msra.mxu0 %v2426
  %2545 = vmatprep.subr.bf16.mxu0 0
  %2546 = vmatpush1.bf16.msra.mxu0 %v2427
  %2547 = vmatprep.subr.bf16.mxu0 0
  %2548 = vmatpush1.bf16.msra.mxu0 %v2428
  %2549 = vmatprep.subr.bf16.mxu0 0
  %2550 = vmatpush1.bf16.msra.mxu0 %v2429
  %2551 = vmatprep.subr.bf16.mxu0 0
  %2552 = vmatpush1.bf16.msra.mxu0 %v2430
  %2553 = vmatprep.subr.bf16.mxu0 0
  %2554 = vmatpush1.bf16.msra.mxu0 %v2431
  %2555 = vmatprep.subr.bf16.mxu0 0
  %2556 = vmatpush1.bf16.msra.mxu0 %v2432
  %2557 = vmatprep.subr.bf16.mxu0 0
  %2558 = vmatpush1.bf16.msra.mxu0 0
  %2559 = vmatprep.subr.bf16.mxu0 0
  %2560 = vmatpush1.bf16.msra.mxu0 0
  %2561 = vmatprep.subr.bf16.mxu0 0
  %2562 = vmatpush1.bf16.msra.mxu0 0
  %2563 = vmatprep.subr.bf16.mxu0 0
  %2564 = vmatpush1.bf16.msra.mxu0 0
  %2565 = vmatprep.subr.bf16.mxu0 0
  %2566 = vmatpush1.bf16.msra.mxu0 0
  %2567 = vmatprep.subr.bf16.mxu0 0
  %2568 = vmatpush1.bf16.msra.mxu0 0
  %2569 = vmatprep.subr.bf16.mxu0 0
  %2570 = vmatpush1.bf16.msra.mxu0 0
  %2571 = vmatprep.mubr.bf16.mxu0 %v2444
  %2572 = vmatmul.mubr.bf16.gmra.mrb[0].mxu0 %v2299
  %v2573 = vpop.f32.mrb[0].mxu0
  %v2574 = vadd.f32 %v2386, %v2573
  %v2575 = vpop.f32.mrb[0].mxu0
  %v2576 = vpop.f32.mrb[0].mxu0
  %v2577 = vadd.f32 %v2386, %v2576
  %v2578 = vpop.f32.mrb[0].mxu0
  %2579 = vmatprep.mubr.bf16.mxu0 %v2447
  %2580 = vmatmul.mubr.bf16.gmra.mrb[0].mxu0 %v2301
  %v2581 = vpop.f32.mrb[0].mxu0
  %v2582 = vadd.f32 %v2386, %v2581
  %v2583 = vpop.f32.mrb[0].mxu0
  %v2584 = vpop.f32.mrb[0].mxu0
  %v2585 = vadd.f32 %v2386, %v2584
  %v2586 = vpop.f32.mrb[0].mxu0
  %2587 = vmatprep.mubr.bf16.mxu0 %v2450
  %2588 = vmatmul.mubr.bf16.gmra.mrb[0].mxu0 %v2303
  %v2589 = vpop.f32.mrb[0].mxu0
  %v2590 = vadd.f32 %v2386, %v2589
  %v2591 = vpop.f32.mrb[0].mxu0
  %v2592 = vpop.f32.mrb[0].mxu0
  %v2593 = vadd.f32 %v2386, %v2592
  %v2594 = vpop.f32.mrb[0].mxu0
  %2595 = vmatprep.mubr.bf16.mxu0 %v2453
  %2596 = vmatmul.mubr.bf16.gmra.mrb[0].mxu0 %v2305
  %v2597 = vpop.f32.mrb[0].mxu0
  %v2598 = vadd.f32 %v2386, %v2597
  %v2599 = vpop.f32.mrb[0].mxu0
  %v2600 = vpop.f32.mrb[0].mxu0
  %v2601 = vadd.f32 %v2386, %v2600
  %v2602 = vpop.f32.mrb[0].mxu0
  %2603 = vmatprep.mubr.bf16.mxu0 %v2456
  %2604 = vmatmul.mubr.bf16.gmra.mrb[0].mxu0 %v2307
  %v2605 = vpop.f32.mrb[0].mxu0
  %v2606 = vadd.f32 %v2386, %v2605
  %v2607 = vpop.f32.mrb[0].mxu0
  %v2608 = vpop.f32.mrb[0].mxu0
  %v2609 = vadd.f32 %v2386, %v2608
  %v2610 = vpop.f32.mrb[0].mxu0
  %2611 = vmatprep.mubr.bf16.mxu0 %v2459
  %2612 = vmatmul.mubr.bf16.gmra.mrb[0].mxu0 %v2309
  %v2613 = vpop.f32.mrb[0].mxu0
  %v2614 = vadd.f32 %v2386, %v2613
  %v2615 = vpop.f32.mrb[0].mxu0
  %v2616 = vpop.f32.mrb[0].mxu0
  %v2617 = vadd.f32 %v2386, %v2616
  %v2618 = vpop.f32.mrb[0].mxu0
  %2619 = vmatprep.mubr.bf16.mxu0 %v2462
  %2620 = vmatmul.mubr.bf16.gmra.mrb[0].mxu0 %v2311
  %v2621 = vpop.f32.mrb[0].mxu0
  %v2622 = vadd.f32 %v2386, %v2621
  %v2623 = vpop.f32.mrb[0].mxu0
  %v2624 = vpop.f32.mrb[0].mxu0
  %v2625 = vadd.f32 %v2386, %v2624
  %v2626 = vpop.f32.mrb[0].mxu0
  %2627 = vmatprep.mubr.bf16.mxu0 %v2465
  %2628 = vmatmul.mubr.bf16.gmra.mrb[0].mxu0 %v2313
  %v2629 = vpop.f32.mrb[0].mxu0
  %v2630 = vadd.f32 %v2386, %v2629
  %v2631 = vpop.f32.mrb[0].mxu0
  %v2632 = vpop.f32.mrb[0].mxu0
  %v2633 = vadd.f32 %v2386, %v2632
  %v2634 = vpop.f32.mrb[0].mxu0
  %2635 = vmatprep.mubr.bf16.mxu0 %v2468
  %2636 = vmatmul.mubr.bf16.gmra.mrb[0].mxu0 %v2315
  %v2637 = vpop.f32.mrb[0].mxu0
  %v2638 = vadd.f32 %v2386, %v2637
  %v2639 = vpop.f32.mrb[0].mxu0
  %v2640 = vpop.f32.mrb[0].mxu0
  %v2641 = vadd.f32 %v2386, %v2640
  %v2642 = vpop.f32.mrb[0].mxu0
  %2643 = vmatprep.mubr.bf16.mxu0 %v2471
  %2644 = vmatmul.mubr.bf16.gmra.mrb[0].mxu0 %v2317
  %v2645 = vpop.f32.mrb[0].mxu0
  %v2646 = vadd.f32 %v2386, %v2645
  %v2647 = vpop.f32.mrb[0].mxu0
  %v2648 = vpop.f32.mrb[0].mxu0
  %v2649 = vadd.f32 %v2386, %v2648
  %v2650 = vpop.f32.mrb[0].mxu0
  %2651 = vmatprep.mubr.bf16.mxu0 %v2474
  %2652 = vmatmul.mubr.bf16.gmra.mrb[0].mxu0 %v2319
  %v2653 = vpop.f32.mrb[0].mxu0
  %v2654 = vadd.f32 %v2386, %v2653
  %v2655 = vpop.f32.mrb[0].mxu0
  %v2656 = vpop.f32.mrb[0].mxu0
  %v2657 = vadd.f32 %v2386, %v2656
  %v2658 = vpop.f32.mrb[0].mxu0
  %2659 = vmatprep.mubr.bf16.mxu0 %v2477
  %2660 = vmatmul.mubr.bf16.gmra.mrb[0].mxu0 %v2321
  %v2661 = vpop.f32.mrb[0].mxu0
  %v2662 = vadd.f32 %v2386, %v2661
  %v2663 = vpop.f32.mrb[0].mxu0
  %v2664 = vpop.f32.mrb[0].mxu0
  %v2665 = vadd.f32 %v2386, %v2664
  %v2666 = vpop.f32.mrb[0].mxu0
  %2667 = vmatprep.mubr.bf16.mxu0 %v2480
  %2668 = vmatmul.mubr.bf16.gmra.mrb[0].mxu0 %v2323
  %v2669 = vpop.f32.mrb[0].mxu0
  %v2670 = vadd.f32 %v2386, %v2669
  %v2671 = vpop.f32.mrb[0].mxu0
  %v2672 = vpop.f32.mrb[0].mxu0
  %v2673 = vadd.f32 %v2386, %v2672
  %v2674 = vpop.f32.mrb[0].mxu0
  %2675 = vmatprep.mubr.bf16.mxu0 %v2483
  %2676 = vmatmul.mubr.bf16.gmra.mrb[0].mxu0 %v2325
  %v2677 = vpop.f32.mrb[0].mxu0
  %v2678 = vadd.f32 %v2386, %v2677
  %v2679 = vpop.f32.mrb[0].mxu0
  %v2680 = vpop.f32.mrb[0].mxu0
  %v2681 = vadd.f32 %v2386, %v2680
  %v2682 = vpop.f32.mrb[0].mxu0
  %2683 = vmatprep.mubr.bf16.mxu0 %v2486
  %2684 = vmatmul.mubr.bf16.gmra.mrb[0].mxu0 %v2327
  %v2685 = vpop.f32.mrb[0].mxu0
  %v2686 = vadd.f32 %v2386, %v2685
  %v2687 = vpop.f32.mrb[0].mxu0
  %v2688 = vpop.f32.mrb[0].mxu0
  %v2689 = vadd.f32 %v2386, %v2688
  %v2690 = vpop.f32.mrb[0].mxu0
  %2691 = vmatprep.mubr.bf16.mxu0 %v2489
  %2692 = vmatmul.mubr.bf16.gmra.mrb[0].mxu0 %v2329
  %v2693 = vpop.f32.mrb[0].mxu0
  %v2694 = vadd.f32 %v2386, %v2693
  %v2695 = vpop.f32.mrb[0].mxu0
  %v2696 = vpop.f32.mrb[0].mxu0
  %v2697 = vadd.f32 %v2386, %v2696
  %v2698 = vpop.f32.mrb[0].mxu0
  %2699 = vmatprep.mubr.bf16.mxu0 %v2492
  %2700 = vmatmul.mubr.bf16.gmra.mrb[0].mxu0 %v2331
  %v2701 = vpop.f32.mrb[0].mxu0
  %v2702 = vadd.f32 %v2386, %v2701
  %v2703 = vpop.f32.mrb[0].mxu0
  %v2704 = vpop.f32.mrb[0].mxu0
  %v2705 = vadd.f32 %v2386, %v2704
  %v2706 = vpop.f32.mrb[0].mxu0
  %2707 = vmatprep.mubr.bf16.mxu0 %v2495
  %2708 = vmatmul.mubr.bf16.gmra.mrb[0].mxu0 %v2333
  %v2709 = vpop.f32.mrb[0].mxu0
  %v2710 = vadd.f32 %v2386, %v2709
  %v2711 = vpop.f32.mrb[0].mxu0
  %v2712 = vpop.f32.mrb[0].mxu0
  %v2713 = vadd.f32 %v2386, %v2712
  %v2714 = vpop.f32.mrb[0].mxu0
  %2715 = vmatprep.mubr.bf16.mxu0 %v2498
  %2716 = vmatmul.mubr.bf16.gmra.mrb[0].mxu0 %v2335
  %v2717 = vpop.f32.mrb[0].mxu0
  %v2718 = vadd.f32 %v2386, %v2717
  %v2719 = vpop.f32.mrb[0].mxu0
  %v2720 = vpop.f32.mrb[0].mxu0
  %v2721 = vadd.f32 %v2386, %v2720
  %v2722 = vpop.f32.mrb[0].mxu0
  %2723 = vmatprep.mubr.bf16.mxu0 %v2501
  %2724 = vmatmul.mubr.bf16.gmra.mrb[0].mxu0 %v2337
  %v2725 = vpop.f32.mrb[0].mxu0
  %v2726 = vadd.f32 %v2386, %v2725
  %v2727 = vpop.f32.mrb[0].mxu0
  %v2728 = vpop.f32.mrb[0].mxu0
  %v2729 = vadd.f32 %v2386, %v2728
  %v2730 = vpop.f32.mrb[0].mxu0
  %2731 = vmatprep.mubr.bf16.mxu0 %v2504
  %2732 = vmatmul.mubr.bf16.gmra.mrb[0].mxu0 %v2339
  %v2733 = vpop.f32.mrb[0].mxu0
  %v2734 = vadd.f32 %v2386, %v2733
  %v2735 = vpop.f32.mrb[0].mxu0
  %v2736 = vpop.f32.mrb[0].mxu0
  %v2737 = vadd.f32 %v2386, %v2736
  %v2738 = vpop.f32.mrb[0].mxu0
  %2739 = vmatprep.mubr.bf16.mxu0 %v2507
  %2740 = vmatmul.mubr.bf16.gmra.mrb[0].mxu0 %v2341
  %v2741 = vpop.f32.mrb[0].mxu0
  %v2742 = vadd.f32 %v2386, %v2741
  %v2743 = vpop.f32.mrb[0].mxu0
  %v2744 = vpop.f32.mrb[0].mxu0
  %v2745 = vadd.f32 %v2386, %v2744
  %v2746 = vpop.f32.mrb[0].mxu0
  %2747 = vmatprep.mubr.bf16.mxu0 %v2510
  %2748 = vmatmul.mubr.bf16.gmra.mrb[0].mxu0 %v2343
  %v2749 = vpop.f32.mrb[0].mxu0
  %v2750 = vadd.f32 %v2386, %v2749
  %v2751 = vpop.f32.mrb[0].mxu0
  %v2752 = vpop.f32.mrb[0].mxu0
  %v2753 = vadd.f32 %v2386, %v2752
  %v2754 = vpop.f32.mrb[0].mxu0
  %2755 = vmatprep.mubr.bf16.mxu0 %v2513
  %2756 = vmatmul.mubr.bf16.gmra.mrb[0].mxu0 %v2345
  %v2757 = vpop.f32.mrb[0].mxu0
  %v2758 = vadd.f32 %v2386, %v2757
  %v2759 = vpop.f32.mrb[0].mxu0
  %v2760 = vpop.f32.mrb[0].mxu0
  %v2761 = vadd.f32 %v2386, %v2760
  %v2762 = vpop.f32.mrb[0].mxu0
  %2763 = vmatprep.mubr.bf16.mxu0 %v2516
  %2764 = vmatmul.mubr.bf16.gmra.mrb[0].mxu0 %v2347
  %v2765 = vpop.f32.mrb[0].mxu0
  %v2766 = vadd.f32 %v2386, %v2765
  %v2767 = vpop.f32.mrb[0].mxu0
  %v2768 = vpop.f32.mrb[0].mxu0
  %v2769 = vadd.f32 %v2386, %v2768
  %v2770 = vpop.f32.mrb[0].mxu0
  %2771 = vmatprep.mubr.bf16.mxu0 %v2519
  %2772 = vmatmul.mubr.bf16.gmra.mrb[0].mxu0 %v2349
  %v2773 = vpop.f32.mrb[0].mxu0
  %v2774 = vadd.f32 %v2386, %v2773
  %v2775 = vpop.f32.mrb[0].mxu0
  %v2776 = vpop.f32.mrb[0].mxu0
  %v2777 = vadd.f32 %v2386, %v2776
  %v2778 = vpop.f32.mrb[0].mxu0
  %2779 = vmatprep.mubr.bf16.mxu0 %v2522
  %2780 = vmatmul.mubr.bf16.gmra.mrb[0].mxu0 %v2351
  %v2781 = vpop.f32.mrb[0].mxu0
  %v2782 = vadd.f32 %v2386, %v2781
  %v2783 = vpop.f32.mrb[0].mxu0
  %v2784 = vpop.f32.mrb[0].mxu0
  %v2785 = vadd.f32 %v2386, %v2784
  %v2786 = vpop.f32.mrb[0].mxu0
  %2787 = vmatprep.mubr.bf16.mxu0 %v2525
  %2788 = vmatmul.mubr.bf16.gmra.mrb[0].mxu0 %v2353
  %v2789 = vpop.f32.mrb[0].mxu0
  %v2790 = vadd.f32 %v2386, %v2789
  %v2791 = vpop.f32.mrb[0].mxu0
  %v2792 = vpop.f32.mrb[0].mxu0
  %v2793 = vadd.f32 %v2386, %v2792
  %v2794 = vpop.f32.mrb[0].mxu0
  %2795 = vmatprep.mubr.bf16.mxu0 %v2528
  %2796 = vmatmul.mubr.bf16.gmra.mrb[0].mxu0 %v2355
  %v2797 = vpop.f32.mrb[0].mxu0
  %v2798 = vadd.f32 %v2386, %v2797
  %v2799 = vpop.f32.mrb[0].mxu0
  %v2800 = vpop.f32.mrb[0].mxu0
  %v2801 = vadd.f32 %v2386, %v2800
  %v2802 = vpop.f32.mrb[0].mxu0
  %2803 = vmatprep.mubr.bf16.mxu0 %v2531
  %2804 = vmatmul.mubr.bf16.gmra.mrb[0].mxu0 %v2357
  %v2805 = vpop.f32.mrb[0].mxu0
  %v2806 = vadd.f32 %v2386, %v2805
  %v2807 = vpop.f32.mrb[0].mxu0
  %v2808 = vpop.f32.mrb[0].mxu0
  %v2809 = vadd.f32 %v2386, %v2808
  %v2810 = vpop.f32.mrb[0].mxu0
  %2811 = vmatprep.mubr.bf16.mxu0 %v2534
  %2812 = vmatmul.mubr.bf16.gmra.mrb[0].mxu0 %v2359
  %v2813 = vpop.f32.mrb[0].mxu0
  %v2814 = vadd.f32 %v2386, %v2813
  %v2815 = vpop.f32.mrb[0].mxu0
  %v2816 = vpop.f32.mrb[0].mxu0
  %v2817 = vadd.f32 %v2386, %v2816
  %v2818 = vpop.f32.mrb[0].mxu0
  %2819 = vmatprep.mubr.bf16.mxu0 %v2537
  %2820 = vmatmul.mubr.bf16.gmra.mrb[0].mxu0 %v2361
  %v2821 = vpop.f32.mrb[0].mxu0
  %v2822 = vadd.f32 %v2386, %v2821
  %v2823 = vpop.f32.mrb[0].mxu0
  %v2824 = vpop.f32.mrb[0].mxu0
  %v2825 = vadd.f32 %v2386, %v2824
  %v2826 = vpop.f32.mrb[0].mxu0
  %2827 = vdwg.mxu0
  %2828 = vst [vmem:[%s7] sm:$0xff] %v2574
  %2829 = vst [vmem:[%s7 + $0x8] sm:$0xff] %v2577
  %2830 = vst [vmem:[%s7 + $0x10] sm:$0xff] %v2582
  %2831 = vst [vmem:[%s7 + $0x18] sm:$0xff] %v2585
  %2832 = vst [vmem:[%s7 + $0x20] sm:$0xff] %v2590
  %2833 = vst [vmem:[%s7 + $0x28] sm:$0xff] %v2593
  %2834 = vst [vmem:[%s7 + $0x30] sm:$0xff] %v2598
  %2835 = vst [vmem:[%s7 + $0x38] sm:$0xff] %v2601
  %2836 = vst [vmem:[%s7 + $0x40] sm:$0xff] %v2606
  %2837 = vst [vmem:[%s7 + $0x48] sm:$0xff] %v2609
  %2838 = vst [vmem:[%s7 + $0x50] sm:$0xff] %v2614
  %2839 = vst [vmem:[%s7 + $0x58] sm:$0xff] %v2617
  %2840 = vst [vmem:[%s7 + $0x60] sm:$0xff] %v2622
  %2841 = vst [vmem:[%s7 + $0x68] sm:$0xff] %v2625
  %2842 = vst [vmem:[%s7 + $0x70] sm:$0xff] %v2630
  %2843 = vst [vmem:[%s7 + $0x78] sm:$0xff] %v2633
  %2844 = vst [vmem:[%s7 + $0x80] sm:$0xff] %v2638
  %2845 = vst [vmem:[%s7 + $0x88] sm:$0xff] %v2641
  %2846 = vst [vmem:[%s7 + $0x90] sm:$0xff] %v2646
  %2847 = vst [vmem:[%s7 + $0x98] sm:$0xff] %v2649
  %2848 = vst [vmem:[%s7 + $0xa0] sm:$0xff] %v2654
  %2849 = vst [vmem:[%s7 + $0xa8] sm:$0xff] %v2657
  %2850 = vst [vmem:[%s7 + $0xb0] sm:$0xff] %v2662
  %2851 = vst [vmem:[%s7 + $0xb8] sm:$0xff] %v2665
  %2852 = vst [vmem:[%s7 + $0xc0] sm:$0xff] %v2670
  %2853 = vst [vmem:[%s7 + $0xc8] sm:$0xff] %v2673
  %2854 = vst [vmem:[%s7 + $0xd0] sm:$0xff] %v2678
  %2855 = vst [vmem:[%s7 + $0xd8] sm:$0xff] %v2681
  %2856 = vst [vmem:[%s7 + $0xe0] sm:$0xff] %v2686
  %2857 = vst [vmem:[%s7 + $0xe8] sm:$0xff] %v2689
  %2858 = vst [vmem:[%s7 + $0xf0] sm:$0xff] %v2694
  %2859 = vst [vmem:[%s7 + $0xf8] sm:$0xff] %v2697
  %2860 = vst [vmem:[%s7 + $0x100] sm:$0xff] %v2702
  %2861 = vst [vmem:[%s7 + $0x108] sm:$0xff] %v2705
  %2862 = vst [vmem:[%s7 + $0x110] sm:$0xff] %v2710
  %2863 = vst [vmem:[%s7 + $0x118] sm:$0xff] %v2713
  %2864 = vst [vmem:[%s7 + $0x120] sm:$0xff] %v2718
  %2865 = vst [vmem:[%s7 + $0x128] sm:$0xff] %v2721
  %2866 = vst [vmem:[%s7 + $0x130] sm:$0xff] %v2726
  %2867 = vst [vmem:[%s7 + $0x138] sm:$0xff] %v2729
  %2868 = vst [vmem:[%s7 + $0x140] sm:$0xff] %v2734
  %2869 = vst [vmem:[%s7 + $0x148] sm:$0xff] %v2737
  %2870 = vst [vmem:[%s7 + $0x150] sm:$0xff] %v2742
  %2871 = vst [vmem:[%s7 + $0x158] sm:$0xff] %v2745
  %2872 = vst [vmem:[%s7 + $0x160] sm:$0xff] %v2750
  %2873 = vst [vmem:[%s7 + $0x168] sm:$0xff] %v2753
  %2874 = vst [vmem:[%s7 + $0x170] sm:$0xff] %v2758
  %2875 = vst [vmem:[%s7 + $0x178] sm:$0xff] %v2761
  %2876 = vst [vmem:[%s7 + $0x180] sm:$0xff] %v2766
  %2877 = vst [vmem:[%s7 + $0x188] sm:$0xff] %v2769
  %2878 = vst [vmem:[%s7 + $0x190] sm:$0xff] %v2774
  %2879 = vst [vmem:[%s7 + $0x198] sm:$0xff] %v2777
  %2880 = vst [vmem:[%s7 + $0x1a0] sm:$0xff] %v2782
  %2881 = vst [vmem:[%s7 + $0x1a8] sm:$0xff] %v2785
  %2882 = vst [vmem:[%s7 + $0x1b0] sm:$0xff] %v2790
  %2883 = vst [vmem:[%s7 + $0x1b8] sm:$0xff] %v2793
  %2884 = vst [vmem:[%s7 + $0x1c0] sm:$0xff] %v2798
  %2885 = vst [vmem:[%s7 + $0x1c8] sm:$0xff] %v2801
  %2886 = vst [vmem:[%s7 + $0x1d0] sm:$0xff] %v2806
  %2887 = vst [vmem:[%s7 + $0x1d8] sm:$0xff] %v2809
  %2888 = vst [vmem:[%s7 + $0x1e0] sm:$0xff] %v2814
  %2889 = vst [vmem:[%s7 + $0x1e8] sm:$0xff] %v2817
  %2890 = vst [vmem:[%s7 + $0x1f0] sm:$0xff] %v2822
  %2891 = vst [vmem:[%s7 + $0x1f8] sm:$0xff] %v2825
  // Predicated region
  $region30: #{deform_conv_v2_forward.3} parent=0 // pred_check
    _
  $region31: #{deform_conv_v2_forward.3} parent=0 // pred_check_branch
    %2893 = sbr.rel (0) target = $region33
  $region32: #{deform_conv_v2_forward.3} parent=0 // pred_region
    _
  $region33: #{deform_conv_v2_forward.3} parent=0 // pred_fallthru
    _
  // Predicated region
  $region34: #{deform_conv_v2_forward.3} parent=0 // pred_check
    _
  $region35: #{deform_conv_v2_forward.3} parent=0 // pred_check_branch
    %2895 = sbr.rel (0) target = $region37
  $region36: #{deform_conv_v2_forward.3} parent=0 // pred_region
    _
  $region37: #{deform_conv_v2_forward.3} parent=0 // pred_fallthru
    _

</llo_original>
